<compile_context>
chip_gen: v6e
topology: v6e:2x2x1
jax: 0.10.0
libtpu: 0.0.40
codegen_flags: <defaults>
</compile_context>

<pallas_src>
import jax
import jax.numpy as jnp
from jax import lax
from jax.experimental import pallas as pl
from jax.experimental.pallas import tpu as pltpu

DIM = 32        # hidden dim
F_IN = 16       # node feature dim (num_features)
EDGE_F = 5      # edge attr dim (nn.Linear(5, 128) in the edge MLP)
MLP_H = 128     # edge MLP hidden width
N_MP = 3        # message-passing iterations
N_S2S = 3       # Set2Set processing steps
OUT_PAD = 128   # lane-dense padded output width (>= 2*DIM)


def mpnn_kernel(x_ref, ea_ref, src_ref, dst_ref, batch_ref, invdeg_ref,
                p_ref, q_ref,
                w0_ref, b0_ref, w1_ref, b1_ref, w2_ref, b2_ref, cb_ref,
                gruw_ref, grub_ref, lstw_ref, lstb_ref,
                o_ref,
                h_sc, hbf_sc, agg_sc):
    f32 = jnp.float32
    bf16 = jnp.bfloat16
    dim = DIM
    t = pl.program_id(0)
    et = pl.program_id(1)
    n_et = pl.num_programs(1)
    n_nodes = h_sc.shape[0]
    e_tile = ea_ref.shape[0]
    n_graphs = o_ref.shape[0]

    # ---- one-time init: lin0 + ReLU seeds the GRU hidden state ----
    @pl.when(jnp.logical_and(t == 0, et == 0))
    def _init():
        out0 = jnp.maximum(
            jnp.dot(x_ref[...], w0_ref[...], preferred_element_type=f32) + b0_ref[...], 0.0)
        h_sc[...] = out0
        hbf_sc[...] = out0.astype(bf16)

    # ---- reset the message accumulator at the start of every edge sweep ----
    @pl.when(et == 0)
    def _reset():
        agg_sc[...] = jnp.zeros_like(agg_sc)

    # ---- per-edge-tile work ----
    # One-hot gather/scatter operands built in-register from O(E) indices (pad edges = -1
    # match nothing, so they contribute exactly zero).
    src = src_ref[...]                                                  # (Et, 1) int32
    dst = dst_ref[...]                                                  # (1, Et) int32
    oh_src = jnp.where(src == lax.broadcasted_iota(jnp.int32, (e_tile, n_nodes), 1),
                       1.0, 0.0).astype(bf16)                           # (Et, N)
    oh_dst = jnp.where(lax.broadcasted_iota(jnp.int32, (n_nodes, e_tile), 0) == dst,
                       1.0, 0.0).astype(bf16)                           # (N, Et)

    xs = jnp.dot(oh_src, hbf_sc[...], preferred_element_type=f32)       # (Et, dim) src feats

    # edge MLP: Linear(5,128) -> ReLU -> Linear(128, dim*dim), recomputed per edge tile
    h1 = jnp.maximum(
        jnp.dot(ea_ref[...].astype(bf16), w1_ref[...], preferred_element_type=f32)
        + b1_ref[...], 0.0)                                             # (Et, 128)
    we = jnp.dot(h1.astype(bf16), w2_ref[...], preferred_element_type=f32) + b2_ref[...]

    # msg[e, o] = sum_d xs[e, d] * we[e, d*dim + o]  via replicate (P) / fold (Q) matmuls
    xs_exp = jnp.dot(xs.astype(bf16), p_ref[...], preferred_element_type=f32)   # (Et, dim*dim)
    msg = jnp.dot((xs_exp * we).astype(bf16), q_ref[...],
                  preferred_element_type=f32)                           # (Et, dim)

    # scatter-add into the per-node accumulator
    agg_sc[...] += jnp.dot(oh_dst, msg.astype(bf16), preferred_element_type=f32)

    # ---- end of edge sweep: mean-aggregate + conv bias + ReLU + fused GRU cell ----
    @pl.when(et == n_et - 1)
    def _gru():
        h = h_sc[...]
        m = jnp.maximum(agg_sc[...] * invdeg_ref[...] + cb_ref[...], 0.0)
        # single (N, 2*dim)@(2*dim, 4*dim) dot; columns = [r,z summed paths | gi_n | gh_n]
        g = jnp.dot(jnp.concatenate([m, h], axis=1).astype(bf16), gruw_ref[...],
                    preferred_element_type=f32) + grub_ref[...]         # (N, 4*dim)
        r_g = jax.nn.sigmoid(g[:, 0:dim])
        z_g = jax.nn.sigmoid(g[:, dim:2 * dim])
        n_g = jnp.tanh(g[:, 2 * dim:3 * dim] + r_g * g[:, 3 * dim:4 * dim])
        h_new = (1.0 - z_g) * n_g + z_g * h
        h_sc[...] = h_new
        hbf_sc[...] = h_new.astype(bf16)

    # ---- Set2Set readout (3 steps) at the very end ----
    @pl.when(jnp.logical_and(t == pl.num_programs(0) - 1, et == n_et - 1))
    def _set2set():
        out_bf = hbf_sc[...]                                            # (N, dim) bf16
        seg_mask = (lax.broadcasted_iota(jnp.int32, (n_graphs, n_nodes), 0)
                    == batch_ref[...])                                  # (B, N) bool
        lstw = lstw_ref[...]
        lstb = lstb_ref[...]
        q = jnp.zeros((n_graphs, dim), f32)
        r = jnp.zeros((n_graphs, dim), f32)
        hl = jnp.zeros((n_graphs, dim), f32)
        cl = jnp.zeros((n_graphs, dim), f32)
        for _ in range(N_S2S):
            # fused LSTM: one (B, 3*dim)@(3*dim, 4*dim) dot over concat([q, r, h])
            g = jnp.dot(jnp.concatenate([q, r, hl], axis=1).astype(bf16), lstw,
                        preferred_element_type=f32) + lstb              # (B, 4*dim)
            i_g = jax.nn.sigmoid(g[:, 0:dim])
            f_g = jax.nn.sigmoid(g[:, dim:2 * dim])
            g_g = jnp.tanh(g[:, 2 * dim:3 * dim])
            o_g = jax.nn.sigmoid(g[:, 3 * dim:4 * dim])
            cl = f_g * cl + i_g * g_g
            hl = o_g * jnp.tanh(cl)
            q = hl
            # attention scores + segment softmax over each graph
            score = lax.dot_general(q.astype(bf16), out_bf, (((1,), (1,)), ((), ())),
                                    preferred_element_type=f32)         # (B, N)
            masked = jnp.where(seg_mask, score, -1e30)
            seg_max = jnp.max(masked, axis=1, keepdims=True)
            expd = jnp.where(seg_mask, jnp.exp(masked - seg_max), 0.0)  # exp of masked only
            denom = jnp.sum(expd, axis=1, keepdims=True) + 1e-16
            alpha = expd * pl.reciprocal(denom, approx=True)
            r = jnp.dot(alpha.astype(bf16), out_bf, preferred_element_type=f32)  # (B, dim)
        pad = jnp.zeros((n_graphs, OUT_PAD - 2 * dim), f32)
        o_ref[...] = jnp.concatenate([q, r, pad], axis=1)               # lane-dense store


def _const_spec(arr):
    return pl.BlockSpec(arr.shape, lambda t, e: (0,) * arr.ndim)


def prepare_params(params):
    """Fuse / cast the torch-style parameters into kernel-friendly matrices."""
    dim = DIM
    f32 = jnp.float32
    bf16 = jnp.bfloat16
    z = jnp.zeros((dim, dim), f32)
    gwih, gwhh = params['gwih'], params['gwhh']
    gbih, gbhh = params['gbih'], params['gbhh']
    # GRU fused weight: cat([m, h]) @ W -> [gi_rz + gh_rz | gi_n | gh_n]
    gru_w = jnp.concatenate([
        jnp.concatenate([gwih[:, :2 * dim], gwih[:, 2 * dim:], z], axis=1),
        jnp.concatenate([gwhh[:, :2 * dim], z, gwhh[:, 2 * dim:]], axis=1)], axis=0)
    gru_b = jnp.concatenate([gbih[:, :2 * dim] + gbhh[:, :2 * dim],
                             gbih[:, 2 * dim:], gbhh[:, 2 * dim:]], axis=1)
    # Set2Set LSTM fused weight: cat([q, r, h]) @ [Wih; Whh]
    lstm_w = jnp.concatenate([params['lwih'], params['lwhh']], axis=0)
    lstm_b = params['lbih'] + params['lbhh']
    # replicate (P) / fold (Q) matrices for the per-edge weighted message
    j = jnp.arange(dim * dim)
    rep = (jnp.arange(dim)[:, None] == (j[None, :] // dim)).astype(bf16)   # (dim, dim*dim)
    fold = ((j[:, None] % dim) == jnp.arange(dim)[None, :]).astype(bf16)   # (dim*dim, dim)
    return dict(
        w0=params['w0'], b0=params['b0'],
        w1=params['w1'].astype(bf16), b1=params['b1'],
        w2=params['w2'].astype(bf16), b2=params['b2'],
        cb=params['cb'],
        gru_w=gru_w.astype(bf16), gru_b=gru_b,
        lstm_w=lstm_w.astype(bf16), lstm_b=lstm_b,
        rep=rep, fold=fold)


def mpnn_encoder(x, edge_index, edge_attr, batch, params, num_graphs, edge_tile=128):
    n_nodes = x.shape[0]
    n_edges = edge_index.shape[1]
    e_pad = edge_tile * pl.cdiv(n_edges, edge_tile)
    n_et = e_pad // edge_tile
    pad = e_pad - n_edges

    pp = prepare_params(params)

    # O(E) index streams (pad edges get index -1 -> contribute nothing)
    src = jnp.concatenate([edge_index[0].astype(jnp.int32),
                           jnp.full((pad,), -1, jnp.int32)]).reshape(e_pad, 1)
    dst = jnp.concatenate([edge_index[1].astype(jnp.int32),
                           jnp.full((pad,), -1, jnp.int32)]).reshape(1, e_pad)
    ea = jnp.concatenate([edge_attr, jnp.zeros((pad, EDGE_F), edge_attr.dtype)], axis=0)
    batch_row = batch.astype(jnp.int32).reshape(1, n_nodes)
    deg = jnp.zeros((n_nodes,), jnp.float32).at[edge_index[1]].add(1.0)
    inv_deg = (1.0 / jnp.maximum(deg, 1.0)).reshape(n_nodes, 1)

    inputs = [x, ea, src, dst, batch_row, inv_deg,
              pp['rep'], pp['fold'],
              pp['w0'], pp['b0'], pp['w1'], pp['b1'], pp['w2'], pp['b2'], pp['cb'],
              pp['gru_w'], pp['gru_b'], pp['lstm_w'], pp['lstm_b']]

    in_specs = [
        _const_spec(x),
        pl.BlockSpec((edge_tile, EDGE_F), lambda t, e: (e, 0)),   # edge_attr tile
        pl.BlockSpec((edge_tile, 1), lambda t, e: (e, 0)),        # src indices tile
        pl.BlockSpec((1, edge_tile), lambda t, e: (0, e)),        # dst indices tile
        _const_spec(batch_row),
        _const_spec(inv_deg),
    ] + [_const_spec(a) for a in inputs[6:]]

    out = pl.pallas_call(
        mpnn_kernel,
        out_shape=jax.ShapeDtypeStruct((num_graphs, OUT_PAD), jnp.float32),
        grid=(N_MP, n_et),
        in_specs=in_specs,
        out_specs=pl.BlockSpec((num_graphs, OUT_PAD), lambda t, e: (0, 0)),
        scratch_shapes=[pltpu.VMEM((n_nodes, DIM), jnp.float32),   # h (GRU state)
                        pltpu.VMEM((n_nodes, DIM), jnp.bfloat16),  # bf16 copy for MXU
                        pltpu.VMEM((n_nodes, DIM), jnp.float32)],  # message accumulator
        compiler_params=pltpu.CompilerParams(
            dimension_semantics=("arbitrary", "arbitrary"),  # both axes carry state
            vmem_limit_bytes=48 * 1024 * 1024),              # headroom below v7x 64 MiB
    )(*inputs)
    return out[:, :2 * DIM]


def init_params(key):
    ks = jax.random.split(key, 16)
    dim = DIM

    def u(k, shape, fan_in):
        bound = 1.0 / jnp.sqrt(jnp.float32(fan_in))
        return jax.random.uniform(k, shape, jnp.float32, -bound, bound)

    return {
        # lin0: Linear(F_IN, dim)
        'w0': u(ks[0], (F_IN, dim), F_IN),
        'b0': u(ks[1], (1, dim), F_IN),
        # edge mlp: Linear(5,128) -> ReLU -> Linear(128, dim*dim)
        'w1': u(ks[2], (EDGE_F, MLP_H), EDGE_F),
        'b1': u(ks[3], (1, MLP_H), EDGE_F),
        'w2': u(ks[4], (MLP_H, dim * dim), MLP_H),
        'b2': u(ks[5], (1, dim * dim), MLP_H),
        # NNConv bias
        'cb': u(ks[6], (1, dim), dim),
        # GRU(dim, dim): gates [r, z, n]; stored (in, 3*dim) so y = x @ W
        'gwih': u(ks[7], (dim, 3 * dim), dim),
        'gwhh': u(ks[8], (dim, 3 * dim), dim),
        'gbih': u(ks[9], (1, 3 * dim), dim),
        'gbhh': u(ks[10], (1, 3 * dim), dim),
        # Set2Set LSTM(2*dim, dim): gates [i, f, g, o]
        'lwih': u(ks[11], (2 * dim, 4 * dim), dim),
        'lwhh': u(ks[12], (dim, 4 * dim), dim),
        'lbih': u(ks[13], (1, 4 * dim), dim),
        'lbhh': u(ks[14], (1, 4 * dim), dim),
    }


if __name__ == "__main__":
    key = jax.random.PRNGKey(0)
    k_x, k_ea, k_s, k_d, k_p = jax.random.split(key, 5)

    N, E, B = 16, 200, 2   # pads to 256 edges -> 2 edge tiles (exercises accumulation)
    x = jax.random.normal(k_x, (N, F_IN), jnp.float32)
    edge_attr = jax.random.normal(k_ea, (E, EDGE_F), jnp.float32)
    # graph 0 = nodes 0..7, graph 1 = nodes 8..15; edges stay inside their graph
    src0 = jax.random.randint(k_s, (E // 2,), 0, N // 2)
    dst0 = jax.random.randint(k_d, (E // 2,), 0, N // 2)
    edge_index = jnp.stack([jnp.concatenate([src0, src0 + N // 2]),
                            jnp.concatenate([dst0, dst0 + N // 2])]).astype(jnp.int32)
    batch = jnp.array([0] * (N // 2) + [1] * (N // 2), jnp.int32)

    params = init_params(k_p)

    out = mpnn_encoder(x, edge_index, edge_attr, batch, params, num_graphs=B)
    out = jax.block_until_ready(out)
    assert out.shape == (B, 2 * DIM) and out.dtype == jnp.float32
    assert bool(jnp.all(jnp.isfinite(out)))
    print("KERNEL_OK")
</pallas_src>

<mosaic_0001>
module attributes {stable_mosaic.version = 11 : i64} {
  func.func @mpnn_kernel(%arg0: i32, %arg1: i32, %arg2: memref<16x16xf32, #tpu.memory_space<vmem>>, %arg3: memref<128x5xf32, #tpu.memory_space<vmem>>, %arg4: memref<128x1xi32, #tpu.memory_space<vmem>>, %arg5: memref<1x128xi32, #tpu.memory_space<vmem>>, %arg6: memref<1x16xi32, #tpu.memory_space<vmem>>, %arg7: memref<16x1xf32, #tpu.memory_space<vmem>>, %arg8: memref<32x1024xbf16, #tpu.memory_space<vmem>>, %arg9: memref<1024x32xbf16, #tpu.memory_space<vmem>>, %arg10: memref<16x32xf32, #tpu.memory_space<vmem>>, %arg11: memref<1x32xf32, #tpu.memory_space<vmem>>, %arg12: memref<5x128xbf16, #tpu.memory_space<vmem>>, %arg13: memref<1x128xf32, #tpu.memory_space<vmem>>, %arg14: memref<128x1024xbf16, #tpu.memory_space<vmem>>, %arg15: memref<1x1024xf32, #tpu.memory_space<vmem>>, %arg16: memref<1x32xf32, #tpu.memory_space<vmem>>, %arg17: memref<64x128xbf16, #tpu.memory_space<vmem>>, %arg18: memref<1x128xf32, #tpu.memory_space<vmem>>, %arg19: memref<96x128xbf16, #tpu.memory_space<vmem>>, %arg20: memref<1x128xf32, #tpu.memory_space<vmem>>, %arg21: memref<2x128xf32, #tpu.memory_space<vmem>>, %arg22: memref<16x32xf32, #tpu.memory_space<vmem>>, %arg23: memref<16x32xbf16, #tpu.memory_space<vmem>>, %arg24: memref<16x32xf32, #tpu.memory_space<vmem>>) attributes {dimension_semantics = [#tpu.dimension_semantics<arbitrary>, #tpu.dimension_semantics<arbitrary>], iteration_bounds = array<i64: 3, 2>, scalar_prefetch = 0 : i64, scratch_operands = 3 : i64, tpu.core_type = #tpu.core_type<tc>, window_params = [{pipeline_mode = #tpu.pipeline_mode<synchronous>, transform_indices = @transform_0, window_bounds = array<i64: 16, 16>}, {transform_indices = @transform_1, window_bounds = array<i64: 128, 5>}, {transform_indices = @transform_2, window_bounds = array<i64: 128, 1>}, {transform_indices = @transform_3, window_bounds = array<i64: 1, 128>}, {pipeline_mode = #tpu.pipeline_mode<synchronous>, transform_indices = @transform_4, window_bounds = array<i64: 1, 16>}, {pipeline_mode = #tpu.pipeline_mode<synchronous>, transform_indices = @transform_5, window_bounds = array<i64: 16, 1>}, {pipeline_mode = #tpu.pipeline_mode<synchronous>, transform_indices = @transform_6, window_bounds = array<i64: 32, 1024>}, {pipeline_mode = #tpu.pipeline_mode<synchronous>, transform_indices = @transform_7, window_bounds = array<i64: 1024, 32>}, {pipeline_mode = #tpu.pipeline_mode<synchronous>, transform_indices = @transform_8, window_bounds = array<i64: 16, 32>}, {pipeline_mode = #tpu.pipeline_mode<synchronous>, transform_indices = @transform_9, window_bounds = array<i64: 1, 32>}, {pipeline_mode = #tpu.pipeline_mode<synchronous>, transform_indices = @transform_10, window_bounds = array<i64: 5, 128>}, {pipeline_mode = #tpu.pipeline_mode<synchronous>, transform_indices = @transform_11, window_bounds = array<i64: 1, 128>}, {pipeline_mode = #tpu.pipeline_mode<synchronous>, transform_indices = @transform_12, window_bounds = array<i64: 128, 1024>}, {pipeline_mode = #tpu.pipeline_mode<synchronous>, transform_indices = @transform_13, window_bounds = array<i64: 1, 1024>}, {pipeline_mode = #tpu.pipeline_mode<synchronous>, transform_indices = @transform_14, window_bounds = array<i64: 1, 32>}, {pipeline_mode = #tpu.pipeline_mode<synchronous>, transform_indices = @transform_15, window_bounds = array<i64: 64, 128>}, {pipeline_mode = #tpu.pipeline_mode<synchronous>, transform_indices = @transform_16, window_bounds = array<i64: 1, 128>}, {pipeline_mode = #tpu.pipeline_mode<synchronous>, transform_indices = @transform_17, window_bounds = array<i64: 96, 128>}, {pipeline_mode = #tpu.pipeline_mode<synchronous>, transform_indices = @transform_18, window_bounds = array<i64: 1, 128>}, {pipeline_mode = #tpu.pipeline_mode<synchronous>, transform_indices = @transform_19, window_bounds = array<i64: 2, 128>}]} {
    %c0_i32 = arith.constant 0 : i32
    %0 = arith.cmpi eq, %arg0, %c0_i32 : i32
    %c0_i32_0 = arith.constant 0 : i32
    %1 = arith.cmpi eq, %arg1, %c0_i32_0 : i32
    %2 = arith.andi %0, %1 : i1
    %3 = arith.extui %2 : i1 to i32
    %c0_i32_1 = arith.constant 0 : i32
    %4 = arith.cmpi ne, %3, %c0_i32_1 : i32
    scf.if %4 {
      %c0_40 = arith.constant 0 : index
      %c0_41 = arith.constant 0 : index
      %61 = vector.load %arg2[%c0_40, %c0_41] : memref<16x16xf32, #tpu.memory_space<vmem>>, vector<16x16xf32>
      %c0_42 = arith.constant 0 : index
      %c0_43 = arith.constant 0 : index
      %62 = vector.load %arg10[%c0_42, %c0_43] : memref<16x32xf32, #tpu.memory_space<vmem>>, vector<16x32xf32>
      %cst_44 = arith.constant dense<0.000000e+00> : vector<16x32xf32>
      %63 = tpu.matmul %61, %62, %cst_44 {dimension_numbers = #tpu.dot_dimension_numbers<[1], [0], [0], [1], [0, 0, 1, 1], [], []>} : vector<16x16xf32>, vector<16x32xf32>, vector<16x32xf32> -> vector<16x32xf32>
      %c0_45 = arith.constant 0 : index
      %c0_46 = arith.constant 0 : index
      %64 = vector.load %arg11[%c0_45, %c0_46] : memref<1x32xf32, #tpu.memory_space<vmem>>, vector<1x32xf32>
      %65 = vector.broadcast %64 : vector<1x32xf32> to vector<16x32xf32>
      %66 = arith.addf %63, %65 : vector<16x32xf32>
      %cst_47 = arith.constant 0.000000e+00 : f32
      %67 = vector.broadcast %cst_47 : f32 to vector<16x32xf32>
      %68 = arith.maximumf %66, %67 : vector<16x32xf32>
      %c0_48 = arith.constant 0 : index
      %c0_49 = arith.constant 0 : index
      %69 = vector.load %arg22[%c0_48, %c0_49] : memref<16x32xf32, #tpu.memory_space<vmem>>, vector<16x32xf32>
      tpu.vector_store %arg22[%c0_48, %c0_49], %68 {strides = array<i32>} : memref<16x32xf32, #tpu.memory_space<vmem>>, vector<16x32xf32>,
      %70 = arith.truncf %68 : vector<16x32xf32> to vector<16x32xbf16>
      %c0_50 = arith.constant 0 : index
      %c0_51 = arith.constant 0 : index
      %71 = vector.load %arg23[%c0_50, %c0_51] : memref<16x32xbf16, #tpu.memory_space<vmem>>, vector<16x32xbf16>
      tpu.vector_store %arg23[%c0_50, %c0_51], %70 {strides = array<i32>} : memref<16x32xbf16, #tpu.memory_space<vmem>>, vector<16x32xbf16>,
    } else {
    }
    %c0_i32_2 = arith.constant 0 : i32
    %5 = arith.cmpi eq, %arg1, %c0_i32_2 : i32
    %6 = arith.extui %5 : i1 to i32
    %c0_i32_3 = arith.constant 0 : i32
    %7 = arith.cmpi ne, %6, %c0_i32_3 : i32
    scf.if %7 {
      %cst_40 = arith.constant 0.000000e+00 : f32
      %61 = vector.broadcast %cst_40 : f32 to vector<16x32xf32>
      %c0_41 = arith.constant 0 : index
      %c0_42 = arith.constant 0 : index
      %62 = vector.load %arg24[%c0_41, %c0_42] : memref<16x32xf32, #tpu.memory_space<vmem>>, vector<16x32xf32>
      tpu.vector_store %arg24[%c0_41, %c0_42], %61 {strides = array<i32>} : memref<16x32xf32, #tpu.memory_space<vmem>>, vector<16x32xf32>,
    } else {
    }
    %c0 = arith.constant 0 : index
    %c0_4 = arith.constant 0 : index
    %8 = vector.load %arg4[%c0, %c0_4] : memref<128x1xi32, #tpu.memory_space<vmem>>, vector<128x1xi32>
    %c0_5 = arith.constant 0 : index
    %c0_6 = arith.constant 0 : index
    %9 = vector.load %arg5[%c0_5, %c0_6] : memref<1x128xi32, #tpu.memory_space<vmem>>, vector<1x128xi32>
    %10 = tpu.iota {dimensions = array<i32: 1>} : vector<128x16xi32>
    %11 = vector.broadcast %8 : vector<128x1xi32> to vector<128x16xi32>
    %12 = arith.cmpi eq, %11, %10 : vector<128x16xi32>
    %cst = arith.constant 1.000000e+00 : f32
    %cst_7 = arith.constant 0.000000e+00 : f32
    %13 = vector.broadcast %cst : f32 to vector<128x16xf32>
    %14 = vector.broadcast %cst_7 : f32 to vector<128x16xf32>
    %15 = arith.select %12, %13, %14 : vector<128x16xi1>, vector<128x16xf32>
    %16 = arith.truncf %15 : vector<128x16xf32> to vector<128x16xbf16>
    %17 = tpu.iota {dimensions = array<i32: 0>} : vector<16x128xi32>
    %18 = vector.broadcast %9 : vector<1x128xi32> to vector<16x128xi32>
    %19 = arith.cmpi eq, %17, %18 : vector<16x128xi32>
    %cst_8 = arith.constant 1.000000e+00 : f32
    %cst_9 = arith.constant 0.000000e+00 : f32
    %20 = vector.broadcast %cst_8 : f32 to vector<16x128xf32>
    %21 = vector.broadcast %cst_9 : f32 to vector<16x128xf32>
    %22 = arith.select %19, %20, %21 : vector<16x128xi1>, vector<16x128xf32>
    %23 = arith.truncf %22 : vector<16x128xf32> to vector<16x128xbf16>
    %c0_10 = arith.constant 0 : index
    %c0_11 = arith.constant 0 : index
    %24 = vector.load %arg23[%c0_10, %c0_11] : memref<16x32xbf16, #tpu.memory_space<vmem>>, vector<16x32xbf16>
    %cst_12 = arith.constant dense<0.000000e+00> : vector<128x32xf32>
    %25 = tpu.matmul %16, %24, %cst_12 {dimension_numbers = #tpu.dot_dimension_numbers<[1], [0], [0], [1], [0, 0, 1, 1], [], []>} : vector<128x16xbf16>, vector<16x32xbf16>, vector<128x32xf32> -> vector<128x32xf32>
    %c0_13 = arith.constant 0 : index
    %c0_14 = arith.constant 0 : index
    %26 = vector.load %arg3[%c0_13, %c0_14] : memref<128x5xf32, #tpu.memory_space<vmem>>, vector<128x5xf32>
    %27 = arith.truncf %26 : vector<128x5xf32> to vector<128x5xbf16>
    %c0_15 = arith.constant 0 : index
    %c0_16 = arith.constant 0 : index
    %28 = vector.load %arg12[%c0_15, %c0_16] : memref<5x128xbf16, #tpu.memory_space<vmem>>, vector<5x128xbf16>
    %cst_17 = arith.constant dense<0.000000e+00> : vector<128x128xf32>
    %29 = tpu.matmul %27, %28, %cst_17 {dimension_numbers = #tpu.dot_dimension_numbers<[1], [0], [0], [1], [0, 0, 1, 1], [], []>} : vector<128x5xbf16>, vector<5x128xbf16>, vector<128x128xf32> -> vector<128x128xf32>
    %c0_18 = arith.constant 0 : index
    %c0_19 = arith.constant 0 : index
    %30 = vector.load %arg13[%c0_18, %c0_19] : memref<1x128xf32, #tpu.memory_space<vmem>>, vector<1x128xf32>
    %31 = vector.broadcast %30 : vector<1x128xf32> to vector<128x128xf32>
    %32 = arith.addf %29, %31 : vector<128x128xf32>
    %cst_20 = arith.constant 0.000000e+00 : f32
    %33 = vector.broadcast %cst_20 : f32 to vector<128x128xf32>
    %34 = arith.maximumf %32, %33 : vector<128x128xf32>
    %35 = arith.truncf %34 : vector<128x128xf32> to vector<128x128xbf16>
    %c0_21 = arith.constant 0 : index
    %c0_22 = arith.constant 0 : index
    %36 = vector.load %arg14[%c0_21, %c0_22] : memref<128x1024xbf16, #tpu.memory_space<vmem>>, vector<128x1024xbf16>
    %cst_23 = arith.constant dense<0.000000e+00> : vector<128x1024xf32>
    %37 = tpu.matmul %35, %36, %cst_23 {dimension_numbers = #tpu.dot_dimension_numbers<[1], [0], [0], [1], [0, 0, 1, 1], [], []>} : vector<128x128xbf16>, vector<128x1024xbf16>, vector<128x1024xf32> -> vector<128x1024xf32>
    %c0_24 = arith.constant 0 : index
    %c0_25 = arith.constant 0 : index
    %38 = vector.load %arg15[%c0_24, %c0_25] : memref<1x1024xf32, #tpu.memory_space<vmem>>, vector<1x1024xf32>
    %39 = vector.broadcast %38 : vector<1x1024xf32> to vector<128x1024xf32>
    %40 = arith.addf %37, %39 : vector<128x1024xf32>
    %41 = arith.truncf %25 : vector<128x32xf32> to vector<128x32xbf16>
    %c0_26 = arith.constant 0 : index
    %c0_27 = arith.constant 0 : index
    %42 = vector.load %arg8[%c0_26, %c0_27] : memref<32x1024xbf16, #tpu.memory_space<vmem>>, vector<32x1024xbf16>
    %cst_28 = arith.constant dense<0.000000e+00> : vector<128x1024xf32>
    %43 = tpu.matmul %41, %42, %cst_28 {dimension_numbers = #tpu.dot_dimension_numbers<[1], [0], [0], [1], [0, 0, 1, 1], [], []>} : vector<128x32xbf16>, vector<32x1024xbf16>, vector<128x1024xf32> -> vector<128x1024xf32>
    %44 = arith.mulf %43, %40 : vector<128x1024xf32>
    %45 = arith.truncf %44 : vector<128x1024xf32> to vector<128x1024xbf16>
    %c0_29 = arith.constant 0 : index
    %c0_30 = arith.constant 0 : index
    %46 = vector.load %arg9[%c0_29, %c0_30] : memref<1024x32xbf16, #tpu.memory_space<vmem>>, vector<1024x32xbf16>
    %cst_31 = arith.constant dense<0.000000e+00> : vector<128x32xf32>
    %47 = tpu.matmul %45, %46, %cst_31 {dimension_numbers = #tpu.dot_dimension_numbers<[1], [0], [0], [1], [0, 0, 1, 1], [], []>} : vector<128x1024xbf16>, vector<1024x32xbf16>, vector<128x32xf32> -> vector<128x32xf32>
    %c0_32 = arith.constant 0 : index
    %c0_33 = arith.constant 0 : index
    %48 = vector.load %arg24[%c0_32, %c0_33] : memref<16x32xf32, #tpu.memory_space<vmem>>, vector<16x32xf32>
    %49 = arith.truncf %47 : vector<128x32xf32> to vector<128x32xbf16>
    %cst_34 = arith.constant dense<0.000000e+00> : vector<16x32xf32>
    %50 = tpu.matmul %23, %49, %cst_34 {dimension_numbers = #tpu.dot_dimension_numbers<[1], [0], [0], [1], [0, 0, 1, 1], [], []>} : vector<16x128xbf16>, vector<128x32xbf16>, vector<16x32xf32> -> vector<16x32xf32>
    %51 = arith.addf %48, %50 : vector<16x32xf32>
    %c0_35 = arith.constant 0 : index
    %c0_36 = arith.constant 0 : index
    %52 = vector.load %arg24[%c0_35, %c0_36] : memref<16x32xf32, #tpu.memory_space<vmem>>, vector<16x32xf32>
    tpu.vector_store %arg24[%c0_35, %c0_36], %51 {strides = array<i32>} : memref<16x32xf32, #tpu.memory_space<vmem>>, vector<16x32xf32>,
    %c1_i32 = arith.constant 1 : i32
    %53 = arith.cmpi eq, %arg1, %c1_i32 : i32
    %54 = arith.extui %53 : i1 to i32
    %c0_i32_37 = arith.constant 0 : i32
    %55 = arith.cmpi ne, %54, %c0_i32_37 : i32
    scf.if %55 {
      %c0_40 = arith.constant 0 : index
      %c0_41 = arith.constant 0 : index
      %61 = vector.load %arg22[%c0_40, %c0_41] : memref<16x32xf32, #tpu.memory_space<vmem>>, vector<16x32xf32>
      %c0_42 = arith.constant 0 : index
      %c0_43 = arith.constant 0 : index
      %62 = vector.load %arg24[%c0_42, %c0_43] : memref<16x32xf32, #tpu.memory_space<vmem>>, vector<16x32xf32>
      %c0_44 = arith.constant 0 : index
      %c0_45 = arith.constant 0 : index
      %63 = vector.load %arg7[%c0_44, %c0_45] : memref<16x1xf32, #tpu.memory_space<vmem>>, vector<16x1xf32>
      %64 = vector.broadcast %63 : vector<16x1xf32> to vector<16x32xf32>
      %65 = arith.mulf %62, %64 : vector<16x32xf32>
      %c0_46 = arith.constant 0 : index
      %c0_47 = arith.constant 0 : index
      %66 = vector.load %arg16[%c0_46, %c0_47] : memref<1x32xf32, #tpu.memory_space<vmem>>, vector<1x32xf32>
      %67 = vector.broadcast %66 : vector<1x32xf32> to vector<16x32xf32>
      %68 = arith.addf %65, %67 : vector<16x32xf32>
      %cst_48 = arith.constant 0.000000e+00 : f32
      %69 = vector.broadcast %cst_48 : f32 to vector<16x32xf32>
      %70 = arith.maximumf %68, %69 : vector<16x32xf32>
      %71 = tpu.concatenate %70, %61 in 1 : vector<16x32xf32>, vector<16x32xf32> -> vector<16x64xf32>
      %72 = arith.truncf %71 : vector<16x64xf32> to vector<16x64xbf16>
      %c0_49 = arith.constant 0 : index
      %c0_50 = arith.constant 0 : index
      %73 = vector.load %arg17[%c0_49, %c0_50] : memref<64x128xbf16, #tpu.memory_space<vmem>>, vector<64x128xbf16>
      %cst_51 = arith.constant dense<0.000000e+00> : vector<16x128xf32>
      %74 = tpu.matmul %72, %73, %cst_51 {dimension_numbers = #tpu.dot_dimension_numbers<[1], [0], [0], [1], [0, 0, 1, 1], [], []>} : vector<16x64xbf16>, vector<64x128xbf16>, vector<16x128xf32> -> vector<16x128xf32>
      %c0_52 = arith.constant 0 : index
      %c0_53 = arith.constant 0 : index
      %75 = vector.load %arg18[%c0_52, %c0_53] : memref<1x128xf32, #tpu.memory_space<vmem>>, vector<1x128xf32>
      %76 = vector.broadcast %75 : vector<1x128xf32> to vector<16x128xf32>
      %77 = arith.addf %74, %76 : vector<16x128xf32>
      %78 = vector.extract_strided_slice %77 {offsets = [0, 0], sizes = [16, 32], strides = [1, 1]} : vector<16x128xf32> to vector<16x32xf32>
      %79 = arith.negf %78 : vector<16x32xf32>
      %80 = math.exp %79 : vector<16x32xf32>
      %cst_54 = arith.constant 1.000000e+00 : f32
      %81 = vector.broadcast %cst_54 : f32 to vector<16x32xf32>
      %82 = arith.addf %81, %80 : vector<16x32xf32>
      %83 = arith.divf %81, %82 : vector<16x32xf32>
      %84 = vector.extract_strided_slice %77 {offsets = [0, 32], sizes = [16, 32], strides = [1, 1]} : vector<16x128xf32> to vector<16x32xf32>
      %85 = arith.negf %84 : vector<16x32xf32>
      %86 = math.exp %85 : vector<16x32xf32>
      %cst_55 = arith.constant 1.000000e+00 : f32
      %87 = vector.broadcast %cst_55 : f32 to vector<16x32xf32>
      %88 = arith.addf %87, %86 : vector<16x32xf32>
      %89 = arith.divf %87, %88 : vector<16x32xf32>
      %90 = vector.extract_strided_slice %77 {offsets = [0, 64], sizes = [16, 32], strides = [1, 1]} : vector<16x128xf32> to vector<16x32xf32>
      %91 = vector.extract_strided_slice %77 {offsets = [0, 96], sizes = [16, 32], strides = [1, 1]} : vector<16x128xf32> to vector<16x32xf32>
      %92 = arith.mulf %83, %91 : vector<16x32xf32>
      %93 = arith.addf %90, %92 : vector<16x32xf32>
      %94 = math.tanh %93 : vector<16x32xf32>
      %cst_56 = arith.constant 1.000000e+00 : f32
      %95 = vector.broadcast %cst_56 : f32 to vector<16x32xf32>
      %96 = arith.subf %95, %89 : vector<16x32xf32>
      %97 = arith.mulf %96, %94 : vector<16x32xf32>
      %98 = arith.mulf %89, %61 : vector<16x32xf32>
      %99 = arith.addf %97, %98 : vector<16x32xf32>
      %c0_57 = arith.constant 0 : index
      %c0_58 = arith.constant 0 : index
      %100 = vector.load %arg22[%c0_57, %c0_58] : memref<16x32xf32, #tpu.memory_space<vmem>>, vector<16x32xf32>
      tpu.vector_store %arg22[%c0_57, %c0_58], %99 {strides = array<i32>} : memref<16x32xf32, #tpu.memory_space<vmem>>, vector<16x32xf32>,
      %101 = arith.truncf %99 : vector<16x32xf32> to vector<16x32xbf16>
      %c0_59 = arith.constant 0 : index
      %c0_60 = arith.constant 0 : index
      %102 = vector.load %arg23[%c0_59, %c0_60] : memref<16x32xbf16, #tpu.memory_space<vmem>>, vector<16x32xbf16>
      tpu.vector_store %arg23[%c0_59, %c0_60], %101 {strides = array<i32>} : memref<16x32xbf16, #tpu.memory_space<vmem>>, vector<16x32xbf16>,
    } else {
    }
    %c2_i32 = arith.constant 2 : i32
    %56 = arith.cmpi eq, %arg0, %c2_i32 : i32
    %c1_i32_38 = arith.constant 1 : i32
    %57 = arith.cmpi eq, %arg1, %c1_i32_38 : i32
    %58 = arith.andi %56, %57 : i1
    %59 = arith.extui %58 : i1 to i32
    %c0_i32_39 = arith.constant 0 : i32
    %60 = arith.cmpi ne, %59, %c0_i32_39 : i32
    scf.if %60 {
      %c0_40 = arith.constant 0 : index
      %c0_41 = arith.constant 0 : index
      %61 = vector.load %arg23[%c0_40, %c0_41] : memref<16x32xbf16, #tpu.memory_space<vmem>>, vector<16x32xbf16>
      %62 = tpu.iota {dimensions = array<i32: 0>} : vector<2x16xi32>
      %c0_42 = arith.constant 0 : index
      %c0_43 = arith.constant 0 : index
      %63 = vector.load %arg6[%c0_42, %c0_43] : memref<1x16xi32, #tpu.memory_space<vmem>>, vector<1x16xi32>
      %64 = vector.broadcast %63 : vector<1x16xi32> to vector<2x16xi32>
      %65 = arith.cmpi eq, %62, %64 : vector<2x16xi32>
      %c0_44 = arith.constant 0 : index
      %c0_45 = arith.constant 0 : index
      %66 = vector.load %arg19[%c0_44, %c0_45] : memref<96x128xbf16, #tpu.memory_space<vmem>>, vector<96x128xbf16>
      %c0_46 = arith.constant 0 : index
      %c0_47 = arith.constant 0 : index
      %67 = vector.load %arg20[%c0_46, %c0_47] : memref<1x128xf32, #tpu.memory_space<vmem>>, vector<1x128xf32>
      %cst_48 = arith.constant 0.000000e+00 : f32
      %68 = vector.broadcast %cst_48 : f32 to vector<2x32xf32>
      %cst_49 = arith.constant 0.000000e+00 : f32
      %69 = vector.broadcast %cst_49 : f32 to vector<2x32xf32>
      %cst_50 = arith.constant 0.000000e+00 : f32
      %70 = vector.broadcast %cst_50 : f32 to vector<2x32xf32>
      %cst_51 = arith.constant 0.000000e+00 : f32
      %71 = vector.broadcast %cst_51 : f32 to vector<2x32xf32>
      %72 = tpu.concatenate %68, %69, %70 in 1 : vector<2x32xf32>, vector<2x32xf32>, vector<2x32xf32> -> vector<2x96xf32>
      %73 = arith.truncf %72 : vector<2x96xf32> to vector<2x96xbf16>
      %cst_52 = arith.constant dense<0.000000e+00> : vector<2x128xf32>
      %74 = tpu.matmul %73, %66, %cst_52 {dimension_numbers = #tpu.dot_dimension_numbers<[1], [0], [0], [1], [0, 0, 1, 1], [], []>} : vector<2x96xbf16>, vector<96x128xbf16>, vector<2x128xf32> -> vector<2x128xf32>
      %75 = vector.broadcast %67 : vector<1x128xf32> to vector<2x128xf32>
      %76 = arith.addf %74, %75 : vector<2x128xf32>
      %77 = vector.extract_strided_slice %76 {offsets = [0, 0], sizes = [2, 32], strides = [1, 1]} : vector<2x128xf32> to vector<2x32xf32>
      %78 = arith.negf %77 : vector<2x32xf32>
      %79 = math.exp %78 : vector<2x32xf32>
      %cst_53 = arith.constant 1.000000e+00 : f32
      %80 = vector.broadcast %cst_53 : f32 to vector<2x32xf32>
      %81 = arith.addf %80, %79 : vector<2x32xf32>
      %82 = arith.divf %80, %81 : vector<2x32xf32>
      %83 = vector.extract_strided_slice %76 {offsets = [0, 32], sizes = [2, 32], strides = [1, 1]} : vector<2x128xf32> to vector<2x32xf32>
      %84 = arith.negf %83 : vector<2x32xf32>
      %85 = math.exp %84 : vector<2x32xf32>
      %cst_54 = arith.constant 1.000000e+00 : f32
      %86 = vector.broadcast %cst_54 : f32 to vector<2x32xf32>
      %87 = arith.addf %86, %85 : vector<2x32xf32>
      %88 = arith.divf %86, %87 : vector<2x32xf32>
      %89 = vector.extract_strided_slice %76 {offsets = [0, 64], sizes = [2, 32], strides = [1, 1]} : vector<2x128xf32> to vector<2x32xf32>
      %90 = math.tanh %89 : vector<2x32xf32>
      %91 = vector.extract_strided_slice %76 {offsets = [0, 96], sizes = [2, 32], strides = [1, 1]} : vector<2x128xf32> to vector<2x32xf32>
      %92 = arith.negf %91 : vector<2x32xf32>
      %93 = math.exp %92 : vector<2x32xf32>
      %cst_55 = arith.constant 1.000000e+00 : f32
      %94 = vector.broadcast %cst_55 : f32 to vector<2x32xf32>
      %95 = arith.addf %94, %93 : vector<2x32xf32>
      %96 = arith.divf %94, %95 : vector<2x32xf32>
      %97 = arith.mulf %88, %71 : vector<2x32xf32>
      %98 = arith.mulf %82, %90 : vector<2x32xf32>
      %99 = arith.addf %97, %98 : vector<2x32xf32>
      %100 = math.tanh %99 : vector<2x32xf32>
      %101 = arith.mulf %96, %100 : vector<2x32xf32>
      %102 = arith.truncf %101 : vector<2x32xf32> to vector<2x32xbf16>
      %cst_56 = arith.constant dense<0.000000e+00> : vector<2x16xf32>
      %103 = tpu.matmul %102, %61, %cst_56 {dimension_numbers = #tpu.dot_dimension_numbers<[1], [1], [0], [0], [0, 0, 1, 0], [], []>} : vector<2x32xbf16>, vector<16x32xbf16>, vector<2x16xf32> -> vector<2x16xf32>
      %cst_57 = arith.constant -1.000000e+30 : f32
      %104 = vector.broadcast %cst_57 : f32 to vector<2x16xf32>
      %105 = arith.select %65, %103, %104 : vector<2x16xi1>, vector<2x16xf32>
      %cst_58 = arith.constant dense<0xFF800000> : vector<2xf32>
      %106 = vector.multi_reduction <maximumf>, %105, %cst_58 [1] : vector<2x16xf32> to vector<2xf32>
      %107 = vector.shape_cast %106 : vector<2xf32> to vector<2x1xf32>
      %108 = vector.broadcast %107 : vector<2x1xf32> to vector<2x16xf32>
      %109 = arith.subf %105, %108 : vector<2x16xf32>
      %110 = math.exp %109 : vector<2x16xf32>
      %cst_59 = arith.constant 0.000000e+00 : f32
      %111 = vector.broadcast %cst_59 : f32 to vector<2x16xf32>
      %112 = arith.select %65, %110, %111 : vector<2x16xi1>, vector<2x16xf32>
      %cst_60 = arith.constant dense<0.000000e+00> : vector<2xf32>
      %113 = vector.multi_reduction <add>, %112, %cst_60 [1] : vector<2x16xf32> to vector<2xf32>
      %114 = vector.shape_cast %113 : vector<2xf32> to vector<2x1xf32>
      %cst_61 = arith.constant 1.000000e-16 : f32
      %115 = vector.broadcast %cst_61 : f32 to vector<2x1xf32>
      %116 = arith.addf %114, %115 : vector<2x1xf32>
      %117 = tpu.reciprocal %116 {approx = true} : vector<2x1xf32> -> vector<2x1xf32>
      %118 = vector.broadcast %117 : vector<2x1xf32> to vector<2x16xf32>
      %119 = arith.mulf %112, %118 : vector<2x16xf32>
      %120 = arith.truncf %119 : vector<2x16xf32> to vector<2x16xbf16>
      %cst_62 = arith.constant dense<0.000000e+00> : vector<2x32xf32>
      %121 = tpu.matmul %120, %61, %cst_62 {dimension_numbers = #tpu.dot_dimension_numbers<[1], [0], [0], [1], [0, 0, 1, 1], [], []>} : vector<2x16xbf16>, vector<16x32xbf16>, vector<2x32xf32> -> vector<2x32xf32>
      %122 = tpu.concatenate %101, %121, %101 in 1 : vector<2x32xf32>, vector<2x32xf32>, vector<2x32xf32> -> vector<2x96xf32>
      %123 = arith.truncf %122 : vector<2x96xf32> to vector<2x96xbf16>
      %cst_63 = arith.constant dense<0.000000e+00> : vector<2x128xf32>
      %124 = tpu.matmul %123, %66, %cst_63 {dimension_numbers = #tpu.dot_dimension_numbers<[1], [0], [0], [1], [0, 0, 1, 1], [], []>} : vector<2x96xbf16>, vector<96x128xbf16>, vector<2x128xf32> -> vector<2x128xf32>
      %125 = vector.broadcast %67 : vector<1x128xf32> to vector<2x128xf32>
      %126 = arith.addf %124, %125 : vector<2x128xf32>
      %127 = vector.extract_strided_slice %126 {offsets = [0, 0], sizes = [2, 32], strides = [1, 1]} : vector<2x128xf32> to vector<2x32xf32>
      %128 = arith.negf %127 : vector<2x32xf32>
      %129 = math.exp %128 : vector<2x32xf32>
      %cst_64 = arith.constant 1.000000e+00 : f32
      %130 = vector.broadcast %cst_64 : f32 to vector<2x32xf32>
      %131 = arith.addf %130, %129 : vector<2x32xf32>
      %132 = arith.divf %130, %131 : vector<2x32xf32>
      %133 = vector.extract_strided_slice %126 {offsets = [0, 32], sizes = [2, 32], strides = [1, 1]} : vector<2x128xf32> to vector<2x32xf32>
      %134 = arith.negf %133 : vector<2x32xf32>
      %135 = math.exp %134 : vector<2x32xf32>
      %cst_65 = arith.constant 1.000000e+00 : f32
      %136 = vector.broadcast %cst_65 : f32 to vector<2x32xf32>
      %137 = arith.addf %136, %135 : vector<2x32xf32>
      %138 = arith.divf %136, %137 : vector<2x32xf32>
      %139 = vector.extract_strided_slice %126 {offsets = [0, 64], sizes = [2, 32], strides = [1, 1]} : vector<2x128xf32> to vector<2x32xf32>
      %140 = math.tanh %139 : vector<2x32xf32>
      %141 = vector.extract_strided_slice %126 {offsets = [0, 96], sizes = [2, 32], strides = [1, 1]} : vector<2x128xf32> to vector<2x32xf32>
      %142 = arith.negf %141 : vector<2x32xf32>
      %143 = math.exp %142 : vector<2x32xf32>
      %cst_66 = arith.constant 1.000000e+00 : f32
      %144 = vector.broadcast %cst_66 : f32 to vector<2x32xf32>
      %145 = arith.addf %144, %143 : vector<2x32xf32>
      %146 = arith.divf %144, %145 : vector<2x32xf32>
      %147 = arith.mulf %138, %99 : vector<2x32xf32>
      %148 = arith.mulf %132, %140 : vector<2x32xf32>
      %149 = arith.addf %147, %148 : vector<2x32xf32>
      %150 = math.tanh %149 : vector<2x32xf32>
      %151 = arith.mulf %146, %150 : vector<2x32xf32>
      %152 = arith.truncf %151 : vector<2x32xf32> to vector<2x32xbf16>
      %cst_67 = arith.constant dense<0.000000e+00> : vector<2x16xf32>
      %153 = tpu.matmul %152, %61, %cst_67 {dimension_numbers = #tpu.dot_dimension_numbers<[1], [1], [0], [0], [0, 0, 1, 0], [], []>} : vector<2x32xbf16>, vector<16x32xbf16>, vector<2x16xf32> -> vector<2x16xf32>
      %cst_68 = arith.constant -1.000000e+30 : f32
      %154 = vector.broadcast %cst_68 : f32 to vector<2x16xf32>
      %155 = arith.select %65, %153, %154 : vector<2x16xi1>, vector<2x16xf32>
      %cst_69 = arith.constant dense<0xFF800000> : vector<2xf32>
      %156 = vector.multi_reduction <maximumf>, %155, %cst_69 [1] : vector<2x16xf32> to vector<2xf32>
      %157 = vector.shape_cast %156 : vector<2xf32> to vector<2x1xf32>
      %158 = vector.broadcast %157 : vector<2x1xf32> to vector<2x16xf32>
      %159 = arith.subf %155, %158 : vector<2x16xf32>
      %160 = math.exp %159 : vector<2x16xf32>
      %cst_70 = arith.constant 0.000000e+00 : f32
      %161 = vector.broadcast %cst_70 : f32 to vector<2x16xf32>
      %162 = arith.select %65, %160, %161 : vector<2x16xi1>, vector<2x16xf32>
      %cst_71 = arith.constant dense<0.000000e+00> : vector<2xf32>
      %163 = vector.multi_reduction <add>, %162, %cst_71 [1] : vector<2x16xf32> to vector<2xf32>
      %164 = vector.shape_cast %163 : vector<2xf32> to vector<2x1xf32>
      %cst_72 = arith.constant 1.000000e-16 : f32
      %165 = vector.broadcast %cst_72 : f32 to vector<2x1xf32>
      %166 = arith.addf %164, %165 : vector<2x1xf32>
      %167 = tpu.reciprocal %166 {approx = true} : vector<2x1xf32> -> vector<2x1xf32>
      %168 = vector.broadcast %167 : vector<2x1xf32> to vector<2x16xf32>
      %169 = arith.mulf %162, %168 : vector<2x16xf32>
      %170 = arith.truncf %169 : vector<2x16xf32> to vector<2x16xbf16>
      %cst_73 = arith.constant dense<0.000000e+00> : vector<2x32xf32>
      %171 = tpu.matmul %170, %61, %cst_73 {dimension_numbers = #tpu.dot_dimension_numbers<[1], [0], [0], [1], [0, 0, 1, 1], [], []>} : vector<2x16xbf16>, vector<16x32xbf16>, vector<2x32xf32> -> vector<2x32xf32>
      %172 = tpu.concatenate %151, %171, %151 in 1 : vector<2x32xf32>, vector<2x32xf32>, vector<2x32xf32> -> vector<2x96xf32>
      %173 = arith.truncf %172 : vector<2x96xf32> to vector<2x96xbf16>
      %cst_74 = arith.constant dense<0.000000e+00> : vector<2x128xf32>
      %174 = tpu.matmul %173, %66, %cst_74 {dimension_numbers = #tpu.dot_dimension_numbers<[1], [0], [0], [1], [0, 0, 1, 1], [], []>} : vector<2x96xbf16>, vector<96x128xbf16>, vector<2x128xf32> -> vector<2x128xf32>
      %175 = vector.broadcast %67 : vector<1x128xf32> to vector<2x128xf32>
      %176 = arith.addf %174, %175 : vector<2x128xf32>
      %177 = vector.extract_strided_slice %176 {offsets = [0, 0], sizes = [2, 32], strides = [1, 1]} : vector<2x128xf32> to vector<2x32xf32>
      %178 = arith.negf %177 : vector<2x32xf32>
      %179 = math.exp %178 : vector<2x32xf32>
      %cst_75 = arith.constant 1.000000e+00 : f32
      %180 = vector.broadcast %cst_75 : f32 to vector<2x32xf32>
      %181 = arith.addf %180, %179 : vector<2x32xf32>
      %182 = arith.divf %180, %181 : vector<2x32xf32>
      %183 = vector.extract_strided_slice %176 {offsets = [0, 32], sizes = [2, 32], strides = [1, 1]} : vector<2x128xf32> to vector<2x32xf32>
      %184 = arith.negf %183 : vector<2x32xf32>
      %185 = math.exp %184 : vector<2x32xf32>
      %cst_76 = arith.constant 1.000000e+00 : f32
      %186 = vector.broadcast %cst_76 : f32 to vector<2x32xf32>
      %187 = arith.addf %186, %185 : vector<2x32xf32>
      %188 = arith.divf %186, %187 : vector<2x32xf32>
      %189 = vector.extract_strided_slice %176 {offsets = [0, 64], sizes = [2, 32], strides = [1, 1]} : vector<2x128xf32> to vector<2x32xf32>
      %190 = math.tanh %189 : vector<2x32xf32>
      %191 = vector.extract_strided_slice %176 {offsets = [0, 96], sizes = [2, 32], strides = [1, 1]} : vector<2x128xf32> to vector<2x32xf32>
      %192 = arith.negf %191 : vector<2x32xf32>
      %193 = math.exp %192 : vector<2x32xf32>
      %cst_77 = arith.constant 1.000000e+00 : f32
      %194 = vector.broadcast %cst_77 : f32 to vector<2x32xf32>
      %195 = arith.addf %194, %193 : vector<2x32xf32>
      %196 = arith.divf %194, %195 : vector<2x32xf32>
      %197 = arith.mulf %188, %149 : vector<2x32xf32>
      %198 = arith.mulf %182, %190 : vector<2x32xf32>
      %199 = arith.addf %197, %198 : vector<2x32xf32>
      %200 = math.tanh %199 : vector<2x32xf32>
      %201 = arith.mulf %196, %200 : vector<2x32xf32>
      %202 = arith.truncf %201 : vector<2x32xf32> to vector<2x32xbf16>
      %cst_78 = arith.constant dense<0.000000e+00> : vector<2x16xf32>
      %203 = tpu.matmul %202, %61, %cst_78 {dimension_numbers = #tpu.dot_dimension_numbers<[1], [1], [0], [0], [0, 0, 1, 0], [], []>} : vector<2x32xbf16>, vector<16x32xbf16>, vector<2x16xf32> -> vector<2x16xf32>
      %cst_79 = arith.constant -1.000000e+30 : f32
      %204 = vector.broadcast %cst_79 : f32 to vector<2x16xf32>
      %205 = arith.select %65, %203, %204 : vector<2x16xi1>, vector<2x16xf32>
      %cst_80 = arith.constant dense<0xFF800000> : vector<2xf32>
      %206 = vector.multi_reduction <maximumf>, %205, %cst_80 [1] : vector<2x16xf32> to vector<2xf32>
      %207 = vector.shape_cast %206 : vector<2xf32> to vector<2x1xf32>
      %208 = vector.broadcast %207 : vector<2x1xf32> to vector<2x16xf32>
      %209 = arith.subf %205, %208 : vector<2x16xf32>
      %210 = math.exp %209 : vector<2x16xf32>
      %cst_81 = arith.constant 0.000000e+00 : f32
      %211 = vector.broadcast %cst_81 : f32 to vector<2x16xf32>
      %212 = arith.select %65, %210, %211 : vector<2x16xi1>, vector<2x16xf32>
      %cst_82 = arith.constant dense<0.000000e+00> : vector<2xf32>
      %213 = vector.multi_reduction <add>, %212, %cst_82 [1] : vector<2x16xf32> to vector<2xf32>
      %214 = vector.shape_cast %213 : vector<2xf32> to vector<2x1xf32>
      %cst_83 = arith.constant 1.000000e-16 : f32
      %215 = vector.broadcast %cst_83 : f32 to vector<2x1xf32>
      %216 = arith.addf %214, %215 : vector<2x1xf32>
      %217 = tpu.reciprocal %216 {approx = true} : vector<2x1xf32> -> vector<2x1xf32>
      %218 = vector.broadcast %217 : vector<2x1xf32> to vector<2x16xf32>
      %219 = arith.mulf %212, %218 : vector<2x16xf32>
      %220 = arith.truncf %219 : vector<2x16xf32> to vector<2x16xbf16>
      %cst_84 = arith.constant dense<0.000000e+00> : vector<2x32xf32>
      %221 = tpu.matmul %220, %61, %cst_84 {dimension_numbers = #tpu.dot_dimension_numbers<[1], [0], [0], [1], [0, 0, 1, 1], [], []>} : vector<2x16xbf16>, vector<16x32xbf16>, vector<2x32xf32> -> vector<2x32xf32>
      %cst_85 = arith.constant 0.000000e+00 : f32
      %222 = vector.broadcast %cst_85 : f32 to vector<2x64xf32>
      %223 = tpu.concatenate %201, %221, %222 in 1 : vector<2x32xf32>, vector<2x32xf32>, vector<2x64xf32> -> vector<2x128xf32>
      %c0_86 = arith.constant 0 : index
      %c0_87 = arith.constant 0 : index
      %224 = vector.load %arg21[%c0_86, %c0_87] : memref<2x128xf32, #tpu.memory_space<vmem>>, vector<2x128xf32>
      tpu.vector_store %arg21[%c0_86, %c0_87], %223 {strides = array<i32>} : memref<2x128xf32, #tpu.memory_space<vmem>>, vector<2x128xf32>,
    } else {
    }
    return
  }
  func.func @transform_0(%arg0: i32, %arg1: i32) -> (i32, i32) {
    %c0_i32 = arith.constant 0 : i32
    %c0_i32_0 = arith.constant 0 : i32
    %c0_i32_1 = arith.constant 0 : i32
    return %c0_i32, %c0_i32_0 : i32, i32
  }
  func.func @transform_1(%arg0: i32, %arg1: i32) -> (i32, i32) {
    %c0_i32 = arith.constant 0 : i32
    %c0_i32_0 = arith.constant 0 : i32
    return %arg1, %c0_i32 : i32, i32
  }
  func.func @transform_2(%arg0: i32, %arg1: i32) -> (i32, i32) {
    %c0_i32 = arith.constant 0 : i32
    %c0_i32_0 = arith.constant 0 : i32
    return %arg1, %c0_i32 : i32, i32
  }
  func.func @transform_3(%arg0: i32, %arg1: i32) -> (i32, i32) {
    %c0_i32 = arith.constant 0 : i32
    %c0_i32_0 = arith.constant 0 : i32
    return %c0_i32, %arg1 : i32, i32
  }
  func.func @transform_4(%arg0: i32, %arg1: i32) -> (i32, i32) {
    %c0_i32 = arith.constant 0 : i32
    %c0_i32_0 = arith.constant 0 : i32
    %c0_i32_1 = arith.constant 0 : i32
    return %c0_i32, %c0_i32_0 : i32, i32
  }
  func.func @transform_5(%arg0: i32, %arg1: i32) -> (i32, i32) {
    %c0_i32 = arith.constant 0 : i32
    %c0_i32_0 = arith.constant 0 : i32
    %c0_i32_1 = arith.constant 0 : i32
    return %c0_i32, %c0_i32_0 : i32, i32
  }
  func.func @transform_6(%arg0: i32, %arg1: i32) -> (i32, i32) {
    %c0_i32 = arith.constant 0 : i32
    %c0_i32_0 = arith.constant 0 : i32
    %c0_i32_1 = arith.constant 0 : i32
    return %c0_i32, %c0_i32_0 : i32, i32
  }
  func.func @transform_7(%arg0: i32, %arg1: i32) -> (i32, i32) {
    %c0_i32 = arith.constant 0 : i32
    %c0_i32_0 = arith.constant 0 : i32
    %c0_i32_1 = arith.constant 0 : i32
    return %c0_i32, %c0_i32_0 : i32, i32
  }
  func.func @transform_8(%arg0: i32, %arg1: i32) -> (i32, i32) {
    %c0_i32 = arith.constant 0 : i32
    %c0_i32_0 = arith.constant 0 : i32
    %c0_i32_1 = arith.constant 0 : i32
    return %c0_i32, %c0_i32_0 : i32, i32
  }
  func.func @transform_9(%arg0: i32, %arg1: i32) -> (i32, i32) {
    %c0_i32 = arith.constant 0 : i32
    %c0_i32_0 = arith.constant 0 : i32
    %c0_i32_1 = arith.constant 0 : i32
    return %c0_i32, %c0_i32_0 : i32, i32
  }
  func.func @transform_10(%arg0: i32, %arg1: i32) -> (i32, i32) {
    %c0_i32 = arith.constant 0 : i32
    %c0_i32_0 = arith.constant 0 : i32
    %c0_i32_1 = arith.constant 0 : i32
    return %c0_i32, %c0_i32_0 : i32, i32
  }
  func.func @transform_11(%arg0: i32, %arg1: i32) -> (i32, i32) {
    %c0_i32 = arith.constant 0 : i32
    %c0_i32_0 = arith.constant 0 : i32
    %c0_i32_1 = arith.constant 0 : i32
    return %c0_i32, %c0_i32_0 : i32, i32
  }
  func.func @transform_12(%arg0: i32, %arg1: i32) -> (i32, i32) {
    %c0_i32 = arith.constant 0 : i32
    %c0_i32_0 = arith.constant 0 : i32
    %c0_i32_1 = arith.constant 0 : i32
    return %c0_i32, %c0_i32_0 : i32, i32
  }
  func.func @transform_13(%arg0: i32, %arg1: i32) -> (i32, i32) {
    %c0_i32 = arith.constant 0 : i32
    %c0_i32_0 = arith.constant 0 : i32
    %c0_i32_1 = arith.constant 0 : i32
    return %c0_i32, %c0_i32_0 : i32, i32
  }
  func.func @transform_14(%arg0: i32, %arg1: i32) -> (i32, i32) {
    %c0_i32 = arith.constant 0 : i32
    %c0_i32_0 = arith.constant 0 : i32
    %c0_i32_1 = arith.constant 0 : i32
    return %c0_i32, %c0_i32_0 : i32, i32
  }
  func.func @transform_15(%arg0: i32, %arg1: i32) -> (i32, i32) {
    %c0_i32 = arith.constant 0 : i32
    %c0_i32_0 = arith.constant 0 : i32
    %c0_i32_1 = arith.constant 0 : i32
    return %c0_i32, %c0_i32_0 : i32, i32
  }
  func.func @transform_16(%arg0: i32, %arg1: i32) -> (i32, i32) {
    %c0_i32 = arith.constant 0 : i32
    %c0_i32_0 = arith.constant 0 : i32
    %c0_i32_1 = arith.constant 0 : i32
    return %c0_i32, %c0_i32_0 : i32, i32
  }
  func.func @transform_17(%arg0: i32, %arg1: i32) -> (i32, i32) {
    %c0_i32 = arith.constant 0 : i32
    %c0_i32_0 = arith.constant 0 : i32
    %c0_i32_1 = arith.constant 0 : i32
    return %c0_i32, %c0_i32_0 : i32, i32
  }
  func.func @transform_18(%arg0: i32, %arg1: i32) -> (i32, i32) {
    %c0_i32 = arith.constant 0 : i32
    %c0_i32_0 = arith.constant 0 : i32
    %c0_i32_1 = arith.constant 0 : i32
    return %c0_i32, %c0_i32_0 : i32, i32
  }
  func.func @transform_19(%arg0: i32, %arg1: i32) -> (i32, i32) {
    %c0_i32 = arith.constant 0 : i32
    %c0_i32_0 = arith.constant 0 : i32
    %c0_i32_1 = arith.constant 0 : i32
    return %c0_i32, %c0_i32_0 : i32, i32
  }
}

</mosaic_0001>

<llo_original>
// kernel: tpu_custom_call.1
$region0: #{tpu_custom_call.1}
  #allocation0 [shape = 'u32[]', space=smem, size = 0x4, offset = 0x4, fixed_abs, tag = 'smem constant byte address 0x4 - core index']
  #allocation1 [shape = 'u32[144,128]{1,0:T(1,128)}', space=vmem, size = 0x12000, scoped, tag = 'internal scratch']
  #allocation2 [shape = 'f32[16,32]{1,0:T(8,128)}', space=vmem, size = 0x2000, scoped, tag = 'scratch operand']
  #allocation3 [shape = 'bf16[16,32]{1,0:T(8,128)(2,1)}', space=vmem, size = 0x1000, scoped, tag = 'scratch operand']
  #allocation4 [shape = 'f32[16,32]{1,0:T(8,128)}', space=vmem, size = 0x2000, scoped, tag = 'scratch operand']
  %s0 = inlined_call_operand.vmem [shape: f32[16,16], index: 0, kind: input, shape index: {}]
  %s1 = inlined_call_operand.vmem [shape: f32[256,5], index: 1, kind: input, shape index: {}]
  %s2 = inlined_call_operand.vmem [shape: s32[256,1], index: 2, kind: input, shape index: {}]
  %s3 = inlined_call_operand.vmem [shape: s32[1,256], index: 3, kind: input, shape index: {}]
  %s4 = inlined_call_operand.vmem [shape: s32[1,16], index: 4, kind: input, shape index: {}]
  %s5 = inlined_call_operand.vmem [shape: f32[16,1], index: 5, kind: input, shape index: {}]
  %s6 = inlined_call_operand.vmem [shape: bf16[32,1024], index: 6, kind: input, shape index: {}]
  %s7 = inlined_call_operand.vmem [shape: bf16[1024,32], index: 7, kind: input, shape index: {}]
  %s8 = inlined_call_operand.vmem [shape: f32[16,32], index: 8, kind: input, shape index: {}]
  %s9 = inlined_call_operand.vmem [shape: f32[1,32], index: 9, kind: input, shape index: {}]
  %s10 = inlined_call_operand.vmem [shape: bf16[5,128], index: 10, kind: input, shape index: {}]
  %s11 = inlined_call_operand.vmem [shape: f32[1,128], index: 11, kind: input, shape index: {}]
  %s12 = inlined_call_operand.vmem [shape: bf16[128,1024], index: 12, kind: input, shape index: {}]
  %s13 = inlined_call_operand.vmem [shape: f32[1,1024], index: 13, kind: input, shape index: {}]
  %s14 = inlined_call_operand.vmem [shape: f32[1,32], index: 14, kind: input, shape index: {}]
  %s15 = inlined_call_operand.vmem [shape: bf16[64,128], index: 15, kind: input, shape index: {}]
  %s16 = inlined_call_operand.vmem [shape: f32[1,128], index: 16, kind: input, shape index: {}]
  %s17 = inlined_call_operand.vmem [shape: bf16[96,128], index: 17, kind: input, shape index: {}]
  %s18 = inlined_call_operand.vmem [shape: f32[1,128], index: 18, kind: input, shape index: {}]
  %s19 = inlined_call_operand.hbm [shape: f32[2,128], index: 19, kind: output, shape index: {}]
  %s20 = sld [smem:[#allocation0]]
  $region125: #{tpu_custom_call.1} parent=0
    _
  %s22 = ssub.s32 1, %s20
  %s23 = scalar_select 0, %s22, %s20
  $region1: #{tpu_custom_call.1} parent=0
    #allocation5 [shape = 'u8[1024]{0}', space=vmem, size = 0x400, scoped, tag = 'output window, operand 0, single buffered']
    #allocation6 [shape = 's32[2]{0}', space=sflag, size = 0x8, scoped, tag = 'scoped memory for tpu_custom_call.1']
    %24 = vsyncpa [#allocation6], 0
    loop: start=0, step=1, limit=8
    $region2: #{tpu_custom_call.1} parent=1 // loop_pre_header
      _
    $region3: #{tpu_custom_call.1} parent=1 // loop_header
      %s26 = sphi 0, %s30
      %p27 = scmp.ge.s32.totalorder %s26, 8
      %s33 = sphi 0, %s45
      %s34 = sphi 0, %s41
      %s35 = sphi 0, %s33
      %s36 = sphi 0, %s34
      %s37 = sphi 0, %s35
      %s38 = sphi 0, %s36
      %s46 = sphi 0, %s46
      %s48 = sphi 0, %s46
      %s49 = sphi 0, %s48
      %s63 = sphi 0, %s49
      %s69 = sphi 0, %s71
      %s72 = sphi 0, %s69
      %s73 = sphi 0, %s72
      %s89 = sphi 0, %s73
      %s95 = sphi 0, %s97
      %s98 = sphi 0, %s95
      %s99 = sphi 0, %s98
      %s115 = sphi 0, %s99
      %s121 = sphi 0, %s123
      %s124 = sphi 0, %s121
      %s125 = sphi 0, %s124
      %s141 = sphi 0, %s125
      %s145 = sphi 0, %s145
      %s147 = sphi 0, %s145
      %s148 = sphi 0, %s147
      %s162 = sphi 0, %s148
      %s166 = sphi 0, %s166
      %s168 = sphi 0, %s166
      %s169 = sphi 0, %s168
      %s183 = sphi 0, %s169
      %s187 = sphi 0, %s187
      %s189 = sphi 0, %s187
      %s190 = sphi 0, %s189
      %s204 = sphi 0, %s190
      %s208 = sphi 0, %s208
      %s210 = sphi 0, %s208
      %s211 = sphi 0, %s210
      %s225 = sphi 0, %s211
      %s229 = sphi 0, %s229
      %s231 = sphi 0, %s229
      %s232 = sphi 0, %s231
      %s246 = sphi 0, %s232
      %s250 = sphi 0, %s250
      %s252 = sphi 0, %s250
      %s253 = sphi 0, %s252
      %s267 = sphi 0, %s253
      %s271 = sphi 0, %s271
      %s273 = sphi 0, %s271
      %s274 = sphi 0, %s273
      %s288 = sphi 0, %s274
      %s292 = sphi 0, %s292
      %s294 = sphi 0, %s292
      %s295 = sphi 0, %s294
      %s309 = sphi 0, %s295
      %s313 = sphi 0, %s313
      %s315 = sphi 0, %s313
      %s316 = sphi 0, %s315
      %s330 = sphi 0, %s316
      %s334 = sphi 0, %s334
      %s336 = sphi 0, %s334
      %s337 = sphi 0, %s336
      %s351 = sphi 0, %s337
      %s355 = sphi 0, %s355
      %s357 = sphi 0, %s355
      %s358 = sphi 0, %s357
      %s372 = sphi 0, %s358
      %s376 = sphi 0, %s376
      %s378 = sphi 0, %s376
      %s379 = sphi 0, %s378
      %s393 = sphi 0, %s379
      %s397 = sphi 0, %s397
      %s399 = sphi 0, %s397
      %s400 = sphi 0, %s399
      %s414 = sphi 0, %s400
      %s418 = sphi 0, %s418
      %s420 = sphi 0, %s418
      %s421 = sphi 0, %s420
      %s435 = sphi 0, %s421
      %s439 = sphi 0, %s439
      %s441 = sphi 0, %s439
      %s442 = sphi 0, %s441
      %s456 = sphi 0, %s442
      %s460 = sphi 0, %s460
      %s462 = sphi 0, %s460
      %s463 = sphi 0, %s462
      %s477 = sphi 0, %s463
    $region4: #{tpu_custom_call.1} parent=1 // loop_header_branch
      %29 = sbr.rel (%p27) target = $region8
    $region5: #{tpu_custom_call.1} parent=1 // loop_body
      %s31 = ssub.s32 %s26, 1
      %s32 = ssub.s32 %s26, 2
      %s39 = sadd.s32 1, %s34
      %p40 = scmp.ge.s32.totalorder %s39, 2
      %s41 = scalar_select %p40, 0, %s39
      %s42 = sadd.s32 1, %s33
      %s43 = scalar_select %p40, %s42, %s33
      %p44 = scmp.ge.s32.totalorder %s43, 3
      %s45 = scalar_select %p44, 0, %s43
      %s47 = sadd.s32 %s46, 1
      %p50 = scmp.eq.s32.totalorder %s26, 5
      %p51 = scmp.ne.s32.totalorder %s46, %s48
      %p52 = scmp.eq.s32.totalorder %s26, 0
      %p53 = por %p51, %p52
      %p54 = scmp.ne.s32.totalorder %s46, %s48
      %p55 = scmp.eq.s32.totalorder %s31, 5
      %p56 = por %p54, %p55
      %p57 = scmp.ne.s32.totalorder %s48, %s49
      %p58 = scmp.eq.s32.totalorder %s31, 0
      %p59 = por %p57, %p58
      %p60 = scmp.ne.s32.totalorder %s48, %s49
      %p61 = scmp.eq.s32.totalorder %s32, 5
      %p62 = por %p60, %p61
      %p64 = scmp.ne.s32.totalorder %s49, %s63
      %p65 = scmp.eq.s32.totalorder %s32, 0
      %p66 = por %p64, %p65
      %s67 = ssub.s32 %s34, %s41
      %p68 = scmp.eq.s32.totalorder %s67, 0
      %s70 = sadd.s32 %s69, 1
      %s71 = scalar_select %p68, %s69, %s70
      %p74 = pneg %p68
      %p75 = scmp.eq.s32.totalorder %s26, 5
      %p76 = por %p74, %p75
      %p77 = scmp.ne.s32.totalorder %s69, %s72
      %p78 = scmp.eq.s32.totalorder %s26, 0
      %p79 = por %p77, %p78
      %p80 = scmp.ne.s32.totalorder %s69, %s72
      %p81 = scmp.eq.s32.totalorder %s31, 5
      %p82 = por %p80, %p81
      %p83 = scmp.ne.s32.totalorder %s72, %s73
      %p84 = scmp.eq.s32.totalorder %s31, 0
      %p85 = por %p83, %p84
      %p86 = scmp.ne.s32.totalorder %s72, %s73
      %p87 = scmp.eq.s32.totalorder %s32, 5
      %p88 = por %p86, %p87
      %p90 = scmp.ne.s32.totalorder %s73, %s89
      %p91 = scmp.eq.s32.totalorder %s32, 0
      %p92 = por %p90, %p91
      %s93 = ssub.s32 %s34, %s41
      %p94 = scmp.eq.s32.totalorder %s93, 0
      %s96 = sadd.s32 %s95, 1
      %s97 = scalar_select %p94, %s95, %s96
      %p100 = pneg %p94
      %p101 = scmp.eq.s32.totalorder %s26, 5
      %p102 = por %p100, %p101
      %p103 = scmp.ne.s32.totalorder %s95, %s98
      %p104 = scmp.eq.s32.totalorder %s26, 0
      %p105 = por %p103, %p104
      %p106 = scmp.ne.s32.totalorder %s95, %s98
      %p107 = scmp.eq.s32.totalorder %s31, 5
      %p108 = por %p106, %p107
      %p109 = scmp.ne.s32.totalorder %s98, %s99
      %p110 = scmp.eq.s32.totalorder %s31, 0
      %p111 = por %p109, %p110
      %p112 = scmp.ne.s32.totalorder %s98, %s99
      %p113 = scmp.eq.s32.totalorder %s32, 5
      %p114 = por %p112, %p113
      %p116 = scmp.ne.s32.totalorder %s99, %s115
      %p117 = scmp.eq.s32.totalorder %s32, 0
      %p118 = por %p116, %p117
      %s119 = ssub.s32 %s34, %s41
      %p120 = scmp.eq.s32.totalorder %s119, 0
      %s122 = sadd.s32 %s121, 1
      %s123 = scalar_select %p120, %s121, %s122
      %p126 = pneg %p120
      %p127 = scmp.eq.s32.totalorder %s26, 5
      %p128 = por %p126, %p127
      %p129 = scmp.ne.s32.totalorder %s121, %s124
      %p130 = scmp.eq.s32.totalorder %s26, 0
      %p131 = por %p129, %p130
      %p132 = scmp.ne.s32.totalorder %s121, %s124
      %p133 = scmp.eq.s32.totalorder %s31, 5
      %p134 = por %p132, %p133
      %p135 = scmp.ne.s32.totalorder %s124, %s125
      %p136 = scmp.eq.s32.totalorder %s31, 0
      %p137 = por %p135, %p136
      %p138 = scmp.ne.s32.totalorder %s124, %s125
      %p139 = scmp.eq.s32.totalorder %s32, 5
      %p140 = por %p138, %p139
      %p142 = scmp.ne.s32.totalorder %s125, %s141
      %p143 = scmp.eq.s32.totalorder %s32, 0
      %p144 = por %p142, %p143
      %s146 = sadd.s32 %s145, 1
      %p149 = scmp.eq.s32.totalorder %s26, 5
      %p150 = scmp.ne.s32.totalorder %s145, %s147
      %p151 = scmp.eq.s32.totalorder %s26, 0
      %p152 = por %p150, %p151
      %p153 = scmp.ne.s32.totalorder %s145, %s147
      %p154 = scmp.eq.s32.totalorder %s31, 5
      %p155 = por %p153, %p154
      %p156 = scmp.ne.s32.totalorder %s147, %s148
      %p157 = scmp.eq.s32.totalorder %s31, 0
      %p158 = por %p156, %p157
      %p159 = scmp.ne.s32.totalorder %s147, %s148
      %p160 = scmp.eq.s32.totalorder %s32, 5
      %p161 = por %p159, %p160
      %p163 = scmp.ne.s32.totalorder %s148, %s162
      %p164 = scmp.eq.s32.totalorder %s32, 0
      %p165 = por %p163, %p164
      %s167 = sadd.s32 %s166, 1
      %p170 = scmp.eq.s32.totalorder %s26, 5
      %p171 = scmp.ne.s32.totalorder %s166, %s168
      %p172 = scmp.eq.s32.totalorder %s26, 0
      %p173 = por %p171, %p172
      %p174 = scmp.ne.s32.totalorder %s166, %s168
      %p175 = scmp.eq.s32.totalorder %s31, 5
      %p176 = por %p174, %p175
      %p177 = scmp.ne.s32.totalorder %s168, %s169
      %p178 = scmp.eq.s32.totalorder %s31, 0
      %p179 = por %p177, %p178
      %p180 = scmp.ne.s32.totalorder %s168, %s169
      %p181 = scmp.eq.s32.totalorder %s32, 5
      %p182 = por %p180, %p181
      %p184 = scmp.ne.s32.totalorder %s169, %s183
      %p185 = scmp.eq.s32.totalorder %s32, 0
      %p186 = por %p184, %p185
      %s188 = sadd.s32 %s187, 1
      %p191 = scmp.eq.s32.totalorder %s26, 5
      %p192 = scmp.ne.s32.totalorder %s187, %s189
      %p193 = scmp.eq.s32.totalorder %s26, 0
      %p194 = por %p192, %p193
      %p195 = scmp.ne.s32.totalorder %s187, %s189
      %p196 = scmp.eq.s32.totalorder %s31, 5
      %p197 = por %p195, %p196
      %p198 = scmp.ne.s32.totalorder %s189, %s190
      %p199 = scmp.eq.s32.totalorder %s31, 0
      %p200 = por %p198, %p199
      %p201 = scmp.ne.s32.totalorder %s189, %s190
      %p202 = scmp.eq.s32.totalorder %s32, 5
      %p203 = por %p201, %p202
      %p205 = scmp.ne.s32.totalorder %s190, %s204
      %p206 = scmp.eq.s32.totalorder %s32, 0
      %p207 = por %p205, %p206
      %s209 = sadd.s32 %s208, 1
      %p212 = scmp.eq.s32.totalorder %s26, 5
      %p213 = scmp.ne.s32.totalorder %s208, %s210
      %p214 = scmp.eq.s32.totalorder %s26, 0
      %p215 = por %p213, %p214
      %p216 = scmp.ne.s32.totalorder %s208, %s210
      %p217 = scmp.eq.s32.totalorder %s31, 5
      %p218 = por %p216, %p217
      %p219 = scmp.ne.s32.totalorder %s210, %s211
      %p220 = scmp.eq.s32.totalorder %s31, 0
      %p221 = por %p219, %p220
      %p222 = scmp.ne.s32.totalorder %s210, %s211
      %p223 = scmp.eq.s32.totalorder %s32, 5
      %p224 = por %p222, %p223
      %p226 = scmp.ne.s32.totalorder %s211, %s225
      %p227 = scmp.eq.s32.totalorder %s32, 0
      %p228 = por %p226, %p227
      %s230 = sadd.s32 %s229, 1
      %p233 = scmp.eq.s32.totalorder %s26, 5
      %p234 = scmp.ne.s32.totalorder %s229, %s231
      %p235 = scmp.eq.s32.totalorder %s26, 0
      %p236 = por %p234, %p235
      %p237 = scmp.ne.s32.totalorder %s229, %s231
      %p238 = scmp.eq.s32.totalorder %s31, 5
      %p239 = por %p237, %p238
      %p240 = scmp.ne.s32.totalorder %s231, %s232
      %p241 = scmp.eq.s32.totalorder %s31, 0
      %p242 = por %p240, %p241
      %p243 = scmp.ne.s32.totalorder %s231, %s232
      %p244 = scmp.eq.s32.totalorder %s32, 5
      %p245 = por %p243, %p244
      %p247 = scmp.ne.s32.totalorder %s232, %s246
      %p248 = scmp.eq.s32.totalorder %s32, 0
      %p249 = por %p247, %p248
      %s251 = sadd.s32 %s250, 1
      %p254 = scmp.eq.s32.totalorder %s26, 5
      %p255 = scmp.ne.s32.totalorder %s250, %s252
      %p256 = scmp.eq.s32.totalorder %s26, 0
      %p257 = por %p255, %p256
      %p258 = scmp.ne.s32.totalorder %s250, %s252
      %p259 = scmp.eq.s32.totalorder %s31, 5
      %p260 = por %p258, %p259
      %p261 = scmp.ne.s32.totalorder %s252, %s253
      %p262 = scmp.eq.s32.totalorder %s31, 0
      %p263 = por %p261, %p262
      %p264 = scmp.ne.s32.totalorder %s252, %s253
      %p265 = scmp.eq.s32.totalorder %s32, 5
      %p266 = por %p264, %p265
      %p268 = scmp.ne.s32.totalorder %s253, %s267
      %p269 = scmp.eq.s32.totalorder %s32, 0
      %p270 = por %p268, %p269
      %s272 = sadd.s32 %s271, 1
      %p275 = scmp.eq.s32.totalorder %s26, 5
      %p276 = scmp.ne.s32.totalorder %s271, %s273
      %p277 = scmp.eq.s32.totalorder %s26, 0
      %p278 = por %p276, %p277
      %p279 = scmp.ne.s32.totalorder %s271, %s273
      %p280 = scmp.eq.s32.totalorder %s31, 5
      %p281 = por %p279, %p280
      %p282 = scmp.ne.s32.totalorder %s273, %s274
      %p283 = scmp.eq.s32.totalorder %s31, 0
      %p284 = por %p282, %p283
      %p285 = scmp.ne.s32.totalorder %s273, %s274
      %p286 = scmp.eq.s32.totalorder %s32, 5
      %p287 = por %p285, %p286
      %p289 = scmp.ne.s32.totalorder %s274, %s288
      %p290 = scmp.eq.s32.totalorder %s32, 0
      %p291 = por %p289, %p290
      %s293 = sadd.s32 %s292, 1
      %p296 = scmp.eq.s32.totalorder %s26, 5
      %p297 = scmp.ne.s32.totalorder %s292, %s294
      %p298 = scmp.eq.s32.totalorder %s26, 0
      %p299 = por %p297, %p298
      %p300 = scmp.ne.s32.totalorder %s292, %s294
      %p301 = scmp.eq.s32.totalorder %s31, 5
      %p302 = por %p300, %p301
      %p303 = scmp.ne.s32.totalorder %s294, %s295
      %p304 = scmp.eq.s32.totalorder %s31, 0
      %p305 = por %p303, %p304
      %p306 = scmp.ne.s32.totalorder %s294, %s295
      %p307 = scmp.eq.s32.totalorder %s32, 5
      %p308 = por %p306, %p307
      %p310 = scmp.ne.s32.totalorder %s295, %s309
      %p311 = scmp.eq.s32.totalorder %s32, 0
      %p312 = por %p310, %p311
      %s314 = sadd.s32 %s313, 1
      %p317 = scmp.eq.s32.totalorder %s26, 5
      %p318 = scmp.ne.s32.totalorder %s313, %s315
      %p319 = scmp.eq.s32.totalorder %s26, 0
      %p320 = por %p318, %p319
      %p321 = scmp.ne.s32.totalorder %s313, %s315
      %p322 = scmp.eq.s32.totalorder %s31, 5
      %p323 = por %p321, %p322
      %p324 = scmp.ne.s32.totalorder %s315, %s316
      %p325 = scmp.eq.s32.totalorder %s31, 0
      %p326 = por %p324, %p325
      %p327 = scmp.ne.s32.totalorder %s315, %s316
      %p328 = scmp.eq.s32.totalorder %s32, 5
      %p329 = por %p327, %p328
      %p331 = scmp.ne.s32.totalorder %s316, %s330
      %p332 = scmp.eq.s32.totalorder %s32, 0
      %p333 = por %p331, %p332
      %s335 = sadd.s32 %s334, 1
      %p338 = scmp.eq.s32.totalorder %s26, 5
      %p339 = scmp.ne.s32.totalorder %s334, %s336
      %p340 = scmp.eq.s32.totalorder %s26, 0
      %p341 = por %p339, %p340
      %p342 = scmp.ne.s32.totalorder %s334, %s336
      %p343 = scmp.eq.s32.totalorder %s31, 5
      %p344 = por %p342, %p343
      %p345 = scmp.ne.s32.totalorder %s336, %s337
      %p346 = scmp.eq.s32.totalorder %s31, 0
      %p347 = por %p345, %p346
      %p348 = scmp.ne.s32.totalorder %s336, %s337
      %p349 = scmp.eq.s32.totalorder %s32, 5
      %p350 = por %p348, %p349
      %p352 = scmp.ne.s32.totalorder %s337, %s351
      %p353 = scmp.eq.s32.totalorder %s32, 0
      %p354 = por %p352, %p353
      %s356 = sadd.s32 %s355, 1
      %p359 = scmp.eq.s32.totalorder %s26, 5
      %p360 = scmp.ne.s32.totalorder %s355, %s357
      %p361 = scmp.eq.s32.totalorder %s26, 0
      %p362 = por %p360, %p361
      %p363 = scmp.ne.s32.totalorder %s355, %s357
      %p364 = scmp.eq.s32.totalorder %s31, 5
      %p365 = por %p363, %p364
      %p366 = scmp.ne.s32.totalorder %s357, %s358
      %p367 = scmp.eq.s32.totalorder %s31, 0
      %p368 = por %p366, %p367
      %p369 = scmp.ne.s32.totalorder %s357, %s358
      %p370 = scmp.eq.s32.totalorder %s32, 5
      %p371 = por %p369, %p370
      %p373 = scmp.ne.s32.totalorder %s358, %s372
      %p374 = scmp.eq.s32.totalorder %s32, 0
      %p375 = por %p373, %p374
      %s377 = sadd.s32 %s376, 1
      %p380 = scmp.eq.s32.totalorder %s26, 5
      %p381 = scmp.ne.s32.totalorder %s376, %s378
      %p382 = scmp.eq.s32.totalorder %s26, 0
      %p383 = por %p381, %p382
      %p384 = scmp.ne.s32.totalorder %s376, %s378
      %p385 = scmp.eq.s32.totalorder %s31, 5
      %p386 = por %p384, %p385
      %p387 = scmp.ne.s32.totalorder %s378, %s379
      %p388 = scmp.eq.s32.totalorder %s31, 0
      %p389 = por %p387, %p388
      %p390 = scmp.ne.s32.totalorder %s378, %s379
      %p391 = scmp.eq.s32.totalorder %s32, 5
      %p392 = por %p390, %p391
      %p394 = scmp.ne.s32.totalorder %s379, %s393
      %p395 = scmp.eq.s32.totalorder %s32, 0
      %p396 = por %p394, %p395
      %s398 = sadd.s32 %s397, 1
      %p401 = scmp.eq.s32.totalorder %s26, 5
      %p402 = scmp.ne.s32.totalorder %s397, %s399
      %p403 = scmp.eq.s32.totalorder %s26, 0
      %p404 = por %p402, %p403
      %p405 = scmp.ne.s32.totalorder %s397, %s399
      %p406 = scmp.eq.s32.totalorder %s31, 5
      %p407 = por %p405, %p406
      %p408 = scmp.ne.s32.totalorder %s399, %s400
      %p409 = scmp.eq.s32.totalorder %s31, 0
      %p410 = por %p408, %p409
      %p411 = scmp.ne.s32.totalorder %s399, %s400
      %p412 = scmp.eq.s32.totalorder %s32, 5
      %p413 = por %p411, %p412
      %p415 = scmp.ne.s32.totalorder %s400, %s414
      %p416 = scmp.eq.s32.totalorder %s32, 0
      %p417 = por %p415, %p416
      %s419 = sadd.s32 %s418, 1
      %p422 = scmp.eq.s32.totalorder %s26, 5
      %p423 = scmp.ne.s32.totalorder %s418, %s420
      %p424 = scmp.eq.s32.totalorder %s26, 0
      %p425 = por %p423, %p424
      %p426 = scmp.ne.s32.totalorder %s418, %s420
      %p427 = scmp.eq.s32.totalorder %s31, 5
      %p428 = por %p426, %p427
      %p429 = scmp.ne.s32.totalorder %s420, %s421
      %p430 = scmp.eq.s32.totalorder %s31, 0
      %p431 = por %p429, %p430
      %p432 = scmp.ne.s32.totalorder %s420, %s421
      %p433 = scmp.eq.s32.totalorder %s32, 5
      %p434 = por %p432, %p433
      %p436 = scmp.ne.s32.totalorder %s421, %s435
      %p437 = scmp.eq.s32.totalorder %s32, 0
      %p438 = por %p436, %p437
      %s440 = sadd.s32 %s439, 1
      %p443 = scmp.eq.s32.totalorder %s26, 5
      %p444 = scmp.ne.s32.totalorder %s439, %s441
      %p445 = scmp.eq.s32.totalorder %s26, 0
      %p446 = por %p444, %p445
      %p447 = scmp.ne.s32.totalorder %s439, %s441
      %p448 = scmp.eq.s32.totalorder %s31, 5
      %p449 = por %p447, %p448
      %p450 = scmp.ne.s32.totalorder %s441, %s442
      %p451 = scmp.eq.s32.totalorder %s31, 0
      %p452 = por %p450, %p451
      %p453 = scmp.ne.s32.totalorder %s441, %s442
      %p454 = scmp.eq.s32.totalorder %s32, 5
      %p455 = por %p453, %p454
      %p457 = scmp.ne.s32.totalorder %s442, %s456
      %p458 = scmp.eq.s32.totalorder %s32, 0
      %p459 = por %p457, %p458
      %s461 = sadd.s32 %s460, 1
      %p464 = scmp.eq.s32.totalorder %s26, 5
      %p465 = scmp.ne.s32.totalorder %s460, %s462
      %p466 = scmp.eq.s32.totalorder %s26, 0
      %p467 = por %p465, %p466
      %p468 = scmp.ne.s32.totalorder %s460, %s462
      %p469 = scmp.eq.s32.totalorder %s31, 5
      %p470 = por %p468, %p469
      %p471 = scmp.ne.s32.totalorder %s462, %s463
      %p472 = scmp.eq.s32.totalorder %s31, 0
      %p473 = por %p471, %p472
      %p474 = scmp.ne.s32.totalorder %s462, %s463
      %p475 = scmp.eq.s32.totalorder %s32, 5
      %p476 = por %p474, %p475
      %p478 = scmp.ne.s32.totalorder %s463, %s477
      %p479 = scmp.eq.s32.totalorder %s32, 0
      %p480 = por %p478, %p479
      %p481 = scmp.le.s32.totalorder 1, %s26
      %p482 = scmp.lt.s32.totalorder %s26, 7
      %p483 = pnand %p481, %p482
      %p484 = pneg %p483
      // Predicated region
      $region9: #{tpu_custom_call.1} parent=5 // pred_check
        _
      $region10: #{tpu_custom_call.1} parent=5 // pred_check_branch
        %486 = sbr.rel (%p483) target = $region12
      $region11: #{tpu_custom_call.1} parent=5 // pred_region
        %s487 = ssub.s32 %s26, 1
        // Predicated region
        $region13: #{tpu_custom_call.1} parent=11 // pred_check
          %p488 = pneg %p59
        $region14: #{tpu_custom_call.1} parent=11 // pred_check_branch
          %490 = sbr.rel (%p488) target = $region16
        $region15: #{tpu_custom_call.1} parent=11 // pred_region
          _
        $region16: #{tpu_custom_call.1} parent=11 // pred_fallthru
          _
        // Predicated region
        $region17: #{tpu_custom_call.1} parent=11 // pred_check
          %p491 = pneg %p158
        $region18: #{tpu_custom_call.1} parent=11 // pred_check_branch
          %493 = sbr.rel (%p491) target = $region20
        $region19: #{tpu_custom_call.1} parent=11 // pred_region
          _
        $region20: #{tpu_custom_call.1} parent=11 // pred_fallthru
          _
        // Predicated region
        $region21: #{tpu_custom_call.1} parent=11 // pred_check
          %p494 = pneg %p179
        $region22: #{tpu_custom_call.1} parent=11 // pred_check_branch
          %496 = sbr.rel (%p494) target = $region24
        $region23: #{tpu_custom_call.1} parent=11 // pred_region
          _
        $region24: #{tpu_custom_call.1} parent=11 // pred_fallthru
          _
        // Predicated region
        $region25: #{tpu_custom_call.1} parent=11 // pred_check
          %p497 = pneg %p200
        $region26: #{tpu_custom_call.1} parent=11 // pred_check_branch
          %499 = sbr.rel (%p497) target = $region28
        $region27: #{tpu_custom_call.1} parent=11 // pred_region
          _
        $region28: #{tpu_custom_call.1} parent=11 // pred_fallthru
          _
        // Predicated region
        $region29: #{tpu_custom_call.1} parent=11 // pred_check
          %p500 = pneg %p221
        $region30: #{tpu_custom_call.1} parent=11 // pred_check_branch
          %502 = sbr.rel (%p500) target = $region32
        $region31: #{tpu_custom_call.1} parent=11 // pred_region
          _
        $region32: #{tpu_custom_call.1} parent=11 // pred_fallthru
          _
        // Predicated region
        $region33: #{tpu_custom_call.1} parent=11 // pred_check
          %p503 = pneg %p242
        $region34: #{tpu_custom_call.1} parent=11 // pred_check_branch
          %505 = sbr.rel (%p503) target = $region36
        $region35: #{tpu_custom_call.1} parent=11 // pred_region
          _
        $region36: #{tpu_custom_call.1} parent=11 // pred_fallthru
          _
        // Predicated region
        $region37: #{tpu_custom_call.1} parent=11 // pred_check
          %p506 = pneg %p263
        $region38: #{tpu_custom_call.1} parent=11 // pred_check_branch
          %508 = sbr.rel (%p506) target = $region40
        $region39: #{tpu_custom_call.1} parent=11 // pred_region
          _
        $region40: #{tpu_custom_call.1} parent=11 // pred_fallthru
          _
        // Predicated region
        $region41: #{tpu_custom_call.1} parent=11 // pred_check
          %p509 = pneg %p284
        $region42: #{tpu_custom_call.1} parent=11 // pred_check_branch
          %511 = sbr.rel (%p509) target = $region44
        $region43: #{tpu_custom_call.1} parent=11 // pred_region
          _
        $region44: #{tpu_custom_call.1} parent=11 // pred_fallthru
          _
        // Predicated region
        $region45: #{tpu_custom_call.1} parent=11 // pred_check
          %p512 = pneg %p305
        $region46: #{tpu_custom_call.1} parent=11 // pred_check_branch
          %514 = sbr.rel (%p512) target = $region48
        $region47: #{tpu_custom_call.1} parent=11 // pred_region
          _
        $region48: #{tpu_custom_call.1} parent=11 // pred_fallthru
          _
        // Predicated region
        $region49: #{tpu_custom_call.1} parent=11 // pred_check
          %p515 = pneg %p326
        $region50: #{tpu_custom_call.1} parent=11 // pred_check_branch
          %517 = sbr.rel (%p515) target = $region52
        $region51: #{tpu_custom_call.1} parent=11 // pred_region
          _
        $region52: #{tpu_custom_call.1} parent=11 // pred_fallthru
          _
        // Predicated region
        $region53: #{tpu_custom_call.1} parent=11 // pred_check
          %p518 = pneg %p347
        $region54: #{tpu_custom_call.1} parent=11 // pred_check_branch
          %520 = sbr.rel (%p518) target = $region56
        $region55: #{tpu_custom_call.1} parent=11 // pred_region
          _
        $region56: #{tpu_custom_call.1} parent=11 // pred_fallthru
          _
        // Predicated region
        $region57: #{tpu_custom_call.1} parent=11 // pred_check
          %p521 = pneg %p368
        $region58: #{tpu_custom_call.1} parent=11 // pred_check_branch
          %523 = sbr.rel (%p521) target = $region60
        $region59: #{tpu_custom_call.1} parent=11 // pred_region
          _
        $region60: #{tpu_custom_call.1} parent=11 // pred_fallthru
          _
        // Predicated region
        $region61: #{tpu_custom_call.1} parent=11 // pred_check
          %p524 = pneg %p389
        $region62: #{tpu_custom_call.1} parent=11 // pred_check_branch
          %526 = sbr.rel (%p524) target = $region64
        $region63: #{tpu_custom_call.1} parent=11 // pred_region
          _
        $region64: #{tpu_custom_call.1} parent=11 // pred_fallthru
          _
        // Predicated region
        $region65: #{tpu_custom_call.1} parent=11 // pred_check
          %p527 = pneg %p410
        $region66: #{tpu_custom_call.1} parent=11 // pred_check_branch
          %529 = sbr.rel (%p527) target = $region68
        $region67: #{tpu_custom_call.1} parent=11 // pred_region
          _
        $region68: #{tpu_custom_call.1} parent=11 // pred_fallthru
          _
        // Predicated region
        $region69: #{tpu_custom_call.1} parent=11 // pred_check
          %p530 = pneg %p431
        $region70: #{tpu_custom_call.1} parent=11 // pred_check_branch
          %532 = sbr.rel (%p530) target = $region72
        $region71: #{tpu_custom_call.1} parent=11 // pred_region
          _
        $region72: #{tpu_custom_call.1} parent=11 // pred_fallthru
          _
        // Predicated region
        $region73: #{tpu_custom_call.1} parent=11 // pred_check
          %p533 = pneg %p452
        $region74: #{tpu_custom_call.1} parent=11 // pred_check_branch
          %535 = sbr.rel (%p533) target = $region76
        $region75: #{tpu_custom_call.1} parent=11 // pred_region
          _
        $region76: #{tpu_custom_call.1} parent=11 // pred_fallthru
          _
      $region12: #{tpu_custom_call.1} parent=5 // pred_fallthru
        _
      %p536 = scmp.lt.s32.totalorder %s26, 6
      // Predicated region
      $region77: #{tpu_custom_call.1} parent=5 // pred_check
        %p537 = pneg %p536
      $region78: #{tpu_custom_call.1} parent=5 // pred_check_branch
        %539 = sbr.rel (%p537) target = $region80
      $region79: #{tpu_custom_call.1} parent=5 // pred_region
        // Predicated region
        $region81: #{tpu_custom_call.1} parent=79 // pred_check
          %p540 = pneg %p79
        $region82: #{tpu_custom_call.1} parent=79 // pred_check_branch
          %542 = sbr.rel (%p540) target = $region84
        $region83: #{tpu_custom_call.1} parent=79 // pred_region
          %s543 = smul.u32 16, %s34
          %p544 = scmp.lt.s32.totalorder %s543, 31
          %s545 = scalar_select %p544, %s543, 31
          %s546 = smul.addr %s545, 8
          %s547 = scalar_lea.vmem %s1, %s546
          %s548 = smul.u32 16, %s34
        $region84: #{tpu_custom_call.1} parent=79 // pred_fallthru
          _
        // Predicated region
        $region85: #{tpu_custom_call.1} parent=79 // pred_check
          %p549 = pneg %p105
        $region86: #{tpu_custom_call.1} parent=79 // pred_check_branch
          %551 = sbr.rel (%p549) target = $region88
        $region87: #{tpu_custom_call.1} parent=79 // pred_region
          %s552 = smul.u32 16, %s34
          %p553 = scmp.lt.s32.totalorder %s552, 31
          %s554 = scalar_select %p553, %s552, 31
          %s555 = smul.addr %s554, 8
          %s556 = scalar_lea.vmem %s2, %s555
          %s557 = smul.u32 16, %s34
        $region88: #{tpu_custom_call.1} parent=79 // pred_fallthru
          _
        // Predicated region
        $region89: #{tpu_custom_call.1} parent=79 // pred_check
          %p558 = pneg %p131
        $region90: #{tpu_custom_call.1} parent=79 // pred_check_branch
          %560 = sbr.rel (%p558) target = $region92
        $region91: #{tpu_custom_call.1} parent=79 // pred_region
          %p561 = scmp.lt.s32.totalorder %s34, 1
          %s562 = scalar_select %p561, %s34, 1
          %s563 = scalar_lea.vmem %s3, %s562
        $region92: #{tpu_custom_call.1} parent=79 // pred_fallthru
          _
      $region80: #{tpu_custom_call.1} parent=5 // pred_fallthru
        _
      %p564 = scmp.le.s32.totalorder 1, %s26
      %p565 = scmp.lt.s32.totalorder %s26, 7
      %p566 = pnand %p564, %p565
      %p567 = pneg %p566
      // Predicated region
      $region93: #{tpu_custom_call.1} parent=5 // pred_check
        _
      $region94: #{tpu_custom_call.1} parent=5 // pred_check_branch
        %569 = sbr.rel (%p566) target = $region96
      $region95: #{tpu_custom_call.1} parent=5 // pred_region
        %s570 = ssub.s32 %s26, 1
        %p571 = pneg %p59
        %p572 = pneg %p56
        %s573 = smul.u32 16, %s36
        %p574 = scmp.lt.s32.totalorder %s573, 31
        %s575 = scalar_select %p574, %s573, 31
        %s576 = smul.addr %s575, 8
        %s577 = scalar_lea.vmem %s1, %s576
        %p578 = pneg %p85
        %p579 = pneg %p82
        %s580 = smul.u32 16, %s36
        %p581 = scmp.lt.s32.totalorder %s580, 31
        %s582 = scalar_select %p581, %s580, 31
        %s583 = smul.addr %s582, 8
        %s584 = scalar_lea.vmem %s2, %s583
        %p585 = pneg %p111
        %p586 = pneg %p108
        %p587 = scmp.lt.s32.totalorder %s36, 1
        %s588 = scalar_select %p587, %s36, 1
        %s589 = scalar_lea.vmem %s3, %s588
        %p590 = pneg %p137
        %p591 = pneg %p134
        %p592 = pneg %p158
        %p593 = pneg %p155
        %p594 = pneg %p179
        %p595 = pneg %p176
        %p596 = pneg %p200
        %p597 = pneg %p197
        %p598 = pneg %p221
        %p599 = pneg %p218
        %p600 = pneg %p242
        %p601 = pneg %p239
        %p602 = pneg %p263
        %p603 = pneg %p260
        %p604 = pneg %p284
        %p605 = pneg %p281
        %p606 = pneg %p305
        %p607 = pneg %p302
        %p608 = pneg %p326
        %p609 = pneg %p323
        %p610 = pneg %p347
        %p611 = pneg %p344
        %p612 = pneg %p368
        %p613 = pneg %p365
        %p614 = pneg %p389
        %p615 = pneg %p386
        %p616 = pneg %p410
        %p617 = pneg %p407
        %p618 = pneg %p431
        %p619 = pneg %p428
        %p620 = pneg %p452
        %p621 = pneg %p449
        %p622 = pneg %p473
        %p623 = pneg %p470
        %s624 = smul.u32 16, %s36
        %p625 = scmp.lt.s32.totalorder %s624, 31
        %s626 = scalar_select %p625, %s624, 31
        %s627 = smul.addr %s626, 8
        %s628 = scalar_lea.vmem %s1, %s627
        %s629 = smul.u32 16, %s36
        %s630 = smul.u32 16, %s36
        %p631 = scmp.lt.s32.totalorder %s630, 31
        %s632 = scalar_select %p631, %s630, 31
        %s633 = smul.addr %s632, 8
        %s634 = scalar_lea.vmem %s2, %s633
        %s635 = smul.u32 16, %s36
        %p636 = scmp.lt.s32.totalorder %s36, 1
        %s637 = scalar_select %p636, %s36, 1
        %s638 = scalar_lea.vmem %s3, %s637
        %p640 = scmp.eq.s32.totalorder %s35, 0
        %p641 = scmp.eq.s32.totalorder %s36, 0
        %p642 = pnand %p640, %p641
        %p643 = pneg %p642
        // Predicated region
        $region97: #{tpu_custom_call.1} parent=95 // pred_check
          _
        $region98: #{tpu_custom_call.1} parent=95 // pred_check_branch
          %645 = sbr.rel (%p642) target = $region100
        $region99: #{tpu_custom_call.1} parent=95 // pred_region
          %v646 = vld [vmem:[%s0] sm:$0xff]
          %v647 = vld [vmem:[%s0 + $0x8] sm:$0xff]
          %v648 = vld [vmem:[%s8] sm:$0xff]
          %v649 = vld [vmem:[%s8 + $0x8] sm:$0xff]
          %v650 = vld [vmem:[%s9] sm:$0x1]
          %v652 = vlaneseq
          %v653 = vshrl.u32 %v652, 7
          %v654 = vsub.s32 0, %v653
          %v655 = vrot.slane %v650, %v654
          %vm657 = vcmask 130048
          %v659 = vsel %vm657, %v646, 0
          %v662 = vsel %vm657, %v647, 0
          %664 = vmatprep.subr.mxu0 0.0
          %665 = vmatpush1.msra.mxu0 0.0
          %666 = vmatprep.subr.mxu0 0.0
          %667 = vmatpush1.msra.mxu0 0.0
          %668 = vmatprep.subr.mxu0 0.0
          %669 = vmatpush1.msra.mxu0 0.0
          %670 = vmatprep.subr.mxu0 0.0
          %671 = vmatpush1.msra.mxu0 0.0
          %672 = vmatprep.subr.mxu0 0.0
          %673 = vmatpush1.msra.mxu0 0.0
          %674 = vmatprep.subr.mxu0 0.0
          %675 = vmatpush1.msra.mxu0 0.0
          %676 = vmatprep.subr.mxu0 0.0
          %677 = vmatpush1.msra.mxu0 0.0
          %678 = vmatprep.subr.mxu0 0.0
          %679 = vmatpush1.msra.mxu0 0.0
          %680 = vmatprep.subr.mxu0 0.0
          %681 = vmatpush1.msra.mxu0 0.0
          %682 = vmatprep.subr.mxu0 0.0
          %683 = vmatpush1.msra.mxu0 0.0
          %684 = vmatprep.subr.mxu0 0.0
          %685 = vmatpush1.msra.mxu0 0.0
          %686 = vmatprep.subr.mxu0 0.0
          %687 = vmatpush1.msra.mxu0 0.0
          %688 = vmatprep.subr.mxu0 0.0
          %689 = vmatpush1.msra.mxu0 0.0
          %690 = vmatprep.subr.mxu0 0.0
          %691 = vmatpush1.msra.mxu0 0.0
          %692 = vmatprep.subr.mxu0 0.0
          %693 = vmatpush1.msra.mxu0 %v649
          %694 = vmatprep.subr.mxu0 0.0
          %695 = vmatpush1.msra.mxu0 %v648
          %696 = vmatprep.subr.mxu0 0.0
          %697 = vmatpush2.msra.mxu0 0.0
          %698 = vmatprep.subr.mxu0 0.0
          %699 = vmatpush2.msra.mxu0 0.0
          %700 = vmatprep.subr.mxu0 0.0
          %701 = vmatpush2.msra.mxu0 0.0
          %702 = vmatprep.subr.mxu0 0.0
          %703 = vmatpush2.msra.mxu0 0.0
          %704 = vmatprep.subr.mxu0 0.0
          %705 = vmatpush2.msra.mxu0 0.0
          %706 = vmatprep.subr.mxu0 0.0
          %707 = vmatpush2.msra.mxu0 0.0
          %708 = vmatprep.subr.mxu0 0.0
          %709 = vmatpush2.msra.mxu0 0.0
          %710 = vmatprep.subr.mxu0 0.0
          %711 = vmatpush2.msra.mxu0 0.0
          %712 = vmatprep.subr.mxu0 0.0
          %713 = vmatpush2.msra.mxu0 0.0
          %714 = vmatprep.subr.mxu0 0.0
          %715 = vmatpush2.msra.mxu0 0.0
          %716 = vmatprep.subr.mxu0 0.0
          %717 = vmatpush2.msra.mxu0 0.0
          %718 = vmatprep.subr.mxu0 0.0
          %719 = vmatpush2.msra.mxu0 0.0
          %720 = vmatprep.subr.mxu0 0.0
          %721 = vmatpush2.msra.mxu0 0.0
          %722 = vmatprep.subr.mxu0 0.0
          %723 = vmatpush2.msra.mxu0 0.0
          %724 = vmatprep.subr.mxu0 0.0
          %725 = vmatpush2.msra.mxu0 0.0
          %726 = vmatprep.subr.mxu0 0.0
          %727 = vmatpush2.msra.mxu0 0.0
          %728 = vmatprep.mubr.f32.mxu0 0.0
          %729 = vmatmul.mubr.f32.gmra.mxu0 %v659
          %v730 = vpop.f32.mrf.mxu0
          %v731 = vadd.f32 %v655, %v730
          %v732 = vpop.f32.mrf.mxu0
          %733 = vmatprep.mubr.f32.mxu0 0.0
          %734 = vmatmul.mubr.f32.gmra.mxu0 %v662
          %v735 = vpop.f32.mrf.mxu0
          %v736 = vadd.f32 %v655, %v735
          %v737 = vpop.f32.mrf.mxu0
          %738 = vdwg.mxu0
          %v739 = vmax.f32 %v731, 0.0
          %v740 = vmax.f32 %v736, 0.0
          %vm741 = vcmask 261120
          %742 = vst.msk [vmem:[#allocation2] sm:$0xff] %vm741, %v739
          %743 = vst.msk [vmem:[#allocation2 + $0x8] sm:$0xff] %vm741, %v740
          %v744 = vpack.c.bf16 %v740, %v739
          %v746 = vunpack.c.l.b16 %v744
          %v747 = vunpack.c.h.b16 %v744
          %v748 = vpack.c.b16 %v746, %v746
          %v749 = vpack.c.b16 %v747, %v747
          %vm752 = vcmask 257024
          %753 = vst.msk [vmem:[#allocation3] sm:$0xf] %vm752, %v748
          %754 = vst.msk [vmem:[#allocation3 + $0x4] sm:$0xf] %vm752, %v749
        $region100: #{tpu_custom_call.1} parent=95 // pred_fallthru
          _
        // Predicated region
        $region101: #{tpu_custom_call.1} parent=95 // pred_check
          %p755 = pneg %p641
        $region102: #{tpu_custom_call.1} parent=95 // pred_check_branch
          %757 = sbr.rel (%p755) target = $region104
        $region103: #{tpu_custom_call.1} parent=95 // pred_region
          %vm758 = vcmask 261120
          %759 = vst.msk [vmem:[#allocation4] sm:$0xff] %vm758, 0.0
          %760 = vst.msk [vmem:[#allocation4 + $0x8] sm:$0xff] %vm758, 0.0
        $region104: #{tpu_custom_call.1} parent=95 // pred_fallthru
          _
        %v761 = vld [vmem:[%s634] sm:$0xff]
        %v762 = vld [vmem:[%s634 + $0x8] sm:$0xff]
        %v763 = vld [vmem:[%s634 + $0x10] sm:$0xff]
        %v764 = vld [vmem:[%s634 + $0x18] sm:$0xff]
        %v765 = vld [vmem:[%s634 + $0x20] sm:$0xff]
        %v766 = vld [vmem:[%s634 + $0x28] sm:$0xff]
        %v767 = vld [vmem:[%s634 + $0x30] sm:$0xff]
        %v768 = vld [vmem:[%s634 + $0x38] sm:$0xff]
        %v769 = vld [vmem:[%s634 + $0x40] sm:$0xff]
        %v770 = vld [vmem:[%s634 + $0x48] sm:$0xff]
        %v771 = vld [vmem:[%s634 + $0x50] sm:$0xff]
        %v772 = vld [vmem:[%s634 + $0x58] sm:$0xff]
        %v773 = vld [vmem:[%s634 + $0x60] sm:$0xff]
        %v774 = vld [vmem:[%s634 + $0x68] sm:$0xff]
        %v775 = vld [vmem:[%s634 + $0x70] sm:$0xff]
        %v776 = vld [vmem:[%s634 + $0x78] sm:$0xff]
        %v777 = vld [vmem:[%s638] sm:$0x1]
        %v778 = vlaneseq
        %v779 = vand.u32 %v778, 127
        %780 = vset.pattern.permute.xlu0 0
        %781 = vperm.xlu0 %780, %v761
        %v782 = vpop.permute.xlu0 %781
        %783 = vset.pattern.permute.xlu0 0
        %784 = vperm.xlu0 %783, %v762
        %v785 = vpop.permute.xlu0 %784
        %786 = vset.pattern.permute.xlu0 0
        %787 = vperm.xlu0 %786, %v763
        %v788 = vpop.permute.xlu0 %787
        %789 = vset.pattern.permute.xlu0 0
        %790 = vperm.xlu0 %789, %v764
        %v791 = vpop.permute.xlu0 %790
        %792 = vset.pattern.permute.xlu0 0
        %793 = vperm.xlu0 %792, %v765
        %v794 = vpop.permute.xlu0 %793
        %795 = vset.pattern.permute.xlu0 0
        %796 = vperm.xlu0 %795, %v766
        %v797 = vpop.permute.xlu0 %796
        %798 = vset.pattern.permute.xlu0 0
        %799 = vperm.xlu0 %798, %v767
        %v800 = vpop.permute.xlu0 %799
        %801 = vset.pattern.permute.xlu0 0
        %802 = vperm.xlu0 %801, %v768
        %v803 = vpop.permute.xlu0 %802
        %804 = vset.pattern.permute.xlu0 0
        %805 = vperm.xlu0 %804, %v769
        %v806 = vpop.permute.xlu0 %805
        %807 = vset.pattern.permute.xlu0 0
        %808 = vperm.xlu0 %807, %v770
        %v809 = vpop.permute.xlu0 %808
        %810 = vset.pattern.permute.xlu0 0
        %811 = vperm.xlu0 %810, %v771
        %v812 = vpop.permute.xlu0 %811
        %813 = vset.pattern.permute.xlu0 0
        %814 = vperm.xlu0 %813, %v772
        %v815 = vpop.permute.xlu0 %814
        %816 = vset.pattern.permute.xlu0 0
        %817 = vperm.xlu0 %816, %v773
        %v818 = vpop.permute.xlu0 %817
        %819 = vset.pattern.permute.xlu0 0
        %820 = vperm.xlu0 %819, %v774
        %v821 = vpop.permute.xlu0 %820
        %822 = vset.pattern.permute.xlu0 0
        %823 = vperm.xlu0 %822, %v775
        %v824 = vpop.permute.xlu0 %823
        %825 = vset.pattern.permute.xlu0 0
        %826 = vperm.xlu0 %825, %v776
        %v827 = vpop.permute.xlu0 %826
        %vm828 = vcmp.eq.s32.totalorder %v782, %v779
        %vm829 = vcmp.eq.s32.totalorder %v785, %v779
        %vm830 = vcmp.eq.s32.totalorder %v788, %v779
        %vm831 = vcmp.eq.s32.totalorder %v791, %v779
        %vm832 = vcmp.eq.s32.totalorder %v794, %v779
        %vm833 = vcmp.eq.s32.totalorder %v797, %v779
        %vm834 = vcmp.eq.s32.totalorder %v800, %v779
        %vm835 = vcmp.eq.s32.totalorder %v803, %v779
        %vm836 = vcmp.eq.s32.totalorder %v806, %v779
        %vm837 = vcmp.eq.s32.totalorder %v809, %v779
        %vm838 = vcmp.eq.s32.totalorder %v812, %v779
        %vm839 = vcmp.eq.s32.totalorder %v815, %v779
        %vm840 = vcmp.eq.s32.totalorder %v818, %v779
        %vm841 = vcmp.eq.s32.totalorder %v821, %v779
        %vm842 = vcmp.eq.s32.totalorder %v824, %v779
        %vm843 = vcmp.eq.s32.totalorder %v827, %v779
        %v844 = vsel %vm828, 1.0, 0.0
        %v845 = vsel %vm829, 1.0, 0.0
        %v846 = vsel %vm830, 1.0, 0.0
        %v847 = vsel %vm831, 1.0, 0.0
        %v848 = vsel %vm832, 1.0, 0.0
        %v849 = vsel %vm833, 1.0, 0.0
        %v850 = vsel %vm834, 1.0, 0.0
        %v851 = vsel %vm835, 1.0, 0.0
        %v852 = vsel %vm836, 1.0, 0.0
        %v853 = vsel %vm837, 1.0, 0.0
        %v854 = vsel %vm838, 1.0, 0.0
        %v855 = vsel %vm839, 1.0, 0.0
        %v856 = vsel %vm840, 1.0, 0.0
        %v857 = vsel %vm841, 1.0, 0.0
        %v858 = vsel %vm842, 1.0, 0.0
        %v859 = vsel %vm843, 1.0, 0.0
        %v860 = vpack.c.bf16 %v845, %v844
        %v861 = vpack.c.bf16 %v847, %v846
        %v862 = vpack.c.bf16 %v849, %v848
        %v863 = vpack.c.bf16 %v851, %v850
        %v864 = vpack.c.bf16 %v853, %v852
        %v865 = vpack.c.bf16 %v855, %v854
        %v866 = vpack.c.bf16 %v857, %v856
        %v867 = vpack.c.bf16 %v859, %v858
        %v868 = vlaneseq
        %v869 = vshrl.u32 %v868, 7
        %v870 = vadd.s32 %v869, 8
        %v871 = vlaneseq
        %v872 = vshrl.u32 %v871, 7
        %v873 = vsub.s32 0, %v872
        %v874 = vrot.slane %v777, %v873
        %vm875 = vcmp.eq.s32.totalorder %v869, %v874
        %vm876 = vcmp.eq.s32.totalorder %v870, %v874
        %v877 = vsel %vm875, 1.0, 0.0
        %v878 = vsel %vm876, 1.0, 0.0
        %v879 = vpack.c.bf16 %v878, %v877
        %v880 = vld [vmem:[#allocation3] sm:$0xf]
        %v881 = vld [vmem:[#allocation3 + $0x4] sm:$0xf]
        %v884 = vunpack.c.l.b16 %v880
        %v885 = vunpack.c.l.b16 %v881
        %v886 = vpack.c.b16 %v885, %v884
        %vm888 = vcmask 130048
        %v890 = vsel %vm888, %v860, 0
        %v893 = vsel %vm888, %v861, 0
        %v896 = vsel %vm888, %v862, 0
        %v899 = vsel %vm888, %v863, 0
        %v902 = vsel %vm888, %v864, 0
        %v905 = vsel %vm888, %v865, 0
        %v908 = vsel %vm888, %v866, 0
        %v911 = vsel %vm888, %v867, 0
        %913 = vmatprep.subr.bf16.mxu0 0
        %914 = vmatpush1.bf16.msra.mxu0 0
        %915 = vmatprep.subr.bf16.mxu0 0
        %916 = vmatpush1.bf16.msra.mxu0 0
        %917 = vmatprep.subr.bf16.mxu0 0
        %918 = vmatpush1.bf16.msra.mxu0 0
        %919 = vmatprep.subr.bf16.mxu0 0
        %920 = vmatpush1.bf16.msra.mxu0 0
        %921 = vmatprep.subr.bf16.mxu0 0
        %922 = vmatpush1.bf16.msra.mxu0 0
        %923 = vmatprep.subr.bf16.mxu0 0
        %924 = vmatpush1.bf16.msra.mxu0 0
        %925 = vmatprep.subr.bf16.mxu0 0
        %926 = vmatpush1.bf16.msra.mxu0 0
        %927 = vmatprep.subr.bf16.mxu0 0
        %928 = vmatpush1.bf16.msra.mxu0 %v886
        %929 = vmatprep.subr.bf16.mxu0 0
        %930 = vmatpush2.bf16.msra.mxu0 0
        %931 = vmatprep.subr.bf16.mxu0 0
        %932 = vmatpush2.bf16.msra.mxu0 0
        %933 = vmatprep.subr.bf16.mxu0 0
        %934 = vmatpush2.bf16.msra.mxu0 0
        %935 = vmatprep.subr.bf16.mxu0 0
        %936 = vmatpush2.bf16.msra.mxu0 0
        %937 = vmatprep.subr.bf16.mxu0 0
        %938 = vmatpush2.bf16.msra.mxu0 0
        %939 = vmatprep.subr.bf16.mxu0 0
        %940 = vmatpush2.bf16.msra.mxu0 0
        %941 = vmatprep.subr.bf16.mxu0 0
        %942 = vmatpush2.bf16.msra.mxu0 0
        %943 = vmatprep.subr.bf16.mxu0 0
        %944 = vmatpush2.bf16.msra.mxu0 0
        %945 = vmatprep.mubr.bf16.mxu0 0
        %946 = vmatmul.mubr.bf16.gmra.mxu0 %v890
        %v947 = vpop.f32.mrf.mxu0
        %v948 = vadd.f32 0.0, %v947
        %v949 = vpop.f32.mrf.mxu0
        %v950 = vpop.f32.mrf.mxu0
        %v951 = vadd.f32 0.0, %v950
        %v952 = vpop.f32.mrf.mxu0
        %953 = vmatprep.mubr.bf16.mxu0 0
        %954 = vmatmul.mubr.bf16.gmra.mxu0 %v893
        %v955 = vpop.f32.mrf.mxu0
        %v956 = vadd.f32 0.0, %v955
        %v957 = vpop.f32.mrf.mxu0
        %v958 = vpop.f32.mrf.mxu0
        %v959 = vadd.f32 0.0, %v958
        %v960 = vpop.f32.mrf.mxu0
        %961 = vmatprep.mubr.bf16.mxu0 0
        %962 = vmatmul.mubr.bf16.gmra.mxu0 %v896
        %v963 = vpop.f32.mrf.mxu0
        %v964 = vadd.f32 0.0, %v963
        %v965 = vpop.f32.mrf.mxu0
        %v966 = vpop.f32.mrf.mxu0
        %v967 = vadd.f32 0.0, %v966
        %v968 = vpop.f32.mrf.mxu0
        %969 = vmatprep.mubr.bf16.mxu0 0
        %970 = vmatmul.mubr.bf16.gmra.mxu0 %v899
        %v971 = vpop.f32.mrf.mxu0
        %v972 = vadd.f32 0.0, %v971
        %v973 = vpop.f32.mrf.mxu0
        %v974 = vpop.f32.mrf.mxu0
        %v975 = vadd.f32 0.0, %v974
        %v976 = vpop.f32.mrf.mxu0
        %977 = vmatprep.mubr.bf16.mxu0 0
        %978 = vmatmul.mubr.bf16.gmra.mxu0 %v902
        %v979 = vpop.f32.mrf.mxu0
        %v980 = vadd.f32 0.0, %v979
        %v981 = vpop.f32.mrf.mxu0
        %v982 = vpop.f32.mrf.mxu0
        %v983 = vadd.f32 0.0, %v982
        %v984 = vpop.f32.mrf.mxu0
        %985 = vmatprep.mubr.bf16.mxu0 0
        %986 = vmatmul.mubr.bf16.gmra.mxu0 %v905
        %v987 = vpop.f32.mrf.mxu0
        %v988 = vadd.f32 0.0, %v987
        %v989 = vpop.f32.mrf.mxu0
        %v990 = vpop.f32.mrf.mxu0
        %v991 = vadd.f32 0.0, %v990
        %v992 = vpop.f32.mrf.mxu0
        %993 = vmatprep.mubr.bf16.mxu0 0
        %994 = vmatmul.mubr.bf16.gmra.mxu0 %v908
        %v995 = vpop.f32.mrf.mxu0
        %v996 = vadd.f32 0.0, %v995
        %v997 = vpop.f32.mrf.mxu0
        %v998 = vpop.f32.mrf.mxu0
        %v999 = vadd.f32 0.0, %v998
        %v1000 = vpop.f32.mrf.mxu0
        %1001 = vmatprep.mubr.bf16.mxu0 0
        %1002 = vmatmul.mubr.bf16.gmra.mxu0 %v911
        %v1003 = vpop.f32.mrf.mxu0
        %v1004 = vadd.f32 0.0, %v1003
        %v1005 = vpop.f32.mrf.mxu0
        %v1006 = vpop.f32.mrf.mxu0
        %v1007 = vadd.f32 0.0, %v1006
        %v1008 = vpop.f32.mrf.mxu0
        %1009 = vdwg.mxu0
        %v1010 = vld [vmem:[%s628] sm:$0xff]
        %v1011 = vld [vmem:[%s628 + $0x8] sm:$0xff]
        %v1012 = vld [vmem:[%s628 + $0x10] sm:$0xff]
        %v1013 = vld [vmem:[%s628 + $0x18] sm:$0xff]
        %v1014 = vld [vmem:[%s628 + $0x20] sm:$0xff]
        %v1015 = vld [vmem:[%s628 + $0x28] sm:$0xff]
        %v1016 = vld [vmem:[%s628 + $0x30] sm:$0xff]
        %v1017 = vld [vmem:[%s628 + $0x38] sm:$0xff]
        %v1018 = vld [vmem:[%s628 + $0x40] sm:$0xff]
        %v1019 = vld [vmem:[%s628 + $0x48] sm:$0xff]
        %v1020 = vld [vmem:[%s628 + $0x50] sm:$0xff]
        %v1021 = vld [vmem:[%s628 + $0x58] sm:$0xff]
        %v1022 = vld [vmem:[%s628 + $0x60] sm:$0xff]
        %v1023 = vld [vmem:[%s628 + $0x68] sm:$0xff]
        %v1024 = vld [vmem:[%s628 + $0x70] sm:$0xff]
        %v1025 = vld [vmem:[%s628 + $0x78] sm:$0xff]
        %v1026 = vpack.c.bf16 %v1011, %v1010
        %v1027 = vpack.c.bf16 %v1013, %v1012
        %v1028 = vpack.c.bf16 %v1015, %v1014
        %v1029 = vpack.c.bf16 %v1017, %v1016
        %v1030 = vpack.c.bf16 %v1019, %v1018
        %v1031 = vpack.c.bf16 %v1021, %v1020
        %v1032 = vpack.c.bf16 %v1023, %v1022
        %v1033 = vpack.c.bf16 %v1025, %v1024
        %v1034 = vld [vmem:[%s10] sm:$0x7]
        %v1035 = vld [vmem:[%s11] sm:$0x1]
        %v1037 = vlaneseq
        %v1038 = vshrl.u32 %v1037, 7
        %v1039 = vsub.s32 0, %v1038
        %v1040 = vrot.slane %v1035, %v1039
        %vm1042 = vcmask 39936
        %v1044 = vsel %vm1042, %v1026, 0
        %v1047 = vsel %vm1042, %v1027, 0
        %v1050 = vsel %vm1042, %v1028, 0
        %v1053 = vsel %vm1042, %v1029, 0
        %v1056 = vsel %vm1042, %v1030, 0
        %v1059 = vsel %vm1042, %v1031, 0
        %v1062 = vsel %vm1042, %v1032, 0
        %v1065 = vsel %vm1042, %v1033, 0
        %vm1067 = vcmask 1041408
        %vm1068 = vcmask 1042432
        %v1069 = vsel %vm1067, 4294967295, 65535
        %v1070 = vsel %vm1068, %v1069, 0
        %v1072 = vand.u32 %v1034, %v1070
        %1074 = vmatprep.subr.bf16.mxu0 0
        %1075 = vmatpush1.bf16.msra.mxu0 0
        %1076 = vmatprep.subr.bf16.mxu0 0
        %1077 = vmatpush1.bf16.msra.mxu0 0
        %1078 = vmatprep.subr.bf16.mxu0 0
        %1079 = vmatpush1.bf16.msra.mxu0 0
        %1080 = vmatprep.subr.bf16.mxu0 0
        %1081 = vmatpush1.bf16.msra.mxu0 0
        %1082 = vmatprep.subr.bf16.mxu0 0
        %1083 = vmatpush1.bf16.msra.mxu0 0
        %1084 = vmatprep.subr.bf16.mxu0 0
        %1085 = vmatpush1.bf16.msra.mxu0 0
        %1086 = vmatprep.subr.bf16.mxu0 0
        %1087 = vmatpush1.bf16.msra.mxu0 0
        %1088 = vmatprep.subr.bf16.mxu0 0
        %1089 = vmatpush1.bf16.msra.mxu0 %v1072
        %1090 = vmatprep.subr.bf16.mxu0 0
        %1091 = vmatpush2.bf16.msra.mxu0 0
        %1092 = vmatprep.subr.bf16.mxu0 0
        %1093 = vmatpush2.bf16.msra.mxu0 0
        %1094 = vmatprep.subr.bf16.mxu0 0
        %1095 = vmatpush2.bf16.msra.mxu0 0
        %1096 = vmatprep.subr.bf16.mxu0 0
        %1097 = vmatpush2.bf16.msra.mxu0 0
        %1098 = vmatprep.subr.bf16.mxu0 0
        %1099 = vmatpush2.bf16.msra.mxu0 0
        %1100 = vmatprep.subr.bf16.mxu0 0
        %1101 = vmatpush2.bf16.msra.mxu0 0
        %1102 = vmatprep.subr.bf16.mxu0 0
        %1103 = vmatpush2.bf16.msra.mxu0 0
        %1104 = vmatprep.subr.bf16.mxu0 0
        %1105 = vmatpush2.bf16.msra.mxu0 0
        %1106 = vmatprep.mubr.bf16.mxu0 0
        %1107 = vmatmul.mubr.bf16.gmra.mxu0 %v1044
        %v1108 = vpop.f32.mrf.mxu0
        %v1109 = vadd.f32 %v1040, %v1108
        %v1110 = vpop.f32.mrf.mxu0
        %v1111 = vpop.f32.mrf.mxu0
        %v1112 = vadd.f32 %v1040, %v1111
        %v1113 = vpop.f32.mrf.mxu0
        %1114 = vmatprep.mubr.bf16.mxu0 0
        %1115 = vmatmul.mubr.bf16.gmra.mxu0 %v1047
        %v1116 = vpop.f32.mrf.mxu0
        %v1117 = vadd.f32 %v1040, %v1116
        %v1118 = vpop.f32.mrf.mxu0
        %v1119 = vpop.f32.mrf.mxu0
        %v1120 = vadd.f32 %v1040, %v1119
        %v1121 = vpop.f32.mrf.mxu0
        %1122 = vmatprep.mubr.bf16.mxu0 0
        %1123 = vmatmul.mubr.bf16.gmra.mxu0 %v1050
        %v1124 = vpop.f32.mrf.mxu0
        %v1125 = vadd.f32 %v1040, %v1124
        %v1126 = vpop.f32.mrf.mxu0
        %v1127 = vpop.f32.mrf.mxu0
        %v1128 = vadd.f32 %v1040, %v1127
        %v1129 = vpop.f32.mrf.mxu0
        %1130 = vmatprep.mubr.bf16.mxu0 0
        %1131 = vmatmul.mubr.bf16.gmra.mxu0 %v1053
        %v1132 = vpop.f32.mrf.mxu0
        %v1133 = vadd.f32 %v1040, %v1132
        %v1134 = vpop.f32.mrf.mxu0
        %v1135 = vpop.f32.mrf.mxu0
        %v1136 = vadd.f32 %v1040, %v1135
        %v1137 = vpop.f32.mrf.mxu0
        %1138 = vmatprep.mubr.bf16.mxu0 0
        %1139 = vmatmul.mubr.bf16.gmra.mxu0 %v1056
        %v1140 = vpop.f32.mrf.mxu0
        %v1141 = vadd.f32 %v1040, %v1140
        %v1142 = vpop.f32.mrf.mxu0
        %v1143 = vpop.f32.mrf.mxu0
        %v1144 = vadd.f32 %v1040, %v1143
        %v1145 = vpop.f32.mrf.mxu0
        %1146 = vmatprep.mubr.bf16.mxu0 0
        %1147 = vmatmul.mubr.bf16.gmra.mxu0 %v1059
        %v1148 = vpop.f32.mrf.mxu0
        %v1149 = vadd.f32 %v1040, %v1148
        %v1150 = vpop.f32.mrf.mxu0
        %v1151 = vpop.f32.mrf.mxu0
        %v1152 = vadd.f32 %v1040, %v1151
        %v1153 = vpop.f32.mrf.mxu0
        %1154 = vmatprep.mubr.bf16.mxu0 0
        %1155 = vmatmul.mubr.bf16.gmra.mxu0 %v1062
        %v1156 = vpop.f32.mrf.mxu0
        %v1157 = vadd.f32 %v1040, %v1156
        %v1158 = vpop.f32.mrf.mxu0
        %v1159 = vpop.f32.mrf.mxu0
        %v1160 = vadd.f32 %v1040, %v1159
        %v1161 = vpop.f32.mrf.mxu0
        %1162 = vmatprep.mubr.bf16.mxu0 0
        %1163 = vmatmul.mubr.bf16.gmra.mxu0 %v1065
        %v1164 = vpop.f32.mrf.mxu0
        %v1165 = vadd.f32 %v1040, %v1164
        %v1166 = vpop.f32.mrf.mxu0
        %v1167 = vpop.f32.mrf.mxu0
        %v1168 = vadd.f32 %v1040, %v1167
        %v1169 = vpop.f32.mrf.mxu0
        %1170 = vdwg.mxu0
        %v1171 = vmax.f32 %v1109, 0.0
        %v1172 = vmax.f32 %v1112, 0.0
        %v1173 = vmax.f32 %v1117, 0.0
        %v1174 = vmax.f32 %v1120, 0.0
        %v1175 = vmax.f32 %v1125, 0.0
        %v1176 = vmax.f32 %v1128, 0.0
        %v1177 = vmax.f32 %v1133, 0.0
        %v1178 = vmax.f32 %v1136, 0.0
        %v1179 = vmax.f32 %v1141, 0.0
        %v1180 = vmax.f32 %v1144, 0.0
        %v1181 = vmax.f32 %v1149, 0.0
        %v1182 = vmax.f32 %v1152, 0.0
        %v1183 = vmax.f32 %v1157, 0.0
        %v1184 = vmax.f32 %v1160, 0.0
        %v1185 = vmax.f32 %v1165, 0.0
        %v1186 = vmax.f32 %v1168, 0.0
        %v1187 = vpack.c.bf16 %v1172, %v1171
        %v1188 = vpack.c.bf16 %v1174, %v1173
        %v1189 = vpack.c.bf16 %v1176, %v1175
        %v1190 = vpack.c.bf16 %v1178, %v1177
        %v1191 = vpack.c.bf16 %v1180, %v1179
        %v1192 = vpack.c.bf16 %v1182, %v1181
        %v1193 = vpack.c.bf16 %v1184, %v1183
        %v1194 = vpack.c.bf16 %v1186, %v1185
        %v1195 = vld [vmem:[%s12] sm:$0xff]
        %v1196 = vld [vmem:[%s12 + $0x8] sm:$0xff]
        %v1197 = vld [vmem:[%s12 + $0x10] sm:$0xff]
        %v1198 = vld [vmem:[%s12 + $0x18] sm:$0xff]
        %v1199 = vld [vmem:[%s12 + $0x20] sm:$0xff]
        %v1200 = vld [vmem:[%s12 + $0x28] sm:$0xff]
        %v1201 = vld [vmem:[%s12 + $0x30] sm:$0xff]
        %v1202 = vld [vmem:[%s12 + $0x38] sm:$0xff]
        %v1203 = vld [vmem:[%s12 + $0x40] sm:$0xff]
        %v1204 = vld [vmem:[%s12 + $0x48] sm:$0xff]
        %v1205 = vld [vmem:[%s12 + $0x50] sm:$0xff]
        %v1206 = vld [vmem:[%s12 + $0x58] sm:$0xff]
        %v1207 = vld [vmem:[%s12 + $0x60] sm:$0xff]
        %v1208 = vld [vmem:[%s12 + $0x68] sm:$0xff]
        %v1209 = vld [vmem:[%s12 + $0x70] sm:$0xff]
        %v1210 = vld [vmem:[%s12 + $0x78] sm:$0xff]
        %v1211 = vld [vmem:[%s12 + $0x80] sm:$0xff]
        %v1212 = vld [vmem:[%s12 + $0x88] sm:$0xff]
        %v1213 = vld [vmem:[%s12 + $0x90] sm:$0xff]
        %v1214 = vld [vmem:[%s12 + $0x98] sm:$0xff]
        %v1215 = vld [vmem:[%s12 + $0xa0] sm:$0xff]
        %v1216 = vld [vmem:[%s12 + $0xa8] sm:$0xff]
        %v1217 = vld [vmem:[%s12 + $0xb0] sm:$0xff]
        %v1218 = vld [vmem:[%s12 + $0xb8] sm:$0xff]
        %v1219 = vld [vmem:[%s12 + $0xc0] sm:$0xff]
        %v1220 = vld [vmem:[%s12 + $0xc8] sm:$0xff]
        %v1221 = vld [vmem:[%s12 + $0xd0] sm:$0xff]
        %v1222 = vld [vmem:[%s12 + $0xd8] sm:$0xff]
        %v1223 = vld [vmem:[%s12 + $0xe0] sm:$0xff]
        %v1224 = vld [vmem:[%s12 + $0xe8] sm:$0xff]
        %v1225 = vld [vmem:[%s12 + $0xf0] sm:$0xff]
        %v1226 = vld [vmem:[%s12 + $0xf8] sm:$0xff]
        %v1227 = vld [vmem:[%s12 + $0x100] sm:$0xff]
        %v1228 = vld [vmem:[%s12 + $0x108] sm:$0xff]
        %v1229 = vld [vmem:[%s12 + $0x110] sm:$0xff]
        %v1230 = vld [vmem:[%s12 + $0x118] sm:$0xff]
        %v1231 = vld [vmem:[%s12 + $0x120] sm:$0xff]
        %v1232 = vld [vmem:[%s12 + $0x128] sm:$0xff]
        %v1233 = vld [vmem:[%s12 + $0x130] sm:$0xff]
        %v1234 = vld [vmem:[%s12 + $0x138] sm:$0xff]
        %v1235 = vld [vmem:[%s12 + $0x140] sm:$0xff]
        %v1236 = vld [vmem:[%s12 + $0x148] sm:$0xff]
        %v1237 = vld [vmem:[%s12 + $0x150] sm:$0xff]
        %v1238 = vld [vmem:[%s12 + $0x158] sm:$0xff]
        %v1239 = vld [vmem:[%s12 + $0x160] sm:$0xff]
        %v1240 = vld [vmem:[%s12 + $0x168] sm:$0xff]
        %v1241 = vld [vmem:[%s12 + $0x170] sm:$0xff]
        %v1242 = vld [vmem:[%s12 + $0x178] sm:$0xff]
        %v1243 = vld [vmem:[%s12 + $0x180] sm:$0xff]
        %v1244 = vld [vmem:[%s12 + $0x188] sm:$0xff]
        %v1245 = vld [vmem:[%s12 + $0x190] sm:$0xff]
        %v1246 = vld [vmem:[%s12 + $0x198] sm:$0xff]
        %v1247 = vld [vmem:[%s12 + $0x1a0] sm:$0xff]
        %v1248 = vld [vmem:[%s12 + $0x1a8] sm:$0xff]
        %v1249 = vld [vmem:[%s12 + $0x1b0] sm:$0xff]
        %v1250 = vld [vmem:[%s12 + $0x1b8] sm:$0xff]
        %v1251 = vld [vmem:[%s12 + $0x1c0] sm:$0xff]
        %v1252 = vld [vmem:[%s12 + $0x1c8] sm:$0xff]
        %v1253 = vld [vmem:[%s12 + $0x1d0] sm:$0xff]
        %v1254 = vld [vmem:[%s12 + $0x1d8] sm:$0xff]
        %v1255 = vld [vmem:[%s12 + $0x1e0] sm:$0xff]
        %v1256 = vld [vmem:[%s12 + $0x1e8] sm:$0xff]
        %v1257 = vld [vmem:[%s12 + $0x1f0] sm:$0xff]
        %v1258 = vld [vmem:[%s12 + $0x1f8] sm:$0xff]
        %v1259 = vld [vmem:[%s13] sm:$0xff]
        %v1261 = vlaneseq
        %v1262 = vshrl.u32 %v1261, 7
        %v1263 = vsub.s32 0, %v1262
        %v1264 = vrot.slane %v1259, %v1263
        %v1265 = vlaneseq
        %v1266 = vshrl.u32 %v1265, 7
        %v1267 = vsub.s32 1, %v1266
        %v1268 = vrot.slane %v1259, %v1267
        %v1269 = vlaneseq
        %v1270 = vshrl.u32 %v1269, 7
        %v1271 = vsub.s32 2, %v1270
        %v1272 = vrot.slane %v1259, %v1271
        %v1273 = vlaneseq
        %v1274 = vshrl.u32 %v1273, 7
        %v1275 = vsub.s32 3, %v1274
        %v1276 = vrot.slane %v1259, %v1275
        %v1277 = vlaneseq
        %v1278 = vshrl.u32 %v1277, 7
        %v1279 = vsub.s32 4, %v1278
        %v1280 = vrot.slane %v1259, %v1279
        %v1281 = vlaneseq
        %v1282 = vshrl.u32 %v1281, 7
        %v1283 = vsub.s32 5, %v1282
        %v1284 = vrot.slane %v1259, %v1283
        %v1285 = vlaneseq
        %v1286 = vshrl.u32 %v1285, 7
        %v1287 = vsub.s32 6, %v1286
        %v1288 = vrot.slane %v1259, %v1287
        %v1289 = vlaneseq
        %v1290 = vshrl.u32 %v1289, 7
        %v1291 = vsub.s32 7, %v1290
        %v1292 = vrot.slane %v1259, %v1291
        %v1365 = vunpack.c.l.b16 %v1195
        %v1366 = vunpack.c.h.b16 %v1195
        %v1367 = vunpack.c.l.b16 %v1196
        %v1368 = vunpack.c.h.b16 %v1196
        %v1369 = vunpack.c.l.b16 %v1197
        %v1370 = vunpack.c.h.b16 %v1197
        %v1371 = vunpack.c.l.b16 %v1198
        %v1372 = vunpack.c.h.b16 %v1198
        %v1373 = vunpack.c.l.b16 %v1199
        %v1374 = vunpack.c.h.b16 %v1199
        %v1375 = vunpack.c.l.b16 %v1200
        %v1376 = vunpack.c.h.b16 %v1200
        %v1377 = vunpack.c.l.b16 %v1201
        %v1378 = vunpack.c.h.b16 %v1201
        %v1379 = vunpack.c.l.b16 %v1202
        %v1380 = vunpack.c.h.b16 %v1202
        %v1381 = vunpack.c.l.b16 %v1203
        %v1382 = vunpack.c.h.b16 %v1203
        %v1383 = vunpack.c.l.b16 %v1204
        %v1384 = vunpack.c.h.b16 %v1204
        %v1385 = vunpack.c.l.b16 %v1205
        %v1386 = vunpack.c.h.b16 %v1205
        %v1387 = vunpack.c.l.b16 %v1206
        %v1388 = vunpack.c.h.b16 %v1206
        %v1389 = vunpack.c.l.b16 %v1207
        %v1390 = vunpack.c.h.b16 %v1207
        %v1391 = vunpack.c.l.b16 %v1208
        %v1392 = vunpack.c.h.b16 %v1208
        %v1393 = vunpack.c.l.b16 %v1209
        %v1394 = vunpack.c.h.b16 %v1209
        %v1395 = vunpack.c.l.b16 %v1210
        %v1396 = vunpack.c.h.b16 %v1210
        %v1397 = vunpack.c.l.b16 %v1211
        %v1398 = vunpack.c.h.b16 %v1211
        %v1399 = vunpack.c.l.b16 %v1212
        %v1400 = vunpack.c.h.b16 %v1212
        %v1401 = vunpack.c.l.b16 %v1213
        %v1402 = vunpack.c.h.b16 %v1213
        %v1403 = vunpack.c.l.b16 %v1214
        %v1404 = vunpack.c.h.b16 %v1214
        %v1405 = vunpack.c.l.b16 %v1215
        %v1406 = vunpack.c.h.b16 %v1215
        %v1407 = vunpack.c.l.b16 %v1216
        %v1408 = vunpack.c.h.b16 %v1216
        %v1409 = vunpack.c.l.b16 %v1217
        %v1410 = vunpack.c.h.b16 %v1217
        %v1411 = vunpack.c.l.b16 %v1218
        %v1412 = vunpack.c.h.b16 %v1218
        %v1413 = vunpack.c.l.b16 %v1219
        %v1414 = vunpack.c.h.b16 %v1219
        %v1415 = vunpack.c.l.b16 %v1220
        %v1416 = vunpack.c.h.b16 %v1220
        %v1417 = vunpack.c.l.b16 %v1221
        %v1418 = vunpack.c.h.b16 %v1221
        %v1419 = vunpack.c.l.b16 %v1222
        %v1420 = vunpack.c.h.b16 %v1222
        %v1421 = vunpack.c.l.b16 %v1223
        %v1422 = vunpack.c.h.b16 %v1223
        %v1423 = vunpack.c.l.b16 %v1224
        %v1424 = vunpack.c.h.b16 %v1224
        %v1425 = vunpack.c.l.b16 %v1225
        %v1426 = vunpack.c.h.b16 %v1225
        %v1427 = vunpack.c.l.b16 %v1226
        %v1428 = vunpack.c.h.b16 %v1226
        %v1429 = vunpack.c.l.b16 %v1227
        %v1430 = vunpack.c.h.b16 %v1227
        %v1431 = vunpack.c.l.b16 %v1228
        %v1432 = vunpack.c.h.b16 %v1228
        %v1433 = vunpack.c.l.b16 %v1229
        %v1434 = vunpack.c.h.b16 %v1229
        %v1435 = vunpack.c.l.b16 %v1230
        %v1436 = vunpack.c.h.b16 %v1230
        %v1437 = vunpack.c.l.b16 %v1231
        %v1438 = vunpack.c.h.b16 %v1231
        %v1439 = vunpack.c.l.b16 %v1232
        %v1440 = vunpack.c.h.b16 %v1232
        %v1441 = vunpack.c.l.b16 %v1233
        %v1442 = vunpack.c.h.b16 %v1233
        %v1443 = vunpack.c.l.b16 %v1234
        %v1444 = vunpack.c.h.b16 %v1234
        %v1445 = vunpack.c.l.b16 %v1235
        %v1446 = vunpack.c.h.b16 %v1235
        %v1447 = vunpack.c.l.b16 %v1236
        %v1448 = vunpack.c.h.b16 %v1236
        %v1449 = vunpack.c.l.b16 %v1237
        %v1450 = vunpack.c.h.b16 %v1237
        %v1451 = vunpack.c.l.b16 %v1238
        %v1452 = vunpack.c.h.b16 %v1238
        %v1453 = vunpack.c.l.b16 %v1239
        %v1454 = vunpack.c.h.b16 %v1239
        %v1455 = vunpack.c.l.b16 %v1240
        %v1456 = vunpack.c.h.b16 %v1240
        %v1457 = vunpack.c.l.b16 %v1241
        %v1458 = vunpack.c.h.b16 %v1241
        %v1459 = vunpack.c.l.b16 %v1242
        %v1460 = vunpack.c.h.b16 %v1242
        %v1461 = vunpack.c.l.b16 %v1243
        %v1462 = vunpack.c.h.b16 %v1243
        %v1463 = vunpack.c.l.b16 %v1244
        %v1464 = vunpack.c.h.b16 %v1244
        %v1465 = vunpack.c.l.b16 %v1245
        %v1466 = vunpack.c.h.b16 %v1245
        %v1467 = vunpack.c.l.b16 %v1246
        %v1468 = vunpack.c.h.b16 %v1246
        %v1469 = vunpack.c.l.b16 %v1247
        %v1470 = vunpack.c.h.b16 %v1247
        %v1471 = vunpack.c.l.b16 %v1248
        %v1472 = vunpack.c.h.b16 %v1248
        %v1473 = vunpack.c.l.b16 %v1249
        %v1474 = vunpack.c.h.b16 %v1249
        %v1475 = vunpack.c.l.b16 %v1250
        %v1476 = vunpack.c.h.b16 %v1250
        %v1477 = vunpack.c.l.b16 %v1251
        %v1478 = vunpack.c.h.b16 %v1251
        %v1479 = vunpack.c.l.b16 %v1252
        %v1480 = vunpack.c.h.b16 %v1252
        %v1481 = vunpack.c.l.b16 %v1253
        %v1482 = vunpack.c.h.b16 %v1253
        %v1483 = vunpack.c.l.b16 %v1254
        %v1484 = vunpack.c.h.b16 %v1254
        %v1485 = vunpack.c.l.b16 %v1255
        %v1486 = vunpack.c.h.b16 %v1255
        %v1487 = vunpack.c.l.b16 %v1256
        %v1488 = vunpack.c.h.b16 %v1256
        %v1489 = vunpack.c.l.b16 %v1257
        %v1490 = vunpack.c.h.b16 %v1257
        %v1491 = vunpack.c.l.b16 %v1258
        %v1492 = vunpack.c.h.b16 %v1258
        %v1493 = vpack.c.b16 %v1373, %v1365
        %v1494 = vpack.c.b16 %v1374, %v1366
        %v1495 = vpack.c.b16 %v1375, %v1367
        %v1496 = vpack.c.b16 %v1376, %v1368
        %v1497 = vpack.c.b16 %v1377, %v1369
        %v1498 = vpack.c.b16 %v1378, %v1370
        %v1499 = vpack.c.b16 %v1379, %v1371
        %v1500 = vpack.c.b16 %v1380, %v1372
        %v1501 = vpack.c.b16 %v1389, %v1381
        %v1502 = vpack.c.b16 %v1390, %v1382
        %v1503 = vpack.c.b16 %v1391, %v1383
        %v1504 = vpack.c.b16 %v1392, %v1384
        %v1505 = vpack.c.b16 %v1393, %v1385
        %v1506 = vpack.c.b16 %v1394, %v1386
        %v1507 = vpack.c.b16 %v1395, %v1387
        %v1508 = vpack.c.b16 %v1396, %v1388
        %v1509 = vpack.c.b16 %v1405, %v1397
        %v1510 = vpack.c.b16 %v1406, %v1398
        %v1511 = vpack.c.b16 %v1407, %v1399
        %v1512 = vpack.c.b16 %v1408, %v1400
        %v1513 = vpack.c.b16 %v1409, %v1401
        %v1514 = vpack.c.b16 %v1410, %v1402
        %v1515 = vpack.c.b16 %v1411, %v1403
        %v1516 = vpack.c.b16 %v1412, %v1404
        %v1517 = vpack.c.b16 %v1421, %v1413
        %v1518 = vpack.c.b16 %v1422, %v1414
        %v1519 = vpack.c.b16 %v1423, %v1415
        %v1520 = vpack.c.b16 %v1424, %v1416
        %v1521 = vpack.c.b16 %v1425, %v1417
        %v1522 = vpack.c.b16 %v1426, %v1418
        %v1523 = vpack.c.b16 %v1427, %v1419
        %v1524 = vpack.c.b16 %v1428, %v1420
        %v1525 = vpack.c.b16 %v1437, %v1429
        %v1526 = vpack.c.b16 %v1438, %v1430
        %v1527 = vpack.c.b16 %v1439, %v1431
        %v1528 = vpack.c.b16 %v1440, %v1432
        %v1529 = vpack.c.b16 %v1441, %v1433
        %v1530 = vpack.c.b16 %v1442, %v1434
        %v1531 = vpack.c.b16 %v1443, %v1435
        %v1532 = vpack.c.b16 %v1444, %v1436
        %v1533 = vpack.c.b16 %v1453, %v1445
        %v1534 = vpack.c.b16 %v1454, %v1446
        %v1535 = vpack.c.b16 %v1455, %v1447
        %v1536 = vpack.c.b16 %v1456, %v1448
        %v1537 = vpack.c.b16 %v1457, %v1449
        %v1538 = vpack.c.b16 %v1458, %v1450
        %v1539 = vpack.c.b16 %v1459, %v1451
        %v1540 = vpack.c.b16 %v1460, %v1452
        %v1541 = vpack.c.b16 %v1469, %v1461
        %v1542 = vpack.c.b16 %v1470, %v1462
        %v1543 = vpack.c.b16 %v1471, %v1463
        %v1544 = vpack.c.b16 %v1472, %v1464
        %v1545 = vpack.c.b16 %v1473, %v1465
        %v1546 = vpack.c.b16 %v1474, %v1466
        %v1547 = vpack.c.b16 %v1475, %v1467
        %v1548 = vpack.c.b16 %v1476, %v1468
        %v1549 = vpack.c.b16 %v1485, %v1477
        %v1550 = vpack.c.b16 %v1486, %v1478
        %v1551 = vpack.c.b16 %v1487, %v1479
        %v1552 = vpack.c.b16 %v1488, %v1480
        %v1553 = vpack.c.b16 %v1489, %v1481
        %v1554 = vpack.c.b16 %v1490, %v1482
        %v1555 = vpack.c.b16 %v1491, %v1483
        %v1556 = vpack.c.b16 %v1492, %v1484
        %1621 = vmatprep.subr.bf16.mxu0 %v1550
        %1622 = vmatpush1.bf16.msra.mxu0 %v1549
        %1623 = vmatprep.subr.bf16.mxu0 %v1542
        %1624 = vmatpush1.bf16.msra.mxu0 %v1541
        %1625 = vmatprep.subr.bf16.mxu0 %v1534
        %1626 = vmatpush1.bf16.msra.mxu0 %v1533
        %1627 = vmatprep.subr.bf16.mxu0 %v1526
        %1628 = vmatpush1.bf16.msra.mxu0 %v1525
        %1629 = vmatprep.subr.bf16.mxu0 %v1518
        %1630 = vmatpush1.bf16.msra.mxu0 %v1517
        %1631 = vmatprep.subr.bf16.mxu0 %v1510
        %1632 = vmatpush1.bf16.msra.mxu0 %v1509
        %1633 = vmatprep.subr.bf16.mxu0 %v1502
        %1634 = vmatpush1.bf16.msra.mxu0 %v1501
        %1635 = vmatprep.subr.bf16.mxu0 %v1494
        %1636 = vmatpush1.bf16.msra.mxu0 %v1493
        %1637 = vmatprep.subr.bf16.mxu0 0
        %1638 = vmatpush2.bf16.msra.mxu0 0
        %1639 = vmatprep.subr.bf16.mxu0 0
        %1640 = vmatpush2.bf16.msra.mxu0 0
        %1641 = vmatprep.subr.bf16.mxu0 0
        %1642 = vmatpush2.bf16.msra.mxu0 0
        %1643 = vmatprep.subr.bf16.mxu0 0
        %1644 = vmatpush2.bf16.msra.mxu0 0
        %1645 = vmatprep.subr.bf16.mxu0 0
        %1646 = vmatpush2.bf16.msra.mxu0 0
        %1647 = vmatprep.subr.bf16.mxu0 0
        %1648 = vmatpush2.bf16.msra.mxu0 0
        %1649 = vmatprep.subr.bf16.mxu0 0
        %1650 = vmatpush2.bf16.msra.mxu0 0
        %1651 = vmatprep.subr.bf16.mxu0 0
        %1652 = vmatpush2.bf16.msra.mxu0 0
        %1653 = vmatprep.mubr.bf16.mxu0 0
        %1654 = vmatmul.mubr.bf16.gmra.mxu0 %v1187
        %v1655 = vpop.f32.mrf.mxu0
        %v1656 = vadd.f32 %v1264, %v1655
        %v1657 = vpop.f32.mrf.mxu0
        %v1658 = vadd.f32 %v1268, %v1657
        %v1659 = vpop.f32.mrf.mxu0
        %v1660 = vadd.f32 %v1264, %v1659
        %v1661 = vpop.f32.mrf.mxu0
        %v1662 = vadd.f32 %v1268, %v1661
        %1663 = vmatprep.mubr.bf16.mxu0 0
        %1664 = vmatmul.mubr.bf16.gmra.mxu0 %v1188
        %v1665 = vpop.f32.mrf.mxu0
        %v1666 = vadd.f32 %v1264, %v1665
        %v1667 = vpop.f32.mrf.mxu0
        %v1668 = vadd.f32 %v1268, %v1667
        %v1669 = vpop.f32.mrf.mxu0
        %v1670 = vadd.f32 %v1264, %v1669
        %v1671 = vpop.f32.mrf.mxu0
        %v1672 = vadd.f32 %v1268, %v1671
        %1673 = vmatprep.mubr.bf16.mxu0 0
        %1674 = vmatmul.mubr.bf16.gmra.mxu0 %v1189
        %v1675 = vpop.f32.mrf.mxu0
        %v1676 = vadd.f32 %v1264, %v1675
        %v1677 = vpop.f32.mrf.mxu0
        %v1678 = vadd.f32 %v1268, %v1677
        %v1679 = vpop.f32.mrf.mxu0
        %v1680 = vadd.f32 %v1264, %v1679
        %v1681 = vpop.f32.mrf.mxu0
        %v1682 = vadd.f32 %v1268, %v1681
        %1683 = vmatprep.mubr.bf16.mxu0 0
        %1684 = vmatmul.mubr.bf16.gmra.mxu0 %v1190
        %v1685 = vpop.f32.mrf.mxu0
        %v1686 = vadd.f32 %v1264, %v1685
        %v1687 = vpop.f32.mrf.mxu0
        %v1688 = vadd.f32 %v1268, %v1687
        %v1689 = vpop.f32.mrf.mxu0
        %v1690 = vadd.f32 %v1264, %v1689
        %v1691 = vpop.f32.mrf.mxu0
        %v1692 = vadd.f32 %v1268, %v1691
        %1693 = vmatprep.mubr.bf16.mxu0 0
        %1694 = vmatmul.mubr.bf16.gmra.mxu0 %v1191
        %v1695 = vpop.f32.mrf.mxu0
        %v1696 = vadd.f32 %v1264, %v1695
        %v1697 = vpop.f32.mrf.mxu0
        %v1698 = vadd.f32 %v1268, %v1697
        %v1699 = vpop.f32.mrf.mxu0
        %v1700 = vadd.f32 %v1264, %v1699
        %v1701 = vpop.f32.mrf.mxu0
        %v1702 = vadd.f32 %v1268, %v1701
        %1703 = vmatprep.mubr.bf16.mxu0 0
        %1704 = vmatmul.mubr.bf16.gmra.mxu0 %v1192
        %v1705 = vpop.f32.mrf.mxu0
        %v1706 = vadd.f32 %v1264, %v1705
        %v1707 = vpop.f32.mrf.mxu0
        %v1708 = vadd.f32 %v1268, %v1707
        %v1709 = vpop.f32.mrf.mxu0
        %v1710 = vadd.f32 %v1264, %v1709
        %v1711 = vpop.f32.mrf.mxu0
        %v1712 = vadd.f32 %v1268, %v1711
        %1713 = vmatprep.mubr.bf16.mxu0 0
        %1714 = vmatmul.mubr.bf16.gmra.mxu0 %v1193
        %v1715 = vpop.f32.mrf.mxu0
        %v1716 = vadd.f32 %v1264, %v1715
        %v1717 = vpop.f32.mrf.mxu0
        %v1718 = vadd.f32 %v1268, %v1717
        %v1719 = vpop.f32.mrf.mxu0
        %v1720 = vadd.f32 %v1264, %v1719
        %v1721 = vpop.f32.mrf.mxu0
        %v1722 = vadd.f32 %v1268, %v1721
        %1723 = vmatprep.mubr.bf16.mxu0 0
        %1724 = vmatmul.mubr.bf16.gmra.mxu0 %v1194
        %v1725 = vpop.f32.mrf.mxu0
        %v1726 = vadd.f32 %v1264, %v1725
        %v1727 = vpop.f32.mrf.mxu0
        %v1728 = vadd.f32 %v1268, %v1727
        %v1729 = vpop.f32.mrf.mxu0
        %v1730 = vadd.f32 %v1264, %v1729
        %v1731 = vpop.f32.mrf.mxu0
        %v1732 = vadd.f32 %v1268, %v1731
        %1733 = vdwg.mxu0
        %1734 = vmatprep.subr.bf16.mxu0 %v1552
        %1735 = vmatpush1.bf16.msra.mxu0 %v1551
        %1736 = vmatprep.subr.bf16.mxu0 %v1544
        %1737 = vmatpush1.bf16.msra.mxu0 %v1543
        %1738 = vmatprep.subr.bf16.mxu0 %v1536
        %1739 = vmatpush1.bf16.msra.mxu0 %v1535
        %1740 = vmatprep.subr.bf16.mxu0 %v1528
        %1741 = vmatpush1.bf16.msra.mxu0 %v1527
        %1742 = vmatprep.subr.bf16.mxu0 %v1520
        %1743 = vmatpush1.bf16.msra.mxu0 %v1519
        %1744 = vmatprep.subr.bf16.mxu0 %v1512
        %1745 = vmatpush1.bf16.msra.mxu0 %v1511
        %1746 = vmatprep.subr.bf16.mxu0 %v1504
        %1747 = vmatpush1.bf16.msra.mxu0 %v1503
        %1748 = vmatprep.subr.bf16.mxu0 %v1496
        %1749 = vmatpush1.bf16.msra.mxu0 %v1495
        %1750 = vmatprep.subr.bf16.mxu0 0
        %1751 = vmatpush2.bf16.msra.mxu0 0
        %1752 = vmatprep.subr.bf16.mxu0 0
        %1753 = vmatpush2.bf16.msra.mxu0 0
        %1754 = vmatprep.subr.bf16.mxu0 0
        %1755 = vmatpush2.bf16.msra.mxu0 0
        %1756 = vmatprep.subr.bf16.mxu0 0
        %1757 = vmatpush2.bf16.msra.mxu0 0
        %1758 = vmatprep.subr.bf16.mxu0 0
        %1759 = vmatpush2.bf16.msra.mxu0 0
        %1760 = vmatprep.subr.bf16.mxu0 0
        %1761 = vmatpush2.bf16.msra.mxu0 0
        %1762 = vmatprep.subr.bf16.mxu0 0
        %1763 = vmatpush2.bf16.msra.mxu0 0
        %1764 = vmatprep.subr.bf16.mxu0 0
        %1765 = vmatpush2.bf16.msra.mxu0 0
        %1766 = vmatprep.mubr.bf16.mxu0 0
        %1767 = vmatmul.mubr.bf16.gmra.mxu0 %v1187
        %v1768 = vpop.f32.mrf.mxu0
        %v1769 = vadd.f32 %v1272, %v1768
        %v1770 = vpop.f32.mrf.mxu0
        %v1771 = vadd.f32 %v1276, %v1770
        %v1772 = vpop.f32.mrf.mxu0
        %v1773 = vadd.f32 %v1272, %v1772
        %v1774 = vpop.f32.mrf.mxu0
        %v1775 = vadd.f32 %v1276, %v1774
        %1776 = vmatprep.mubr.bf16.mxu0 0
        %1777 = vmatmul.mubr.bf16.gmra.mxu0 %v1188
        %v1778 = vpop.f32.mrf.mxu0
        %v1779 = vadd.f32 %v1272, %v1778
        %v1780 = vpop.f32.mrf.mxu0
        %v1781 = vadd.f32 %v1276, %v1780
        %v1782 = vpop.f32.mrf.mxu0
        %v1783 = vadd.f32 %v1272, %v1782
        %v1784 = vpop.f32.mrf.mxu0
        %v1785 = vadd.f32 %v1276, %v1784
        %1786 = vmatprep.mubr.bf16.mxu0 0
        %1787 = vmatmul.mubr.bf16.gmra.mxu0 %v1189
        %v1788 = vpop.f32.mrf.mxu0
        %v1789 = vadd.f32 %v1272, %v1788
        %v1790 = vpop.f32.mrf.mxu0
        %v1791 = vadd.f32 %v1276, %v1790
        %v1792 = vpop.f32.mrf.mxu0
        %v1793 = vadd.f32 %v1272, %v1792
        %v1794 = vpop.f32.mrf.mxu0
        %v1795 = vadd.f32 %v1276, %v1794
        %1796 = vmatprep.mubr.bf16.mxu0 0
        %1797 = vmatmul.mubr.bf16.gmra.mxu0 %v1190
        %v1798 = vpop.f32.mrf.mxu0
        %v1799 = vadd.f32 %v1272, %v1798
        %v1800 = vpop.f32.mrf.mxu0
        %v1801 = vadd.f32 %v1276, %v1800
        %v1802 = vpop.f32.mrf.mxu0
        %v1803 = vadd.f32 %v1272, %v1802
        %v1804 = vpop.f32.mrf.mxu0
        %v1805 = vadd.f32 %v1276, %v1804
        %1806 = vmatprep.mubr.bf16.mxu0 0
        %1807 = vmatmul.mubr.bf16.gmra.mxu0 %v1191
        %v1808 = vpop.f32.mrf.mxu0
        %v1809 = vadd.f32 %v1272, %v1808
        %v1810 = vpop.f32.mrf.mxu0
        %v1811 = vadd.f32 %v1276, %v1810
        %v1812 = vpop.f32.mrf.mxu0
        %v1813 = vadd.f32 %v1272, %v1812
        %v1814 = vpop.f32.mrf.mxu0
        %v1815 = vadd.f32 %v1276, %v1814
        %1816 = vmatprep.mubr.bf16.mxu0 0
        %1817 = vmatmul.mubr.bf16.gmra.mxu0 %v1192
        %v1818 = vpop.f32.mrf.mxu0
        %v1819 = vadd.f32 %v1272, %v1818
        %v1820 = vpop.f32.mrf.mxu0
        %v1821 = vadd.f32 %v1276, %v1820
        %v1822 = vpop.f32.mrf.mxu0
        %v1823 = vadd.f32 %v1272, %v1822
        %v1824 = vpop.f32.mrf.mxu0
        %v1825 = vadd.f32 %v1276, %v1824
        %1826 = vmatprep.mubr.bf16.mxu0 0
        %1827 = vmatmul.mubr.bf16.gmra.mxu0 %v1193
        %v1828 = vpop.f32.mrf.mxu0
        %v1829 = vadd.f32 %v1272, %v1828
        %v1830 = vpop.f32.mrf.mxu0
        %v1831 = vadd.f32 %v1276, %v1830
        %v1832 = vpop.f32.mrf.mxu0
        %v1833 = vadd.f32 %v1272, %v1832
        %v1834 = vpop.f32.mrf.mxu0
        %v1835 = vadd.f32 %v1276, %v1834
        %1836 = vmatprep.mubr.bf16.mxu0 0
        %1837 = vmatmul.mubr.bf16.gmra.mxu0 %v1194
        %v1838 = vpop.f32.mrf.mxu0
        %v1839 = vadd.f32 %v1272, %v1838
        %v1840 = vpop.f32.mrf.mxu0
        %v1841 = vadd.f32 %v1276, %v1840
        %v1842 = vpop.f32.mrf.mxu0
        %v1843 = vadd.f32 %v1272, %v1842
        %v1844 = vpop.f32.mrf.mxu0
        %v1845 = vadd.f32 %v1276, %v1844
        %1846 = vdwg.mxu0
        %1847 = vmatprep.subr.bf16.mxu0 %v1554
        %1848 = vmatpush1.bf16.msra.mxu0 %v1553
        %1849 = vmatprep.subr.bf16.mxu0 %v1546
        %1850 = vmatpush1.bf16.msra.mxu0 %v1545
        %1851 = vmatprep.subr.bf16.mxu0 %v1538
        %1852 = vmatpush1.bf16.msra.mxu0 %v1537
        %1853 = vmatprep.subr.bf16.mxu0 %v1530
        %1854 = vmatpush1.bf16.msra.mxu0 %v1529
        %1855 = vmatprep.subr.bf16.mxu0 %v1522
        %1856 = vmatpush1.bf16.msra.mxu0 %v1521
        %1857 = vmatprep.subr.bf16.mxu0 %v1514
        %1858 = vmatpush1.bf16.msra.mxu0 %v1513
        %1859 = vmatprep.subr.bf16.mxu0 %v1506
        %1860 = vmatpush1.bf16.msra.mxu0 %v1505
        %1861 = vmatprep.subr.bf16.mxu0 %v1498
        %1862 = vmatpush1.bf16.msra.mxu0 %v1497
        %1863 = vmatprep.subr.bf16.mxu0 0
        %1864 = vmatpush2.bf16.msra.mxu0 0
        %1865 = vmatprep.subr.bf16.mxu0 0
        %1866 = vmatpush2.bf16.msra.mxu0 0
        %1867 = vmatprep.subr.bf16.mxu0 0
        %1868 = vmatpush2.bf16.msra.mxu0 0
        %1869 = vmatprep.subr.bf16.mxu0 0
        %1870 = vmatpush2.bf16.msra.mxu0 0
        %1871 = vmatprep.subr.bf16.mxu0 0
        %1872 = vmatpush2.bf16.msra.mxu0 0
        %1873 = vmatprep.subr.bf16.mxu0 0
        %1874 = vmatpush2.bf16.msra.mxu0 0
        %1875 = vmatprep.subr.bf16.mxu0 0
        %1876 = vmatpush2.bf16.msra.mxu0 0
        %1877 = vmatprep.subr.bf16.mxu0 0
        %1878 = vmatpush2.bf16.msra.mxu0 0
        %1879 = vmatprep.mubr.bf16.mxu0 0
        %1880 = vmatmul.mubr.bf16.gmra.mxu0 %v1187
        %v1881 = vpop.f32.mrf.mxu0
        %v1882 = vadd.f32 %v1280, %v1881
        %v1883 = vpop.f32.mrf.mxu0
        %v1884 = vadd.f32 %v1284, %v1883
        %v1885 = vpop.f32.mrf.mxu0
        %v1886 = vadd.f32 %v1280, %v1885
        %v1887 = vpop.f32.mrf.mxu0
        %v1888 = vadd.f32 %v1284, %v1887
        %1889 = vmatprep.mubr.bf16.mxu0 0
        %1890 = vmatmul.mubr.bf16.gmra.mxu0 %v1188
        %v1891 = vpop.f32.mrf.mxu0
        %v1892 = vadd.f32 %v1280, %v1891
        %v1893 = vpop.f32.mrf.mxu0
        %v1894 = vadd.f32 %v1284, %v1893
        %v1895 = vpop.f32.mrf.mxu0
        %v1896 = vadd.f32 %v1280, %v1895
        %v1897 = vpop.f32.mrf.mxu0
        %v1898 = vadd.f32 %v1284, %v1897
        %1899 = vmatprep.mubr.bf16.mxu0 0
        %1900 = vmatmul.mubr.bf16.gmra.mxu0 %v1189
        %v1901 = vpop.f32.mrf.mxu0
        %v1902 = vadd.f32 %v1280, %v1901
        %v1903 = vpop.f32.mrf.mxu0
        %v1904 = vadd.f32 %v1284, %v1903
        %v1905 = vpop.f32.mrf.mxu0
        %v1906 = vadd.f32 %v1280, %v1905
        %v1907 = vpop.f32.mrf.mxu0
        %v1908 = vadd.f32 %v1284, %v1907
        %1909 = vmatprep.mubr.bf16.mxu0 0
        %1910 = vmatmul.mubr.bf16.gmra.mxu0 %v1190
        %v1911 = vpop.f32.mrf.mxu0
        %v1912 = vadd.f32 %v1280, %v1911
        %v1913 = vpop.f32.mrf.mxu0
        %v1914 = vadd.f32 %v1284, %v1913
        %v1915 = vpop.f32.mrf.mxu0
        %v1916 = vadd.f32 %v1280, %v1915
        %v1917 = vpop.f32.mrf.mxu0
        %v1918 = vadd.f32 %v1284, %v1917
        %1919 = vmatprep.mubr.bf16.mxu0 0
        %1920 = vmatmul.mubr.bf16.gmra.mxu0 %v1191
        %v1921 = vpop.f32.mrf.mxu0
        %v1922 = vadd.f32 %v1280, %v1921
        %v1923 = vpop.f32.mrf.mxu0
        %v1924 = vadd.f32 %v1284, %v1923
        %v1925 = vpop.f32.mrf.mxu0
        %v1926 = vadd.f32 %v1280, %v1925
        %v1927 = vpop.f32.mrf.mxu0
        %v1928 = vadd.f32 %v1284, %v1927
        %1929 = vmatprep.mubr.bf16.mxu0 0
        %1930 = vmatmul.mubr.bf16.gmra.mxu0 %v1192
        %v1931 = vpop.f32.mrf.mxu0
        %v1932 = vadd.f32 %v1280, %v1931
        %v1933 = vpop.f32.mrf.mxu0
        %v1934 = vadd.f32 %v1284, %v1933
        %v1935 = vpop.f32.mrf.mxu0
        %v1936 = vadd.f32 %v1280, %v1935
        %v1937 = vpop.f32.mrf.mxu0
        %v1938 = vadd.f32 %v1284, %v1937
        %1939 = vmatprep.mubr.bf16.mxu0 0
        %1940 = vmatmul.mubr.bf16.gmra.mxu0 %v1193
        %v1941 = vpop.f32.mrf.mxu0
        %v1942 = vadd.f32 %v1280, %v1941
        %v1943 = vpop.f32.mrf.mxu0
        %v1944 = vadd.f32 %v1284, %v1943
        %v1945 = vpop.f32.mrf.mxu0
        %v1946 = vadd.f32 %v1280, %v1945
        %v1947 = vpop.f32.mrf.mxu0
        %v1948 = vadd.f32 %v1284, %v1947
        %1949 = vmatprep.mubr.bf16.mxu0 0
        %1950 = vmatmul.mubr.bf16.gmra.mxu0 %v1194
        %v1951 = vpop.f32.mrf.mxu0
        %v1952 = vadd.f32 %v1280, %v1951
        %v1953 = vpop.f32.mrf.mxu0
        %v1954 = vadd.f32 %v1284, %v1953
        %v1955 = vpop.f32.mrf.mxu0
        %v1956 = vadd.f32 %v1280, %v1955
        %v1957 = vpop.f32.mrf.mxu0
        %v1958 = vadd.f32 %v1284, %v1957
        %1959 = vdwg.mxu0
        %1960 = vmatprep.subr.bf16.mxu0 %v1556
        %1961 = vmatpush1.bf16.msra.mxu0 %v1555
        %1962 = vmatprep.subr.bf16.mxu0 %v1548
        %1963 = vmatpush1.bf16.msra.mxu0 %v1547
        %1964 = vmatprep.subr.bf16.mxu0 %v1540
        %1965 = vmatpush1.bf16.msra.mxu0 %v1539
        %1966 = vmatprep.subr.bf16.mxu0 %v1532
        %1967 = vmatpush1.bf16.msra.mxu0 %v1531
        %1968 = vmatprep.subr.bf16.mxu0 %v1524
        %1969 = vmatpush1.bf16.msra.mxu0 %v1523
        %1970 = vmatprep.subr.bf16.mxu0 %v1516
        %1971 = vmatpush1.bf16.msra.mxu0 %v1515
        %1972 = vmatprep.subr.bf16.mxu0 %v1508
        %1973 = vmatpush1.bf16.msra.mxu0 %v1507
        %1974 = vmatprep.subr.bf16.mxu0 %v1500
        %1975 = vmatpush1.bf16.msra.mxu0 %v1499
        %1976 = vmatprep.subr.bf16.mxu0 0
        %1977 = vmatpush2.bf16.msra.mxu0 0
        %1978 = vmatprep.subr.bf16.mxu0 0
        %1979 = vmatpush2.bf16.msra.mxu0 0
        %1980 = vmatprep.subr.bf16.mxu0 0
        %1981 = vmatpush2.bf16.msra.mxu0 0
        %1982 = vmatprep.subr.bf16.mxu0 0
        %1983 = vmatpush2.bf16.msra.mxu0 0
        %1984 = vmatprep.subr.bf16.mxu0 0
        %1985 = vmatpush2.bf16.msra.mxu0 0
        %1986 = vmatprep.subr.bf16.mxu0 0
        %1987 = vmatpush2.bf16.msra.mxu0 0
        %1988 = vmatprep.subr.bf16.mxu0 0
        %1989 = vmatpush2.bf16.msra.mxu0 0
        %1990 = vmatprep.subr.bf16.mxu0 0
        %1991 = vmatpush2.bf16.msra.mxu0 0
        %1992 = vmatprep.mubr.bf16.mxu0 0
        %1993 = vmatmul.mubr.bf16.gmra.mxu0 %v1187
        %v1994 = vpop.f32.mrf.mxu0
        %v1995 = vadd.f32 %v1288, %v1994
        %v1996 = vpop.f32.mrf.mxu0
        %v1997 = vadd.f32 %v1292, %v1996
        %v1998 = vpop.f32.mrf.mxu0
        %v1999 = vadd.f32 %v1288, %v1998
        %v2000 = vpop.f32.mrf.mxu0
        %v2001 = vadd.f32 %v1292, %v2000
        %2002 = vmatprep.mubr.bf16.mxu0 0
        %2003 = vmatmul.mubr.bf16.gmra.mxu0 %v1188
        %v2004 = vpop.f32.mrf.mxu0
        %v2005 = vadd.f32 %v1288, %v2004
        %v2006 = vpop.f32.mrf.mxu0
        %v2007 = vadd.f32 %v1292, %v2006
        %v2008 = vpop.f32.mrf.mxu0
        %v2009 = vadd.f32 %v1288, %v2008
        %v2010 = vpop.f32.mrf.mxu0
        %v2011 = vadd.f32 %v1292, %v2010
        %2012 = vmatprep.mubr.bf16.mxu0 0
        %2013 = vmatmul.mubr.bf16.gmra.mxu0 %v1189
        %v2014 = vpop.f32.mrf.mxu0
        %v2015 = vadd.f32 %v1288, %v2014
        %v2016 = vpop.f32.mrf.mxu0
        %v2017 = vadd.f32 %v1292, %v2016
        %v2018 = vpop.f32.mrf.mxu0
        %v2019 = vadd.f32 %v1288, %v2018
        %v2020 = vpop.f32.mrf.mxu0
        %v2021 = vadd.f32 %v1292, %v2020
        %2022 = vmatprep.mubr.bf16.mxu0 0
        %2023 = vmatmul.mubr.bf16.gmra.mxu0 %v1190
        %v2024 = vpop.f32.mrf.mxu0
        %v2025 = vadd.f32 %v1288, %v2024
        %v2026 = vpop.f32.mrf.mxu0
        %v2027 = vadd.f32 %v1292, %v2026
        %v2028 = vpop.f32.mrf.mxu0
        %v2029 = vadd.f32 %v1288, %v2028
        %v2030 = vpop.f32.mrf.mxu0
        %v2031 = vadd.f32 %v1292, %v2030
        %2032 = vmatprep.mubr.bf16.mxu0 0
        %2033 = vmatmul.mubr.bf16.gmra.mxu0 %v1191
        %v2034 = vpop.f32.mrf.mxu0
        %v2035 = vadd.f32 %v1288, %v2034
        %v2036 = vpop.f32.mrf.mxu0
        %v2037 = vadd.f32 %v1292, %v2036
        %v2038 = vpop.f32.mrf.mxu0
        %v2039 = vadd.f32 %v1288, %v2038
        %v2040 = vpop.f32.mrf.mxu0
        %v2041 = vadd.f32 %v1292, %v2040
        %2042 = vmatprep.mubr.bf16.mxu0 0
        %2043 = vmatmul.mubr.bf16.gmra.mxu0 %v1192
        %v2044 = vpop.f32.mrf.mxu0
        %v2045 = vadd.f32 %v1288, %v2044
        %v2046 = vpop.f32.mrf.mxu0
        %v2047 = vadd.f32 %v1292, %v2046
        %v2048 = vpop.f32.mrf.mxu0
        %v2049 = vadd.f32 %v1288, %v2048
        %v2050 = vpop.f32.mrf.mxu0
        %v2051 = vadd.f32 %v1292, %v2050
        %2052 = vmatprep.mubr.bf16.mxu0 0
        %2053 = vmatmul.mubr.bf16.gmra.mxu0 %v1193
        %v2054 = vpop.f32.mrf.mxu0
        %v2055 = vadd.f32 %v1288, %v2054
        %v2056 = vpop.f32.mrf.mxu0
        %v2057 = vadd.f32 %v1292, %v2056
        %v2058 = vpop.f32.mrf.mxu0
        %v2059 = vadd.f32 %v1288, %v2058
        %v2060 = vpop.f32.mrf.mxu0
        %v2061 = vadd.f32 %v1292, %v2060
        %2062 = vmatprep.mubr.bf16.mxu0 0
        %2063 = vmatmul.mubr.bf16.gmra.mxu0 %v1194
        %v2064 = vpop.f32.mrf.mxu0
        %v2065 = vadd.f32 %v1288, %v2064
        %v2066 = vpop.f32.mrf.mxu0
        %v2067 = vadd.f32 %v1292, %v2066
        %v2068 = vpop.f32.mrf.mxu0
        %v2069 = vadd.f32 %v1288, %v2068
        %v2070 = vpop.f32.mrf.mxu0
        %v2071 = vadd.f32 %v1292, %v2070
        %2072 = vdwg.mxu0
        %v2073 = vpack.c.bf16 %v951, %v948
        %v2074 = vpack.c.bf16 %v959, %v956
        %v2075 = vpack.c.bf16 %v967, %v964
        %v2076 = vpack.c.bf16 %v975, %v972
        %v2077 = vpack.c.bf16 %v983, %v980
        %v2078 = vpack.c.bf16 %v991, %v988
        %v2079 = vpack.c.bf16 %v999, %v996
        %v2080 = vpack.c.bf16 %v1007, %v1004
        %v2081 = vld [vmem:[%s6] sm:$0xff]
        %v2082 = vld [vmem:[%s6 + $0x8] sm:$0xff]
        %v2083 = vld [vmem:[%s6 + $0x10] sm:$0xff]
        %v2084 = vld [vmem:[%s6 + $0x18] sm:$0xff]
        %v2085 = vld [vmem:[%s6 + $0x20] sm:$0xff]
        %v2086 = vld [vmem:[%s6 + $0x28] sm:$0xff]
        %v2087 = vld [vmem:[%s6 + $0x30] sm:$0xff]
        %v2088 = vld [vmem:[%s6 + $0x38] sm:$0xff]
        %v2089 = vld [vmem:[%s6 + $0x40] sm:$0xff]
        %v2090 = vld [vmem:[%s6 + $0x48] sm:$0xff]
        %v2091 = vld [vmem:[%s6 + $0x50] sm:$0xff]
        %v2092 = vld [vmem:[%s6 + $0x58] sm:$0xff]
        %v2093 = vld [vmem:[%s6 + $0x60] sm:$0xff]
        %v2094 = vld [vmem:[%s6 + $0x68] sm:$0xff]
        %v2095 = vld [vmem:[%s6 + $0x70] sm:$0xff]
        %v2096 = vld [vmem:[%s6 + $0x78] sm:$0xff]
        %v2113 = vunpack.c.l.b16 %v2081
        %v2114 = vunpack.c.h.b16 %v2081
        %v2115 = vunpack.c.l.b16 %v2082
        %v2116 = vunpack.c.h.b16 %v2082
        %v2117 = vunpack.c.l.b16 %v2083
        %v2118 = vunpack.c.h.b16 %v2083
        %v2119 = vunpack.c.l.b16 %v2084
        %v2120 = vunpack.c.h.b16 %v2084
        %v2121 = vunpack.c.l.b16 %v2085
        %v2122 = vunpack.c.h.b16 %v2085
        %v2123 = vunpack.c.l.b16 %v2086
        %v2124 = vunpack.c.h.b16 %v2086
        %v2125 = vunpack.c.l.b16 %v2087
        %v2126 = vunpack.c.h.b16 %v2087
        %v2127 = vunpack.c.l.b16 %v2088
        %v2128 = vunpack.c.h.b16 %v2088
        %v2129 = vunpack.c.l.b16 %v2089
        %v2130 = vunpack.c.h.b16 %v2089
        %v2131 = vunpack.c.l.b16 %v2090
        %v2132 = vunpack.c.h.b16 %v2090
        %v2133 = vunpack.c.l.b16 %v2091
        %v2134 = vunpack.c.h.b16 %v2091
        %v2135 = vunpack.c.l.b16 %v2092
        %v2136 = vunpack.c.h.b16 %v2092
        %v2137 = vunpack.c.l.b16 %v2093
        %v2138 = vunpack.c.h.b16 %v2093
        %v2139 = vunpack.c.l.b16 %v2094
        %v2140 = vunpack.c.h.b16 %v2094
        %v2141 = vunpack.c.l.b16 %v2095
        %v2142 = vunpack.c.h.b16 %v2095
        %v2143 = vunpack.c.l.b16 %v2096
        %v2144 = vunpack.c.h.b16 %v2096
        %v2145 = vpack.c.b16 %v2121, %v2113
        %v2146 = vpack.c.b16 %v2122, %v2114
        %v2147 = vpack.c.b16 %v2123, %v2115
        %v2148 = vpack.c.b16 %v2124, %v2116
        %v2149 = vpack.c.b16 %v2125, %v2117
        %v2150 = vpack.c.b16 %v2126, %v2118
        %v2151 = vpack.c.b16 %v2127, %v2119
        %v2152 = vpack.c.b16 %v2128, %v2120
        %v2153 = vpack.c.b16 %v2137, %v2129
        %v2154 = vpack.c.b16 %v2138, %v2130
        %v2155 = vpack.c.b16 %v2139, %v2131
        %v2156 = vpack.c.b16 %v2140, %v2132
        %v2157 = vpack.c.b16 %v2141, %v2133
        %v2158 = vpack.c.b16 %v2142, %v2134
        %v2159 = vpack.c.b16 %v2143, %v2135
        %v2160 = vpack.c.b16 %v2144, %v2136
        %vm2177 = vcmask 261120
        %v2179 = vsel %vm2177, %v2073, 0
        %v2182 = vsel %vm2177, %v2074, 0
        %v2185 = vsel %vm2177, %v2075, 0
        %v2188 = vsel %vm2177, %v2076, 0
        %v2191 = vsel %vm2177, %v2077, 0
        %v2194 = vsel %vm2177, %v2078, 0
        %v2197 = vsel %vm2177, %v2079, 0
        %v2200 = vsel %vm2177, %v2080, 0
        %2202 = vmatprep.subr.bf16.mxu0 0
        %2203 = vmatpush1.bf16.msra.mxu0 0
        %2204 = vmatprep.subr.bf16.mxu0 0
        %2205 = vmatpush1.bf16.msra.mxu0 0
        %2206 = vmatprep.subr.bf16.mxu0 0
        %2207 = vmatpush1.bf16.msra.mxu0 0
        %2208 = vmatprep.subr.bf16.mxu0 0
        %2209 = vmatpush1.bf16.msra.mxu0 0
        %2210 = vmatprep.subr.bf16.mxu0 0
        %2211 = vmatpush1.bf16.msra.mxu0 0
        %2212 = vmatprep.subr.bf16.mxu0 0
        %2213 = vmatpush1.bf16.msra.mxu0 0
        %2214 = vmatprep.subr.bf16.mxu0 %v2154
        %2215 = vmatpush1.bf16.msra.mxu0 %v2153
        %2216 = vmatprep.subr.bf16.mxu0 %v2146
        %2217 = vmatpush1.bf16.msra.mxu0 %v2145
        %2218 = vmatprep.subr.bf16.mxu0 0
        %2219 = vmatpush2.bf16.msra.mxu0 0
        %2220 = vmatprep.subr.bf16.mxu0 0
        %2221 = vmatpush2.bf16.msra.mxu0 0
        %2222 = vmatprep.subr.bf16.mxu0 0
        %2223 = vmatpush2.bf16.msra.mxu0 0
        %2224 = vmatprep.subr.bf16.mxu0 0
        %2225 = vmatpush2.bf16.msra.mxu0 0
        %2226 = vmatprep.subr.bf16.mxu0 0
        %2227 = vmatpush2.bf16.msra.mxu0 0
        %2228 = vmatprep.subr.bf16.mxu0 0
        %2229 = vmatpush2.bf16.msra.mxu0 0
        %2230 = vmatprep.subr.bf16.mxu0 0
        %2231 = vmatpush2.bf16.msra.mxu0 0
        %2232 = vmatprep.subr.bf16.mxu0 0
        %2233 = vmatpush2.bf16.msra.mxu0 0
        %2234 = vmatprep.mubr.bf16.mxu0 0
        %2235 = vmatmul.mubr.bf16.gmra.mxu0 %v2179
        %v2236 = vpop.f32.mrf.mxu0
        %v2237 = vadd.f32 0.0, %v2236
        %v2238 = vpop.f32.mrf.mxu0
        %v2239 = vadd.f32 0.0, %v2238
        %v2240 = vpop.f32.mrf.mxu0
        %v2241 = vadd.f32 0.0, %v2240
        %v2242 = vpop.f32.mrf.mxu0
        %v2243 = vadd.f32 0.0, %v2242
        %2244 = vmatprep.mubr.bf16.mxu0 0
        %2245 = vmatmul.mubr.bf16.gmra.mxu0 %v2182
        %v2246 = vpop.f32.mrf.mxu0
        %v2247 = vadd.f32 0.0, %v2246
        %v2248 = vpop.f32.mrf.mxu0
        %v2249 = vadd.f32 0.0, %v2248
        %v2250 = vpop.f32.mrf.mxu0
        %v2251 = vadd.f32 0.0, %v2250
        %v2252 = vpop.f32.mrf.mxu0
        %v2253 = vadd.f32 0.0, %v2252
        %2254 = vmatprep.mubr.bf16.mxu0 0
        %2255 = vmatmul.mubr.bf16.gmra.mxu0 %v2185
        %v2256 = vpop.f32.mrf.mxu0
        %v2257 = vadd.f32 0.0, %v2256
        %v2258 = vpop.f32.mrf.mxu0
        %v2259 = vadd.f32 0.0, %v2258
        %v2260 = vpop.f32.mrf.mxu0
        %v2261 = vadd.f32 0.0, %v2260
        %v2262 = vpop.f32.mrf.mxu0
        %v2263 = vadd.f32 0.0, %v2262
        %2264 = vmatprep.mubr.bf16.mxu0 0
        %2265 = vmatmul.mubr.bf16.gmra.mxu0 %v2188
        %v2266 = vpop.f32.mrf.mxu0
        %v2267 = vadd.f32 0.0, %v2266
        %v2268 = vpop.f32.mrf.mxu0
        %v2269 = vadd.f32 0.0, %v2268
        %v2270 = vpop.f32.mrf.mxu0
        %v2271 = vadd.f32 0.0, %v2270
        %v2272 = vpop.f32.mrf.mxu0
        %v2273 = vadd.f32 0.0, %v2272
        %2274 = vmatprep.mubr.bf16.mxu0 0
        %2275 = vmatmul.mubr.bf16.gmra.mxu0 %v2191
        %v2276 = vpop.f32.mrf.mxu0
        %v2277 = vadd.f32 0.0, %v2276
        %v2278 = vpop.f32.mrf.mxu0
        %v2279 = vadd.f32 0.0, %v2278
        %v2280 = vpop.f32.mrf.mxu0
        %v2281 = vadd.f32 0.0, %v2280
        %v2282 = vpop.f32.mrf.mxu0
        %v2283 = vadd.f32 0.0, %v2282
        %2284 = vmatprep.mubr.bf16.mxu0 0
        %2285 = vmatmul.mubr.bf16.gmra.mxu0 %v2194
        %v2286 = vpop.f32.mrf.mxu0
        %v2287 = vadd.f32 0.0, %v2286
        %v2288 = vpop.f32.mrf.mxu0
        %v2289 = vadd.f32 0.0, %v2288
        %v2290 = vpop.f32.mrf.mxu0
        %v2291 = vadd.f32 0.0, %v2290
        %v2292 = vpop.f32.mrf.mxu0
        %v2293 = vadd.f32 0.0, %v2292
        %2294 = vmatprep.mubr.bf16.mxu0 0
        %2295 = vmatmul.mubr.bf16.gmra.mxu0 %v2197
        %v2296 = vpop.f32.mrf.mxu0
        %v2297 = vadd.f32 0.0, %v2296
        %v2298 = vpop.f32.mrf.mxu0
        %v2299 = vadd.f32 0.0, %v2298
        %v2300 = vpop.f32.mrf.mxu0
        %v2301 = vadd.f32 0.0, %v2300
        %v2302 = vpop.f32.mrf.mxu0
        %v2303 = vadd.f32 0.0, %v2302
        %2304 = vmatprep.mubr.bf16.mxu0 0
        %2305 = vmatmul.mubr.bf16.gmra.mxu0 %v2200
        %v2306 = vpop.f32.mrf.mxu0
        %v2307 = vadd.f32 0.0, %v2306
        %v2308 = vpop.f32.mrf.mxu0
        %v2309 = vadd.f32 0.0, %v2308
        %v2310 = vpop.f32.mrf.mxu0
        %v2311 = vadd.f32 0.0, %v2310
        %v2312 = vpop.f32.mrf.mxu0
        %v2313 = vadd.f32 0.0, %v2312
        %2314 = vdwg.mxu0
        %2315 = vmatprep.subr.bf16.mxu0 0
        %2316 = vmatpush1.bf16.msra.mxu0 0
        %2317 = vmatprep.subr.bf16.mxu0 0
        %2318 = vmatpush1.bf16.msra.mxu0 0
        %2319 = vmatprep.subr.bf16.mxu0 0
        %2320 = vmatpush1.bf16.msra.mxu0 0
        %2321 = vmatprep.subr.bf16.mxu0 0
        %2322 = vmatpush1.bf16.msra.mxu0 0
        %2323 = vmatprep.subr.bf16.mxu0 0
        %2324 = vmatpush1.bf16.msra.mxu0 0
        %2325 = vmatprep.subr.bf16.mxu0 0
        %2326 = vmatpush1.bf16.msra.mxu0 0
        %2327 = vmatprep.subr.bf16.mxu0 %v2156
        %2328 = vmatpush1.bf16.msra.mxu0 %v2155
        %2329 = vmatprep.subr.bf16.mxu0 %v2148
        %2330 = vmatpush1.bf16.msra.mxu0 %v2147
        %2331 = vmatprep.subr.bf16.mxu0 0
        %2332 = vmatpush2.bf16.msra.mxu0 0
        %2333 = vmatprep.subr.bf16.mxu0 0
        %2334 = vmatpush2.bf16.msra.mxu0 0
        %2335 = vmatprep.subr.bf16.mxu0 0
        %2336 = vmatpush2.bf16.msra.mxu0 0
        %2337 = vmatprep.subr.bf16.mxu0 0
        %2338 = vmatpush2.bf16.msra.mxu0 0
        %2339 = vmatprep.subr.bf16.mxu0 0
        %2340 = vmatpush2.bf16.msra.mxu0 0
        %2341 = vmatprep.subr.bf16.mxu0 0
        %2342 = vmatpush2.bf16.msra.mxu0 0
        %2343 = vmatprep.subr.bf16.mxu0 0
        %2344 = vmatpush2.bf16.msra.mxu0 0
        %2345 = vmatprep.subr.bf16.mxu0 0
        %2346 = vmatpush2.bf16.msra.mxu0 0
        %2347 = vmatprep.mubr.bf16.mxu0 0
        %2348 = vmatmul.mubr.bf16.gmra.mxu0 %v2179
        %v2349 = vpop.f32.mrf.mxu0
        %v2350 = vadd.f32 0.0, %v2349
        %v2351 = vpop.f32.mrf.mxu0
        %v2352 = vadd.f32 0.0, %v2351
        %v2353 = vpop.f32.mrf.mxu0
        %v2354 = vadd.f32 0.0, %v2353
        %v2355 = vpop.f32.mrf.mxu0
        %v2356 = vadd.f32 0.0, %v2355
        %2357 = vmatprep.mubr.bf16.mxu0 0
        %2358 = vmatmul.mubr.bf16.gmra.mxu0 %v2182
        %v2359 = vpop.f32.mrf.mxu0
        %v2360 = vadd.f32 0.0, %v2359
        %v2361 = vpop.f32.mrf.mxu0
        %v2362 = vadd.f32 0.0, %v2361
        %v2363 = vpop.f32.mrf.mxu0
        %v2364 = vadd.f32 0.0, %v2363
        %v2365 = vpop.f32.mrf.mxu0
        %v2366 = vadd.f32 0.0, %v2365
        %2367 = vmatprep.mubr.bf16.mxu0 0
        %2368 = vmatmul.mubr.bf16.gmra.mxu0 %v2185
        %v2369 = vpop.f32.mrf.mxu0
        %v2370 = vadd.f32 0.0, %v2369
        %v2371 = vpop.f32.mrf.mxu0
        %v2372 = vadd.f32 0.0, %v2371
        %v2373 = vpop.f32.mrf.mxu0
        %v2374 = vadd.f32 0.0, %v2373
        %v2375 = vpop.f32.mrf.mxu0
        %v2376 = vadd.f32 0.0, %v2375
        %2377 = vmatprep.mubr.bf16.mxu0 0
        %2378 = vmatmul.mubr.bf16.gmra.mxu0 %v2188
        %v2379 = vpop.f32.mrf.mxu0
        %v2380 = vadd.f32 0.0, %v2379
        %v2381 = vpop.f32.mrf.mxu0
        %v2382 = vadd.f32 0.0, %v2381
        %v2383 = vpop.f32.mrf.mxu0
        %v2384 = vadd.f32 0.0, %v2383
        %v2385 = vpop.f32.mrf.mxu0
        %v2386 = vadd.f32 0.0, %v2385
        %2387 = vmatprep.mubr.bf16.mxu0 0
        %2388 = vmatmul.mubr.bf16.gmra.mxu0 %v2191
        %v2389 = vpop.f32.mrf.mxu0
        %v2390 = vadd.f32 0.0, %v2389
        %v2391 = vpop.f32.mrf.mxu0
        %v2392 = vadd.f32 0.0, %v2391
        %v2393 = vpop.f32.mrf.mxu0
        %v2394 = vadd.f32 0.0, %v2393
        %v2395 = vpop.f32.mrf.mxu0
        %v2396 = vadd.f32 0.0, %v2395
        %2397 = vmatprep.mubr.bf16.mxu0 0
        %2398 = vmatmul.mubr.bf16.gmra.mxu0 %v2194
        %v2399 = vpop.f32.mrf.mxu0
        %v2400 = vadd.f32 0.0, %v2399
        %v2401 = vpop.f32.mrf.mxu0
        %v2402 = vadd.f32 0.0, %v2401
        %v2403 = vpop.f32.mrf.mxu0
        %v2404 = vadd.f32 0.0, %v2403
        %v2405 = vpop.f32.mrf.mxu0
        %v2406 = vadd.f32 0.0, %v2405
        %2407 = vmatprep.mubr.bf16.mxu0 0
        %2408 = vmatmul.mubr.bf16.gmra.mxu0 %v2197
        %v2409 = vpop.f32.mrf.mxu0
        %v2410 = vadd.f32 0.0, %v2409
        %v2411 = vpop.f32.mrf.mxu0
        %v2412 = vadd.f32 0.0, %v2411
        %v2413 = vpop.f32.mrf.mxu0
        %v2414 = vadd.f32 0.0, %v2413
        %v2415 = vpop.f32.mrf.mxu0
        %v2416 = vadd.f32 0.0, %v2415
        %2417 = vmatprep.mubr.bf16.mxu0 0
        %2418 = vmatmul.mubr.bf16.gmra.mxu0 %v2200
        %v2419 = vpop.f32.mrf.mxu0
        %v2420 = vadd.f32 0.0, %v2419
        %v2421 = vpop.f32.mrf.mxu0
        %v2422 = vadd.f32 0.0, %v2421
        %v2423 = vpop.f32.mrf.mxu0
        %v2424 = vadd.f32 0.0, %v2423
        %v2425 = vpop.f32.mrf.mxu0
        %v2426 = vadd.f32 0.0, %v2425
        %2427 = vdwg.mxu0
        %2428 = vmatprep.subr.bf16.mxu0 0
        %2429 = vmatpush1.bf16.msra.mxu0 0
        %2430 = vmatprep.subr.bf16.mxu0 0
        %2431 = vmatpush1.bf16.msra.mxu0 0
        %2432 = vmatprep.subr.bf16.mxu0 0
        %2433 = vmatpush1.bf16.msra.mxu0 0
        %2434 = vmatprep.subr.bf16.mxu0 0
        %2435 = vmatpush1.bf16.msra.mxu0 0
        %2436 = vmatprep.subr.bf16.mxu0 0
        %2437 = vmatpush1.bf16.msra.mxu0 0
        %2438 = vmatprep.subr.bf16.mxu0 0
        %2439 = vmatpush1.bf16.msra.mxu0 0
        %2440 = vmatprep.subr.bf16.mxu0 %v2158
        %2441 = vmatpush1.bf16.msra.mxu0 %v2157
        %2442 = vmatprep.subr.bf16.mxu0 %v2150
        %2443 = vmatpush1.bf16.msra.mxu0 %v2149
        %2444 = vmatprep.subr.bf16.mxu0 0
        %2445 = vmatpush2.bf16.msra.mxu0 0
        %2446 = vmatprep.subr.bf16.mxu0 0
        %2447 = vmatpush2.bf16.msra.mxu0 0
        %2448 = vmatprep.subr.bf16.mxu0 0
        %2449 = vmatpush2.bf16.msra.mxu0 0
        %2450 = vmatprep.subr.bf16.mxu0 0
        %2451 = vmatpush2.bf16.msra.mxu0 0
        %2452 = vmatprep.subr.bf16.mxu0 0
        %2453 = vmatpush2.bf16.msra.mxu0 0
        %2454 = vmatprep.subr.bf16.mxu0 0
        %2455 = vmatpush2.bf16.msra.mxu0 0
        %2456 = vmatprep.subr.bf16.mxu0 0
        %2457 = vmatpush2.bf16.msra.mxu0 0
        %2458 = vmatprep.subr.bf16.mxu0 0
        %2459 = vmatpush2.bf16.msra.mxu0 0
        %2460 = vmatprep.mubr.bf16.mxu0 0
        %2461 = vmatmul.mubr.bf16.gmra.mxu0 %v2179
        %v2462 = vpop.f32.mrf.mxu0
        %v2463 = vadd.f32 0.0, %v2462
        %v2464 = vpop.f32.mrf.mxu0
        %v2465 = vadd.f32 0.0, %v2464
        %v2466 = vpop.f32.mrf.mxu0
        %v2467 = vadd.f32 0.0, %v2466
        %v2468 = vpop.f32.mrf.mxu0
        %v2469 = vadd.f32 0.0, %v2468
        %2470 = vmatprep.mubr.bf16.mxu0 0
        %2471 = vmatmul.mubr.bf16.gmra.mxu0 %v2182
        %v2472 = vpop.f32.mrf.mxu0
        %v2473 = vadd.f32 0.0, %v2472
        %v2474 = vpop.f32.mrf.mxu0
        %v2475 = vadd.f32 0.0, %v2474
        %v2476 = vpop.f32.mrf.mxu0
        %v2477 = vadd.f32 0.0, %v2476
        %v2478 = vpop.f32.mrf.mxu0
        %v2479 = vadd.f32 0.0, %v2478
        %2480 = vmatprep.mubr.bf16.mxu0 0
        %2481 = vmatmul.mubr.bf16.gmra.mxu0 %v2185
        %v2482 = vpop.f32.mrf.mxu0
        %v2483 = vadd.f32 0.0, %v2482
        %v2484 = vpop.f32.mrf.mxu0
        %v2485 = vadd.f32 0.0, %v2484
        %v2486 = vpop.f32.mrf.mxu0
        %v2487 = vadd.f32 0.0, %v2486
        %v2488 = vpop.f32.mrf.mxu0
        %v2489 = vadd.f32 0.0, %v2488
        %2490 = vmatprep.mubr.bf16.mxu0 0
        %2491 = vmatmul.mubr.bf16.gmra.mxu0 %v2188
        %v2492 = vpop.f32.mrf.mxu0
        %v2493 = vadd.f32 0.0, %v2492
        %v2494 = vpop.f32.mrf.mxu0
        %v2495 = vadd.f32 0.0, %v2494
        %v2496 = vpop.f32.mrf.mxu0
        %v2497 = vadd.f32 0.0, %v2496
        %v2498 = vpop.f32.mrf.mxu0
        %v2499 = vadd.f32 0.0, %v2498
        %2500 = vmatprep.mubr.bf16.mxu0 0
        %2501 = vmatmul.mubr.bf16.gmra.mxu0 %v2191
        %v2502 = vpop.f32.mrf.mxu0
        %v2503 = vadd.f32 0.0, %v2502
        %v2504 = vpop.f32.mrf.mxu0
        %v2505 = vadd.f32 0.0, %v2504
        %v2506 = vpop.f32.mrf.mxu0
        %v2507 = vadd.f32 0.0, %v2506
        %v2508 = vpop.f32.mrf.mxu0
        %v2509 = vadd.f32 0.0, %v2508
        %2510 = vmatprep.mubr.bf16.mxu0 0
        %2511 = vmatmul.mubr.bf16.gmra.mxu0 %v2194
        %v2512 = vpop.f32.mrf.mxu0
        %v2513 = vadd.f32 0.0, %v2512
        %v2514 = vpop.f32.mrf.mxu0
        %v2515 = vadd.f32 0.0, %v2514
        %v2516 = vpop.f32.mrf.mxu0
        %v2517 = vadd.f32 0.0, %v2516
        %v2518 = vpop.f32.mrf.mxu0
        %v2519 = vadd.f32 0.0, %v2518
        %2520 = vmatprep.mubr.bf16.mxu0 0
        %2521 = vmatmul.mubr.bf16.gmra.mxu0 %v2197
        %v2522 = vpop.f32.mrf.mxu0
        %v2523 = vadd.f32 0.0, %v2522
        %v2524 = vpop.f32.mrf.mxu0
        %v2525 = vadd.f32 0.0, %v2524
        %v2526 = vpop.f32.mrf.mxu0
        %v2527 = vadd.f32 0.0, %v2526
        %v2528 = vpop.f32.mrf.mxu0
        %v2529 = vadd.f32 0.0, %v2528
        %2530 = vmatprep.mubr.bf16.mxu0 0
        %2531 = vmatmul.mubr.bf16.gmra.mxu0 %v2200
        %v2532 = vpop.f32.mrf.mxu0
        %v2533 = vadd.f32 0.0, %v2532
        %v2534 = vpop.f32.mrf.mxu0
        %v2535 = vadd.f32 0.0, %v2534
        %v2536 = vpop.f32.mrf.mxu0
        %v2537 = vadd.f32 0.0, %v2536
        %v2538 = vpop.f32.mrf.mxu0
        %v2539 = vadd.f32 0.0, %v2538
        %2540 = vdwg.mxu0
        %2541 = vmatprep.subr.bf16.mxu0 0
        %2542 = vmatpush1.bf16.msra.mxu0 0
        %2543 = vmatprep.subr.bf16.mxu0 0
        %2544 = vmatpush1.bf16.msra.mxu0 0
        %2545 = vmatprep.subr.bf16.mxu0 0
        %2546 = vmatpush1.bf16.msra.mxu0 0
        %2547 = vmatprep.subr.bf16.mxu0 0
        %2548 = vmatpush1.bf16.msra.mxu0 0
        %2549 = vmatprep.subr.bf16.mxu0 0
        %2550 = vmatpush1.bf16.msra.mxu0 0
        %2551 = vmatprep.subr.bf16.mxu0 0
        %2552 = vmatpush1.bf16.msra.mxu0 0
        %2553 = vmatprep.subr.bf16.mxu0 %v2160
        %2554 = vmatpush1.bf16.msra.mxu0 %v2159
        %2555 = vmatprep.subr.bf16.mxu0 %v2152
        %2556 = vmatpush1.bf16.msra.mxu0 %v2151
        %2557 = vmatprep.subr.bf16.mxu0 0
        %2558 = vmatpush2.bf16.msra.mxu0 0
        %2559 = vmatprep.subr.bf16.mxu0 0
        %2560 = vmatpush2.bf16.msra.mxu0 0
        %2561 = vmatprep.subr.bf16.mxu0 0
        %2562 = vmatpush2.bf16.msra.mxu0 0
        %2563 = vmatprep.subr.bf16.mxu0 0
        %2564 = vmatpush2.bf16.msra.mxu0 0
        %2565 = vmatprep.subr.bf16.mxu0 0
        %2566 = vmatpush2.bf16.msra.mxu0 0
        %2567 = vmatprep.subr.bf16.mxu0 0
        %2568 = vmatpush2.bf16.msra.mxu0 0
        %2569 = vmatprep.subr.bf16.mxu0 0
        %2570 = vmatpush2.bf16.msra.mxu0 0
        %2571 = vmatprep.subr.bf16.mxu0 0
        %2572 = vmatpush2.bf16.msra.mxu0 0
        %2573 = vmatprep.mubr.bf16.mxu0 0
        %2574 = vmatmul.mubr.bf16.gmra.mxu0 %v2179
        %v2575 = vpop.f32.mrf.mxu0
        %v2576 = vadd.f32 0.0, %v2575
        %v2577 = vpop.f32.mrf.mxu0
        %v2578 = vadd.f32 0.0, %v2577
        %v2579 = vpop.f32.mrf.mxu0
        %v2580 = vadd.f32 0.0, %v2579
        %v2581 = vpop.f32.mrf.mxu0
        %v2582 = vadd.f32 0.0, %v2581
        %2583 = vmatprep.mubr.bf16.mxu0 0
        %2584 = vmatmul.mubr.bf16.gmra.mxu0 %v2182
        %v2585 = vpop.f32.mrf.mxu0
        %v2586 = vadd.f32 0.0, %v2585
        %v2587 = vpop.f32.mrf.mxu0
        %v2588 = vadd.f32 0.0, %v2587
        %v2589 = vpop.f32.mrf.mxu0
        %v2590 = vadd.f32 0.0, %v2589
        %v2591 = vpop.f32.mrf.mxu0
        %v2592 = vadd.f32 0.0, %v2591
        %2593 = vmatprep.mubr.bf16.mxu0 0
        %2594 = vmatmul.mubr.bf16.gmra.mxu0 %v2185
        %v2595 = vpop.f32.mrf.mxu0
        %v2596 = vadd.f32 0.0, %v2595
        %v2597 = vpop.f32.mrf.mxu0
        %v2598 = vadd.f32 0.0, %v2597
        %v2599 = vpop.f32.mrf.mxu0
        %v2600 = vadd.f32 0.0, %v2599
        %v2601 = vpop.f32.mrf.mxu0
        %v2602 = vadd.f32 0.0, %v2601
        %2603 = vmatprep.mubr.bf16.mxu0 0
        %2604 = vmatmul.mubr.bf16.gmra.mxu0 %v2188
        %v2605 = vpop.f32.mrf.mxu0
        %v2606 = vadd.f32 0.0, %v2605
        %v2607 = vpop.f32.mrf.mxu0
        %v2608 = vadd.f32 0.0, %v2607
        %v2609 = vpop.f32.mrf.mxu0
        %v2610 = vadd.f32 0.0, %v2609
        %v2611 = vpop.f32.mrf.mxu0
        %v2612 = vadd.f32 0.0, %v2611
        %2613 = vmatprep.mubr.bf16.mxu0 0
        %2614 = vmatmul.mubr.bf16.gmra.mxu0 %v2191
        %v2615 = vpop.f32.mrf.mxu0
        %v2616 = vadd.f32 0.0, %v2615
        %v2617 = vpop.f32.mrf.mxu0
        %v2618 = vadd.f32 0.0, %v2617
        %v2619 = vpop.f32.mrf.mxu0
        %v2620 = vadd.f32 0.0, %v2619
        %v2621 = vpop.f32.mrf.mxu0
        %v2622 = vadd.f32 0.0, %v2621
        %2623 = vmatprep.mubr.bf16.mxu0 0
        %2624 = vmatmul.mubr.bf16.gmra.mxu0 %v2194
        %v2625 = vpop.f32.mrf.mxu0
        %v2626 = vadd.f32 0.0, %v2625
        %v2627 = vpop.f32.mrf.mxu0
        %v2628 = vadd.f32 0.0, %v2627
        %v2629 = vpop.f32.mrf.mxu0
        %v2630 = vadd.f32 0.0, %v2629
        %v2631 = vpop.f32.mrf.mxu0
        %v2632 = vadd.f32 0.0, %v2631
        %2633 = vmatprep.mubr.bf16.mxu0 0
        %2634 = vmatmul.mubr.bf16.gmra.mxu0 %v2197
        %v2635 = vpop.f32.mrf.mxu0
        %v2636 = vadd.f32 0.0, %v2635
        %v2637 = vpop.f32.mrf.mxu0
        %v2638 = vadd.f32 0.0, %v2637
        %v2639 = vpop.f32.mrf.mxu0
        %v2640 = vadd.f32 0.0, %v2639
        %v2641 = vpop.f32.mrf.mxu0
        %v2642 = vadd.f32 0.0, %v2641
        %2643 = vmatprep.mubr.bf16.mxu0 0
        %2644 = vmatmul.mubr.bf16.gmra.mxu0 %v2200
        %v2645 = vpop.f32.mrf.mxu0
        %v2646 = vadd.f32 0.0, %v2645
        %v2647 = vpop.f32.mrf.mxu0
        %v2648 = vadd.f32 0.0, %v2647
        %v2649 = vpop.f32.mrf.mxu0
        %v2650 = vadd.f32 0.0, %v2649
        %v2651 = vpop.f32.mrf.mxu0
        %v2652 = vadd.f32 0.0, %v2651
        %2653 = vdwg.mxu0
        %v2654 = vmul.f32 %v2237, %v1656
        %v2655 = vmul.f32 %v2239, %v1658
        %v2656 = vmul.f32 %v2350, %v1769
        %v2657 = vmul.f32 %v2352, %v1771
        %v2658 = vmul.f32 %v2463, %v1882
        %v2659 = vmul.f32 %v2465, %v1884
        %v2660 = vmul.f32 %v2576, %v1995
        %v2661 = vmul.f32 %v2578, %v1997
        %v2662 = vmul.f32 %v2241, %v1660
        %v2663 = vmul.f32 %v2243, %v1662
        %v2664 = vmul.f32 %v2354, %v1773
        %v2665 = vmul.f32 %v2356, %v1775
        %v2666 = vmul.f32 %v2467, %v1886
        %v2667 = vmul.f32 %v2469, %v1888
        %v2668 = vmul.f32 %v2580, %v1999
        %v2669 = vmul.f32 %v2582, %v2001
        %v2670 = vmul.f32 %v2247, %v1666
        %v2671 = vmul.f32 %v2249, %v1668
        %v2672 = vmul.f32 %v2360, %v1779
        %v2673 = vmul.f32 %v2362, %v1781
        %v2674 = vmul.f32 %v2473, %v1892
        %v2675 = vmul.f32 %v2475, %v1894
        %v2676 = vmul.f32 %v2586, %v2005
        %v2677 = vmul.f32 %v2588, %v2007
        %v2678 = vmul.f32 %v2251, %v1670
        %v2679 = vmul.f32 %v2253, %v1672
        %v2680 = vmul.f32 %v2364, %v1783
        %v2681 = vmul.f32 %v2366, %v1785
        %v2682 = vmul.f32 %v2477, %v1896
        %v2683 = vmul.f32 %v2479, %v1898
        %v2684 = vmul.f32 %v2590, %v2009
        %v2685 = vmul.f32 %v2592, %v2011
        %v2686 = vmul.f32 %v2257, %v1676
        %v2687 = vmul.f32 %v2259, %v1678
        %v2688 = vmul.f32 %v2370, %v1789
        %v2689 = vmul.f32 %v2372, %v1791
        %v2690 = vmul.f32 %v2483, %v1902
        %v2691 = vmul.f32 %v2485, %v1904
        %v2692 = vmul.f32 %v2596, %v2015
        %v2693 = vmul.f32 %v2598, %v2017
        %v2694 = vmul.f32 %v2261, %v1680
        %v2695 = vmul.f32 %v2263, %v1682
        %v2696 = vmul.f32 %v2374, %v1793
        %v2697 = vmul.f32 %v2376, %v1795
        %v2698 = vmul.f32 %v2487, %v1906
        %v2699 = vmul.f32 %v2489, %v1908
        %v2700 = vmul.f32 %v2600, %v2019
        %v2701 = vmul.f32 %v2602, %v2021
        %v2702 = vmul.f32 %v2267, %v1686
        %v2703 = vmul.f32 %v2269, %v1688
        %v2704 = vmul.f32 %v2380, %v1799
        %v2705 = vmul.f32 %v2382, %v1801
        %v2706 = vmul.f32 %v2493, %v1912
        %v2707 = vmul.f32 %v2495, %v1914
        %v2708 = vmul.f32 %v2606, %v2025
        %v2709 = vmul.f32 %v2608, %v2027
        %v2710 = vmul.f32 %v2271, %v1690
        %v2711 = vmul.f32 %v2273, %v1692
        %v2712 = vmul.f32 %v2384, %v1803
        %v2713 = vmul.f32 %v2386, %v1805
        %v2714 = vmul.f32 %v2497, %v1916
        %v2715 = vmul.f32 %v2499, %v1918
        %v2716 = vmul.f32 %v2610, %v2029
        %v2717 = vmul.f32 %v2612, %v2031
        %v2718 = vmul.f32 %v2277, %v1696
        %v2719 = vmul.f32 %v2279, %v1698
        %v2720 = vmul.f32 %v2390, %v1809
        %v2721 = vmul.f32 %v2392, %v1811
        %v2722 = vmul.f32 %v2503, %v1922
        %v2723 = vmul.f32 %v2505, %v1924
        %v2724 = vmul.f32 %v2616, %v2035
        %v2725 = vmul.f32 %v2618, %v2037
        %v2726 = vmul.f32 %v2281, %v1700
        %v2727 = vmul.f32 %v2283, %v1702
        %v2728 = vmul.f32 %v2394, %v1813
        %v2729 = vmul.f32 %v2396, %v1815
        %v2730 = vmul.f32 %v2507, %v1926
        %v2731 = vmul.f32 %v2509, %v1928
        %v2732 = vmul.f32 %v2620, %v2039
        %v2733 = vmul.f32 %v2622, %v2041
        %v2734 = vmul.f32 %v2287, %v1706
        %v2735 = vmul.f32 %v2289, %v1708
        %v2736 = vmul.f32 %v2400, %v1819
        %v2737 = vmul.f32 %v2402, %v1821
        %v2738 = vmul.f32 %v2513, %v1932
        %v2739 = vmul.f32 %v2515, %v1934
        %v2740 = vmul.f32 %v2626, %v2045
        %v2741 = vmul.f32 %v2628, %v2047
        %v2742 = vmul.f32 %v2291, %v1710
        %v2743 = vmul.f32 %v2293, %v1712
        %v2744 = vmul.f32 %v2404, %v1823
        %v2745 = vmul.f32 %v2406, %v1825
        %v2746 = vmul.f32 %v2517, %v1936
        %v2747 = vmul.f32 %v2519, %v1938
        %v2748 = vmul.f32 %v2630, %v2049
        %v2749 = vmul.f32 %v2632, %v2051
        %v2750 = vmul.f32 %v2297, %v1716
        %v2751 = vmul.f32 %v2299, %v1718
        %v2752 = vmul.f32 %v2410, %v1829
        %v2753 = vmul.f32 %v2412, %v1831
        %v2754 = vmul.f32 %v2523, %v1942
        %v2755 = vmul.f32 %v2525, %v1944
        %v2756 = vmul.f32 %v2636, %v2055
        %v2757 = vmul.f32 %v2638, %v2057
        %v2758 = vmul.f32 %v2301, %v1720
        %v2759 = vmul.f32 %v2303, %v1722
        %v2760 = vmul.f32 %v2414, %v1833
        %v2761 = vmul.f32 %v2416, %v1835
        %v2762 = vmul.f32 %v2527, %v1946
        %v2763 = vmul.f32 %v2529, %v1948
        %v2764 = vmul.f32 %v2640, %v2059
        %v2765 = vmul.f32 %v2642, %v2061
        %v2766 = vmul.f32 %v2307, %v1726
        %v2767 = vmul.f32 %v2309, %v1728
        %v2768 = vmul.f32 %v2420, %v1839
        %v2769 = vmul.f32 %v2422, %v1841
        %v2770 = vmul.f32 %v2533, %v1952
        %v2771 = vmul.f32 %v2535, %v1954
        %v2772 = vmul.f32 %v2646, %v2065
        %v2773 = vmul.f32 %v2648, %v2067
        %v2774 = vmul.f32 %v2311, %v1730
        %v2775 = vmul.f32 %v2313, %v1732
        %v2776 = vmul.f32 %v2424, %v1843
        %v2777 = vmul.f32 %v2426, %v1845
        %v2778 = vmul.f32 %v2537, %v1956
        %v2779 = vmul.f32 %v2539, %v1958
        %v2780 = vmul.f32 %v2650, %v2069
        %v2781 = vmul.f32 %v2652, %v2071
        %v2782 = vpack.c.bf16 %v2662, %v2654
        %v2783 = vpack.c.bf16 %v2663, %v2655
        %v2784 = vpack.c.bf16 %v2664, %v2656
        %v2785 = vpack.c.bf16 %v2665, %v2657
        %v2786 = vpack.c.bf16 %v2666, %v2658
        %v2787 = vpack.c.bf16 %v2667, %v2659
        %v2788 = vpack.c.bf16 %v2668, %v2660
        %v2789 = vpack.c.bf16 %v2669, %v2661
        %v2790 = vpack.c.bf16 %v2678, %v2670
        %v2791 = vpack.c.bf16 %v2679, %v2671
        %v2792 = vpack.c.bf16 %v2680, %v2672
        %v2793 = vpack.c.bf16 %v2681, %v2673
        %v2794 = vpack.c.bf16 %v2682, %v2674
        %v2795 = vpack.c.bf16 %v2683, %v2675
        %v2796 = vpack.c.bf16 %v2684, %v2676
        %v2797 = vpack.c.bf16 %v2685, %v2677
        %v2798 = vpack.c.bf16 %v2694, %v2686
        %v2799 = vpack.c.bf16 %v2695, %v2687
        %v2800 = vpack.c.bf16 %v2696, %v2688
        %v2801 = vpack.c.bf16 %v2697, %v2689
        %v2802 = vpack.c.bf16 %v2698, %v2690
        %v2803 = vpack.c.bf16 %v2699, %v2691
        %v2804 = vpack.c.bf16 %v2700, %v2692
        %v2805 = vpack.c.bf16 %v2701, %v2693
        %v2806 = vpack.c.bf16 %v2710, %v2702
        %v2807 = vpack.c.bf16 %v2711, %v2703
        %v2808 = vpack.c.bf16 %v2712, %v2704
        %v2809 = vpack.c.bf16 %v2713, %v2705
        %v2810 = vpack.c.bf16 %v2714, %v2706
        %v2811 = vpack.c.bf16 %v2715, %v2707
        %v2812 = vpack.c.bf16 %v2716, %v2708
        %v2813 = vpack.c.bf16 %v2717, %v2709
        %v2814 = vpack.c.bf16 %v2726, %v2718
        %v2815 = vpack.c.bf16 %v2727, %v2719
        %v2816 = vpack.c.bf16 %v2728, %v2720
        %v2817 = vpack.c.bf16 %v2729, %v2721
        %v2818 = vpack.c.bf16 %v2730, %v2722
        %v2819 = vpack.c.bf16 %v2731, %v2723
        %v2820 = vpack.c.bf16 %v2732, %v2724
        %v2821 = vpack.c.bf16 %v2733, %v2725
        %v2822 = vpack.c.bf16 %v2742, %v2734
        %v2823 = vpack.c.bf16 %v2743, %v2735
        %v2824 = vpack.c.bf16 %v2744, %v2736
        %v2825 = vpack.c.bf16 %v2745, %v2737
        %v2826 = vpack.c.bf16 %v2746, %v2738
        %v2827 = vpack.c.bf16 %v2747, %v2739
        %v2828 = vpack.c.bf16 %v2748, %v2740
        %v2829 = vpack.c.bf16 %v2749, %v2741
        %v2830 = vpack.c.bf16 %v2758, %v2750
        %v2831 = vpack.c.bf16 %v2759, %v2751
        %v2832 = vpack.c.bf16 %v2760, %v2752
        %v2833 = vpack.c.bf16 %v2761, %v2753
        %v2834 = vpack.c.bf16 %v2762, %v2754
        %v2835 = vpack.c.bf16 %v2763, %v2755
        %v2836 = vpack.c.bf16 %v2764, %v2756
        %v2837 = vpack.c.bf16 %v2765, %v2757
        %v2838 = vpack.c.bf16 %v2774, %v2766
        %v2839 = vpack.c.bf16 %v2775, %v2767
        %v2840 = vpack.c.bf16 %v2776, %v2768
        %v2841 = vpack.c.bf16 %v2777, %v2769
        %v2842 = vpack.c.bf16 %v2778, %v2770
        %v2843 = vpack.c.bf16 %v2779, %v2771
        %v2844 = vpack.c.bf16 %v2780, %v2772
        %v2845 = vpack.c.bf16 %v2781, %v2773
        %v2846 = vld [vmem:[%s7] sm:$0xf]
        %v2847 = vld [vmem:[%s7 + $0x4] sm:$0xf]
        %v2848 = vld [vmem:[%s7 + $0x8] sm:$0xf]
        %v2849 = vld [vmem:[%s7 + $0xc] sm:$0xf]
        %v2850 = vld [vmem:[%s7 + $0x10] sm:$0xf]
        %v2851 = vld [vmem:[%s7 + $0x14] sm:$0xf]
        %v2852 = vld [vmem:[%s7 + $0x18] sm:$0xf]
        %v2853 = vld [vmem:[%s7 + $0x1c] sm:$0xf]
        %v2854 = vld [vmem:[%s7 + $0x20] sm:$0xf]
        %v2855 = vld [vmem:[%s7 + $0x24] sm:$0xf]
        %v2856 = vld [vmem:[%s7 + $0x28] sm:$0xf]
        %v2857 = vld [vmem:[%s7 + $0x2c] sm:$0xf]
        %v2858 = vld [vmem:[%s7 + $0x30] sm:$0xf]
        %v2859 = vld [vmem:[%s7 + $0x34] sm:$0xf]
        %v2860 = vld [vmem:[%s7 + $0x38] sm:$0xf]
        %v2861 = vld [vmem:[%s7 + $0x3c] sm:$0xf]
        %v2862 = vld [vmem:[%s7 + $0x40] sm:$0xf]
        %v2863 = vld [vmem:[%s7 + $0x44] sm:$0xf]
        %v2864 = vld [vmem:[%s7 + $0x48] sm:$0xf]
        %v2865 = vld [vmem:[%s7 + $0x4c] sm:$0xf]
        %v2866 = vld [vmem:[%s7 + $0x50] sm:$0xf]
        %v2867 = vld [vmem:[%s7 + $0x54] sm:$0xf]
        %v2868 = vld [vmem:[%s7 + $0x58] sm:$0xf]
        %v2869 = vld [vmem:[%s7 + $0x5c] sm:$0xf]
        %v2870 = vld [vmem:[%s7 + $0x60] sm:$0xf]
        %v2871 = vld [vmem:[%s7 + $0x64] sm:$0xf]
        %v2872 = vld [vmem:[%s7 + $0x68] sm:$0xf]
        %v2873 = vld [vmem:[%s7 + $0x6c] sm:$0xf]
        %v2874 = vld [vmem:[%s7 + $0x70] sm:$0xf]
        %v2875 = vld [vmem:[%s7 + $0x74] sm:$0xf]
        %v2876 = vld [vmem:[%s7 + $0x78] sm:$0xf]
        %v2877 = vld [vmem:[%s7 + $0x7c] sm:$0xf]
        %v2878 = vld [vmem:[%s7 + $0x80] sm:$0xf]
        %v2879 = vld [vmem:[%s7 + $0x84] sm:$0xf]
        %v2880 = vld [vmem:[%s7 + $0x88] sm:$0xf]
        %v2881 = vld [vmem:[%s7 + $0x8c] sm:$0xf]
        %v2882 = vld [vmem:[%s7 + $0x90] sm:$0xf]
        %v2883 = vld [vmem:[%s7 + $0x94] sm:$0xf]
        %v2884 = vld [vmem:[%s7 + $0x98] sm:$0xf]
        %v2885 = vld [vmem:[%s7 + $0x9c] sm:$0xf]
        %v2886 = vld [vmem:[%s7 + $0xa0] sm:$0xf]
        %v2887 = vld [vmem:[%s7 + $0xa4] sm:$0xf]
        %v2888 = vld [vmem:[%s7 + $0xa8] sm:$0xf]
        %v2889 = vld [vmem:[%s7 + $0xac] sm:$0xf]
        %v2890 = vld [vmem:[%s7 + $0xb0] sm:$0xf]
        %v2891 = vld [vmem:[%s7 + $0xb4] sm:$0xf]
        %v2892 = vld [vmem:[%s7 + $0xb8] sm:$0xf]
        %v2893 = vld [vmem:[%s7 + $0xbc] sm:$0xf]
        %v2894 = vld [vmem:[%s7 + $0xc0] sm:$0xf]
        %v2895 = vld [vmem:[%s7 + $0xc4] sm:$0xf]
        %v2896 = vld [vmem:[%s7 + $0xc8] sm:$0xf]
        %v2897 = vld [vmem:[%s7 + $0xcc] sm:$0xf]
        %v2898 = vld [vmem:[%s7 + $0xd0] sm:$0xf]
        %v2899 = vld [vmem:[%s7 + $0xd4] sm:$0xf]
        %v2900 = vld [vmem:[%s7 + $0xd8] sm:$0xf]
        %v2901 = vld [vmem:[%s7 + $0xdc] sm:$0xf]
        %v2902 = vld [vmem:[%s7 + $0xe0] sm:$0xf]
        %v2903 = vld [vmem:[%s7 + $0xe4] sm:$0xf]
        %v2904 = vld [vmem:[%s7 + $0xe8] sm:$0xf]
        %v2905 = vld [vmem:[%s7 + $0xec] sm:$0xf]
        %v2906 = vld [vmem:[%s7 + $0xf0] sm:$0xf]
        %v2907 = vld [vmem:[%s7 + $0xf4] sm:$0xf]
        %v2908 = vld [vmem:[%s7 + $0xf8] sm:$0xf]
        %v2909 = vld [vmem:[%s7 + $0xfc] sm:$0xf]
        %v2910 = vld [vmem:[%s7 + $0x100] sm:$0xf]
        %v2911 = vld [vmem:[%s7 + $0x104] sm:$0xf]
        %v2912 = vld [vmem:[%s7 + $0x108] sm:$0xf]
        %v2913 = vld [vmem:[%s7 + $0x10c] sm:$0xf]
        %v2914 = vld [vmem:[%s7 + $0x110] sm:$0xf]
        %v2915 = vld [vmem:[%s7 + $0x114] sm:$0xf]
        %v2916 = vld [vmem:[%s7 + $0x118] sm:$0xf]
        %v2917 = vld [vmem:[%s7 + $0x11c] sm:$0xf]
        %v2918 = vld [vmem:[%s7 + $0x120] sm:$0xf]
        %v2919 = vld [vmem:[%s7 + $0x124] sm:$0xf]
        %v2920 = vld [vmem:[%s7 + $0x128] sm:$0xf]
        %v2921 = vld [vmem:[%s7 + $0x12c] sm:$0xf]
        %v2922 = vld [vmem:[%s7 + $0x130] sm:$0xf]
        %v2923 = vld [vmem:[%s7 + $0x134] sm:$0xf]
        %v2924 = vld [vmem:[%s7 + $0x138] sm:$0xf]
        %v2925 = vld [vmem:[%s7 + $0x13c] sm:$0xf]
        %v2926 = vld [vmem:[%s7 + $0x140] sm:$0xf]
        %v2927 = vld [vmem:[%s7 + $0x144] sm:$0xf]
        %v2928 = vld [vmem:[%s7 + $0x148] sm:$0xf]
        %v2929 = vld [vmem:[%s7 + $0x14c] sm:$0xf]
        %v2930 = vld [vmem:[%s7 + $0x150] sm:$0xf]
        %v2931 = vld [vmem:[%s7 + $0x154] sm:$0xf]
        %v2932 = vld [vmem:[%s7 + $0x158] sm:$0xf]
        %v2933 = vld [vmem:[%s7 + $0x15c] sm:$0xf]
        %v2934 = vld [vmem:[%s7 + $0x160] sm:$0xf]
        %v2935 = vld [vmem:[%s7 + $0x164] sm:$0xf]
        %v2936 = vld [vmem:[%s7 + $0x168] sm:$0xf]
        %v2937 = vld [vmem:[%s7 + $0x16c] sm:$0xf]
        %v2938 = vld [vmem:[%s7 + $0x170] sm:$0xf]
        %v2939 = vld [vmem:[%s7 + $0x174] sm:$0xf]
        %v2940 = vld [vmem:[%s7 + $0x178] sm:$0xf]
        %v2941 = vld [vmem:[%s7 + $0x17c] sm:$0xf]
        %v2942 = vld [vmem:[%s7 + $0x180] sm:$0xf]
        %v2943 = vld [vmem:[%s7 + $0x184] sm:$0xf]
        %v2944 = vld [vmem:[%s7 + $0x188] sm:$0xf]
        %v2945 = vld [vmem:[%s7 + $0x18c] sm:$0xf]
        %v2946 = vld [vmem:[%s7 + $0x190] sm:$0xf]
        %v2947 = vld [vmem:[%s7 + $0x194] sm:$0xf]
        %v2948 = vld [vmem:[%s7 + $0x198] sm:$0xf]
        %v2949 = vld [vmem:[%s7 + $0x19c] sm:$0xf]
        %v2950 = vld [vmem:[%s7 + $0x1a0] sm:$0xf]
        %v2951 = vld [vmem:[%s7 + $0x1a4] sm:$0xf]
        %v2952 = vld [vmem:[%s7 + $0x1a8] sm:$0xf]
        %v2953 = vld [vmem:[%s7 + $0x1ac] sm:$0xf]
        %v2954 = vld [vmem:[%s7 + $0x1b0] sm:$0xf]
        %v2955 = vld [vmem:[%s7 + $0x1b4] sm:$0xf]
        %v2956 = vld [vmem:[%s7 + $0x1b8] sm:$0xf]
        %v2957 = vld [vmem:[%s7 + $0x1bc] sm:$0xf]
        %v2958 = vld [vmem:[%s7 + $0x1c0] sm:$0xf]
        %v2959 = vld [vmem:[%s7 + $0x1c4] sm:$0xf]
        %v2960 = vld [vmem:[%s7 + $0x1c8] sm:$0xf]
        %v2961 = vld [vmem:[%s7 + $0x1cc] sm:$0xf]
        %v2962 = vld [vmem:[%s7 + $0x1d0] sm:$0xf]
        %v2963 = vld [vmem:[%s7 + $0x1d4] sm:$0xf]
        %v2964 = vld [vmem:[%s7 + $0x1d8] sm:$0xf]
        %v2965 = vld [vmem:[%s7 + $0x1dc] sm:$0xf]
        %v2966 = vld [vmem:[%s7 + $0x1e0] sm:$0xf]
        %v2967 = vld [vmem:[%s7 + $0x1e4] sm:$0xf]
        %v2968 = vld [vmem:[%s7 + $0x1e8] sm:$0xf]
        %v2969 = vld [vmem:[%s7 + $0x1ec] sm:$0xf]
        %v2970 = vld [vmem:[%s7 + $0x1f0] sm:$0xf]
        %v2971 = vld [vmem:[%s7 + $0x1f4] sm:$0xf]
        %v2972 = vld [vmem:[%s7 + $0x1f8] sm:$0xf]
        %v2973 = vld [vmem:[%s7 + $0x1fc] sm:$0xf]
        %v3102 = vunpack.c.l.b16 %v2846
        %v3103 = vunpack.c.l.b16 %v2847
        %v3104 = vunpack.c.l.b16 %v2848
        %v3105 = vunpack.c.l.b16 %v2849
        %v3106 = vunpack.c.l.b16 %v2850
        %v3107 = vunpack.c.l.b16 %v2851
        %v3108 = vunpack.c.l.b16 %v2852
        %v3109 = vunpack.c.l.b16 %v2853
        %v3110 = vunpack.c.l.b16 %v2854
        %v3111 = vunpack.c.l.b16 %v2855
        %v3112 = vunpack.c.l.b16 %v2856
        %v3113 = vunpack.c.l.b16 %v2857
        %v3114 = vunpack.c.l.b16 %v2858
        %v3115 = vunpack.c.l.b16 %v2859
        %v3116 = vunpack.c.l.b16 %v2860
        %v3117 = vunpack.c.l.b16 %v2861
        %v3118 = vunpack.c.l.b16 %v2862
        %v3119 = vunpack.c.l.b16 %v2863
        %v3120 = vunpack.c.l.b16 %v2864
        %v3121 = vunpack.c.l.b16 %v2865
        %v3122 = vunpack.c.l.b16 %v2866
        %v3123 = vunpack.c.l.b16 %v2867
        %v3124 = vunpack.c.l.b16 %v2868
        %v3125 = vunpack.c.l.b16 %v2869
        %v3126 = vunpack.c.l.b16 %v2870
        %v3127 = vunpack.c.l.b16 %v2871
        %v3128 = vunpack.c.l.b16 %v2872
        %v3129 = vunpack.c.l.b16 %v2873
        %v3130 = vunpack.c.l.b16 %v2874
        %v3131 = vunpack.c.l.b16 %v2875
        %v3132 = vunpack.c.l.b16 %v2876
        %v3133 = vunpack.c.l.b16 %v2877
        %v3134 = vunpack.c.l.b16 %v2878
        %v3135 = vunpack.c.l.b16 %v2879
        %v3136 = vunpack.c.l.b16 %v2880
        %v3137 = vunpack.c.l.b16 %v2881
        %v3138 = vunpack.c.l.b16 %v2882
        %v3139 = vunpack.c.l.b16 %v2883
        %v3140 = vunpack.c.l.b16 %v2884
        %v3141 = vunpack.c.l.b16 %v2885
        %v3142 = vunpack.c.l.b16 %v2886
        %v3143 = vunpack.c.l.b16 %v2887
        %v3144 = vunpack.c.l.b16 %v2888
        %v3145 = vunpack.c.l.b16 %v2889
        %v3146 = vunpack.c.l.b16 %v2890
        %v3147 = vunpack.c.l.b16 %v2891
        %v3148 = vunpack.c.l.b16 %v2892
        %v3149 = vunpack.c.l.b16 %v2893
        %v3150 = vunpack.c.l.b16 %v2894
        %v3151 = vunpack.c.l.b16 %v2895
        %v3152 = vunpack.c.l.b16 %v2896
        %v3153 = vunpack.c.l.b16 %v2897
        %v3154 = vunpack.c.l.b16 %v2898
        %v3155 = vunpack.c.l.b16 %v2899
        %v3156 = vunpack.c.l.b16 %v2900
        %v3157 = vunpack.c.l.b16 %v2901
        %v3158 = vunpack.c.l.b16 %v2902
        %v3159 = vunpack.c.l.b16 %v2903
        %v3160 = vunpack.c.l.b16 %v2904
        %v3161 = vunpack.c.l.b16 %v2905
        %v3162 = vunpack.c.l.b16 %v2906
        %v3163 = vunpack.c.l.b16 %v2907
        %v3164 = vunpack.c.l.b16 %v2908
        %v3165 = vunpack.c.l.b16 %v2909
        %v3166 = vunpack.c.l.b16 %v2910
        %v3167 = vunpack.c.l.b16 %v2911
        %v3168 = vunpack.c.l.b16 %v2912
        %v3169 = vunpack.c.l.b16 %v2913
        %v3170 = vunpack.c.l.b16 %v2914
        %v3171 = vunpack.c.l.b16 %v2915
        %v3172 = vunpack.c.l.b16 %v2916
        %v3173 = vunpack.c.l.b16 %v2917
        %v3174 = vunpack.c.l.b16 %v2918
        %v3175 = vunpack.c.l.b16 %v2919
        %v3176 = vunpack.c.l.b16 %v2920
        %v3177 = vunpack.c.l.b16 %v2921
        %v3178 = vunpack.c.l.b16 %v2922
        %v3179 = vunpack.c.l.b16 %v2923
        %v3180 = vunpack.c.l.b16 %v2924
        %v3181 = vunpack.c.l.b16 %v2925
        %v3182 = vunpack.c.l.b16 %v2926
        %v3183 = vunpack.c.l.b16 %v2927
        %v3184 = vunpack.c.l.b16 %v2928
        %v3185 = vunpack.c.l.b16 %v2929
        %v3186 = vunpack.c.l.b16 %v2930
        %v3187 = vunpack.c.l.b16 %v2931
        %v3188 = vunpack.c.l.b16 %v2932
        %v3189 = vunpack.c.l.b16 %v2933
        %v3190 = vunpack.c.l.b16 %v2934
        %v3191 = vunpack.c.l.b16 %v2935
        %v3192 = vunpack.c.l.b16 %v2936
        %v3193 = vunpack.c.l.b16 %v2937
        %v3194 = vunpack.c.l.b16 %v2938
        %v3195 = vunpack.c.l.b16 %v2939
        %v3196 = vunpack.c.l.b16 %v2940
        %v3197 = vunpack.c.l.b16 %v2941
        %v3198 = vunpack.c.l.b16 %v2942
        %v3199 = vunpack.c.l.b16 %v2943
        %v3200 = vunpack.c.l.b16 %v2944
        %v3201 = vunpack.c.l.b16 %v2945
        %v3202 = vunpack.c.l.b16 %v2946
        %v3203 = vunpack.c.l.b16 %v2947
        %v3204 = vunpack.c.l.b16 %v2948
        %v3205 = vunpack.c.l.b16 %v2949
        %v3206 = vunpack.c.l.b16 %v2950
        %v3207 = vunpack.c.l.b16 %v2951
        %v3208 = vunpack.c.l.b16 %v2952
        %v3209 = vunpack.c.l.b16 %v2953
        %v3210 = vunpack.c.l.b16 %v2954
        %v3211 = vunpack.c.l.b16 %v2955
        %v3212 = vunpack.c.l.b16 %v2956
        %v3213 = vunpack.c.l.b16 %v2957
        %v3214 = vunpack.c.l.b16 %v2958
        %v3215 = vunpack.c.l.b16 %v2959
        %v3216 = vunpack.c.l.b16 %v2960
        %v3217 = vunpack.c.l.b16 %v2961
        %v3218 = vunpack.c.l.b16 %v2962
        %v3219 = vunpack.c.l.b16 %v2963
        %v3220 = vunpack.c.l.b16 %v2964
        %v3221 = vunpack.c.l.b16 %v2965
        %v3222 = vunpack.c.l.b16 %v2966
        %v3223 = vunpack.c.l.b16 %v2967
        %v3224 = vunpack.c.l.b16 %v2968
        %v3225 = vunpack.c.l.b16 %v2969
        %v3226 = vunpack.c.l.b16 %v2970
        %v3227 = vunpack.c.l.b16 %v2971
        %v3228 = vunpack.c.l.b16 %v2972
        %v3229 = vunpack.c.l.b16 %v2973
        %v3230 = vpack.c.b16 %v3103, %v3102
        %v3231 = vpack.c.b16 %v3105, %v3104
        %v3232 = vpack.c.b16 %v3107, %v3106
        %v3233 = vpack.c.b16 %v3109, %v3108
        %v3234 = vpack.c.b16 %v3111, %v3110
        %v3235 = vpack.c.b16 %v3113, %v3112
        %v3236 = vpack.c.b16 %v3115, %v3114
        %v3237 = vpack.c.b16 %v3117, %v3116
        %v3238 = vpack.c.b16 %v3119, %v3118
        %v3239 = vpack.c.b16 %v3121, %v3120
        %v3240 = vpack.c.b16 %v3123, %v3122
        %v3241 = vpack.c.b16 %v3125, %v3124
        %v3242 = vpack.c.b16 %v3127, %v3126
        %v3243 = vpack.c.b16 %v3129, %v3128
        %v3244 = vpack.c.b16 %v3131, %v3130
        %v3245 = vpack.c.b16 %v3133, %v3132
        %v3246 = vpack.c.b16 %v3135, %v3134
        %v3247 = vpack.c.b16 %v3137, %v3136
        %v3248 = vpack.c.b16 %v3139, %v3138
        %v3249 = vpack.c.b16 %v3141, %v3140
        %v3250 = vpack.c.b16 %v3143, %v3142
        %v3251 = vpack.c.b16 %v3145, %v3144
        %v3252 = vpack.c.b16 %v3147, %v3146
        %v3253 = vpack.c.b16 %v3149, %v3148
        %v3254 = vpack.c.b16 %v3151, %v3150
        %v3255 = vpack.c.b16 %v3153, %v3152
        %v3256 = vpack.c.b16 %v3155, %v3154
        %v3257 = vpack.c.b16 %v3157, %v3156
        %v3258 = vpack.c.b16 %v3159, %v3158
        %v3259 = vpack.c.b16 %v3161, %v3160
        %v3260 = vpack.c.b16 %v3163, %v3162
        %v3261 = vpack.c.b16 %v3165, %v3164
        %v3262 = vpack.c.b16 %v3167, %v3166
        %v3263 = vpack.c.b16 %v3169, %v3168
        %v3264 = vpack.c.b16 %v3171, %v3170
        %v3265 = vpack.c.b16 %v3173, %v3172
        %v3266 = vpack.c.b16 %v3175, %v3174
        %v3267 = vpack.c.b16 %v3177, %v3176
        %v3268 = vpack.c.b16 %v3179, %v3178
        %v3269 = vpack.c.b16 %v3181, %v3180
        %v3270 = vpack.c.b16 %v3183, %v3182
        %v3271 = vpack.c.b16 %v3185, %v3184
        %v3272 = vpack.c.b16 %v3187, %v3186
        %v3273 = vpack.c.b16 %v3189, %v3188
        %v3274 = vpack.c.b16 %v3191, %v3190
        %v3275 = vpack.c.b16 %v3193, %v3192
        %v3276 = vpack.c.b16 %v3195, %v3194
        %v3277 = vpack.c.b16 %v3197, %v3196
        %v3278 = vpack.c.b16 %v3199, %v3198
        %v3279 = vpack.c.b16 %v3201, %v3200
        %v3280 = vpack.c.b16 %v3203, %v3202
        %v3281 = vpack.c.b16 %v3205, %v3204
        %v3282 = vpack.c.b16 %v3207, %v3206
        %v3283 = vpack.c.b16 %v3209, %v3208
        %v3284 = vpack.c.b16 %v3211, %v3210
        %v3285 = vpack.c.b16 %v3213, %v3212
        %v3286 = vpack.c.b16 %v3215, %v3214
        %v3287 = vpack.c.b16 %v3217, %v3216
        %v3288 = vpack.c.b16 %v3219, %v3218
        %v3289 = vpack.c.b16 %v3221, %v3220
        %v3290 = vpack.c.b16 %v3223, %v3222
        %v3291 = vpack.c.b16 %v3225, %v3224
        %v3292 = vpack.c.b16 %v3227, %v3226
        %v3293 = vpack.c.b16 %v3229, %v3228
        %3358 = vmatprep.subr.bf16.mxu0 0
        %3359 = vmatpush1.bf16.msra.mxu0 %v3237
        %3360 = vmatprep.subr.bf16.mxu0 0
        %3361 = vmatpush1.bf16.msra.mxu0 %v3236
        %3362 = vmatprep.subr.bf16.mxu0 0
        %3363 = vmatpush1.bf16.msra.mxu0 %v3235
        %3364 = vmatprep.subr.bf16.mxu0 0
        %3365 = vmatpush1.bf16.msra.mxu0 %v3234
        %3366 = vmatprep.subr.bf16.mxu0 0
        %3367 = vmatpush1.bf16.msra.mxu0 %v3233
        %3368 = vmatprep.subr.bf16.mxu0 0
        %3369 = vmatpush1.bf16.msra.mxu0 %v3232
        %3370 = vmatprep.subr.bf16.mxu0 0
        %3371 = vmatpush1.bf16.msra.mxu0 %v3231
        %3372 = vmatprep.subr.bf16.mxu0 0
        %3373 = vmatpush1.bf16.msra.mxu0 %v3230
        %3374 = vmatprep.subr.bf16.mxu0 0
        %3375 = vmatpush2.bf16.msra.mxu0 %v3245
        %3376 = vmatprep.subr.bf16.mxu0 0
        %3377 = vmatpush2.bf16.msra.mxu0 %v3244
        %3378 = vmatprep.subr.bf16.mxu0 0
        %3379 = vmatpush2.bf16.msra.mxu0 %v3243
        %3380 = vmatprep.subr.bf16.mxu0 0
        %3381 = vmatpush2.bf16.msra.mxu0 %v3242
        %3382 = vmatprep.subr.bf16.mxu0 0
        %3383 = vmatpush2.bf16.msra.mxu0 %v3241
        %3384 = vmatprep.subr.bf16.mxu0 0
        %3385 = vmatpush2.bf16.msra.mxu0 %v3240
        %3386 = vmatprep.subr.bf16.mxu0 0
        %3387 = vmatpush2.bf16.msra.mxu0 %v3239
        %3388 = vmatprep.subr.bf16.mxu0 0
        %3389 = vmatpush2.bf16.msra.mxu0 %v3238
        %3390 = vmatprep.mubr.bf16.mxu0 %v2783
        %3391 = vmatmul.mubr.bf16.gmra.mxu0 %v2782
        %v3392 = vpop.f32.mrf.mxu0
        %v3393 = vadd.f32 0.0, %v3392
        %v3394 = vpop.f32.mrf.mxu0
        %v3395 = vpop.f32.mrf.mxu0
        %v3396 = vadd.f32 0.0, %v3395
        %v3397 = vpop.f32.mrf.mxu0
        %3398 = vmatprep.mubr.bf16.mxu0 %v2791
        %3399 = vmatmul.mubr.bf16.gmra.mxu0 %v2790
        %v3400 = vpop.f32.mrf.mxu0
        %v3401 = vadd.f32 0.0, %v3400
        %v3402 = vpop.f32.mrf.mxu0
        %v3403 = vpop.f32.mrf.mxu0
        %v3404 = vadd.f32 0.0, %v3403
        %v3405 = vpop.f32.mrf.mxu0
        %3406 = vmatprep.mubr.bf16.mxu0 %v2799
        %3407 = vmatmul.mubr.bf16.gmra.mxu0 %v2798
        %v3408 = vpop.f32.mrf.mxu0
        %v3409 = vadd.f32 0.0, %v3408
        %v3410 = vpop.f32.mrf.mxu0
        %v3411 = vpop.f32.mrf.mxu0
        %v3412 = vadd.f32 0.0, %v3411
        %v3413 = vpop.f32.mrf.mxu0
        %3414 = vmatprep.mubr.bf16.mxu0 %v2807
        %3415 = vmatmul.mubr.bf16.gmra.mxu0 %v2806
        %v3416 = vpop.f32.mrf.mxu0
        %v3417 = vadd.f32 0.0, %v3416
        %v3418 = vpop.f32.mrf.mxu0
        %v3419 = vpop.f32.mrf.mxu0
        %v3420 = vadd.f32 0.0, %v3419
        %v3421 = vpop.f32.mrf.mxu0
        %3422 = vmatprep.mubr.bf16.mxu0 %v2815
        %3423 = vmatmul.mubr.bf16.gmra.mxu0 %v2814
        %v3424 = vpop.f32.mrf.mxu0
        %v3425 = vadd.f32 0.0, %v3424
        %v3426 = vpop.f32.mrf.mxu0
        %v3427 = vpop.f32.mrf.mxu0
        %v3428 = vadd.f32 0.0, %v3427
        %v3429 = vpop.f32.mrf.mxu0
        %3430 = vmatprep.mubr.bf16.mxu0 %v2823
        %3431 = vmatmul.mubr.bf16.gmra.mxu0 %v2822
        %v3432 = vpop.f32.mrf.mxu0
        %v3433 = vadd.f32 0.0, %v3432
        %v3434 = vpop.f32.mrf.mxu0
        %v3435 = vpop.f32.mrf.mxu0
        %v3436 = vadd.f32 0.0, %v3435
        %v3437 = vpop.f32.mrf.mxu0
        %3438 = vmatprep.mubr.bf16.mxu0 %v2831
        %3439 = vmatmul.mubr.bf16.gmra.mxu0 %v2830
        %v3440 = vpop.f32.mrf.mxu0
        %v3441 = vadd.f32 0.0, %v3440
        %v3442 = vpop.f32.mrf.mxu0
        %v3443 = vpop.f32.mrf.mxu0
        %v3444 = vadd.f32 0.0, %v3443
        %v3445 = vpop.f32.mrf.mxu0
        %3446 = vmatprep.mubr.bf16.mxu0 %v2839
        %3447 = vmatmul.mubr.bf16.gmra.mxu0 %v2838
        %v3448 = vpop.f32.mrf.mxu0
        %v3449 = vadd.f32 0.0, %v3448
        %v3450 = vpop.f32.mrf.mxu0
        %v3451 = vpop.f32.mrf.mxu0
        %v3452 = vadd.f32 0.0, %v3451
        %v3453 = vpop.f32.mrf.mxu0
        %3454 = vdwg.mxu0
        %3455 = vmatprep.subr.bf16.mxu0 0
        %3456 = vmatpush1.bf16.msra.mxu0 %v3253
        %3457 = vmatprep.subr.bf16.mxu0 0
        %3458 = vmatpush1.bf16.msra.mxu0 %v3252
        %3459 = vmatprep.subr.bf16.mxu0 0
        %3460 = vmatpush1.bf16.msra.mxu0 %v3251
        %3461 = vmatprep.subr.bf16.mxu0 0
        %3462 = vmatpush1.bf16.msra.mxu0 %v3250
        %3463 = vmatprep.subr.bf16.mxu0 0
        %3464 = vmatpush1.bf16.msra.mxu0 %v3249
        %3465 = vmatprep.subr.bf16.mxu0 0
        %3466 = vmatpush1.bf16.msra.mxu0 %v3248
        %3467 = vmatprep.subr.bf16.mxu0 0
        %3468 = vmatpush1.bf16.msra.mxu0 %v3247
        %3469 = vmatprep.subr.bf16.mxu0 0
        %3470 = vmatpush1.bf16.msra.mxu0 %v3246
        %3471 = vmatprep.subr.bf16.mxu0 0
        %3472 = vmatpush2.bf16.msra.mxu0 %v3261
        %3473 = vmatprep.subr.bf16.mxu0 0
        %3474 = vmatpush2.bf16.msra.mxu0 %v3260
        %3475 = vmatprep.subr.bf16.mxu0 0
        %3476 = vmatpush2.bf16.msra.mxu0 %v3259
        %3477 = vmatprep.subr.bf16.mxu0 0
        %3478 = vmatpush2.bf16.msra.mxu0 %v3258
        %3479 = vmatprep.subr.bf16.mxu0 0
        %3480 = vmatpush2.bf16.msra.mxu0 %v3257
        %3481 = vmatprep.subr.bf16.mxu0 0
        %3482 = vmatpush2.bf16.msra.mxu0 %v3256
        %3483 = vmatprep.subr.bf16.mxu0 0
        %3484 = vmatpush2.bf16.msra.mxu0 %v3255
        %3485 = vmatprep.subr.bf16.mxu0 0
        %3486 = vmatpush2.bf16.msra.mxu0 %v3254
        %3487 = vmatprep.mubr.bf16.mxu0 %v2785
        %3488 = vmatmul.mubr.bf16.gmra.mxu0 %v2784
        %v3489 = vpop.f32.mrf.mxu0
        %v3490 = vadd.f32 %v3393, %v3489
        %v3491 = vpop.f32.mrf.mxu0
        %v3492 = vpop.f32.mrf.mxu0
        %v3493 = vadd.f32 %v3396, %v3492
        %v3494 = vpop.f32.mrf.mxu0
        %3495 = vmatprep.mubr.bf16.mxu0 %v2793
        %3496 = vmatmul.mubr.bf16.gmra.mxu0 %v2792
        %v3497 = vpop.f32.mrf.mxu0
        %v3498 = vadd.f32 %v3401, %v3497
        %v3499 = vpop.f32.mrf.mxu0
        %v3500 = vpop.f32.mrf.mxu0
        %v3501 = vadd.f32 %v3404, %v3500
        %v3502 = vpop.f32.mrf.mxu0
        %3503 = vmatprep.mubr.bf16.mxu0 %v2801
        %3504 = vmatmul.mubr.bf16.gmra.mxu0 %v2800
        %v3505 = vpop.f32.mrf.mxu0
        %v3506 = vadd.f32 %v3409, %v3505
        %v3507 = vpop.f32.mrf.mxu0
        %v3508 = vpop.f32.mrf.mxu0
        %v3509 = vadd.f32 %v3412, %v3508
        %v3510 = vpop.f32.mrf.mxu0
        %3511 = vmatprep.mubr.bf16.mxu0 %v2809
        %3512 = vmatmul.mubr.bf16.gmra.mxu0 %v2808
        %v3513 = vpop.f32.mrf.mxu0
        %v3514 = vadd.f32 %v3417, %v3513
        %v3515 = vpop.f32.mrf.mxu0
        %v3516 = vpop.f32.mrf.mxu0
        %v3517 = vadd.f32 %v3420, %v3516
        %v3518 = vpop.f32.mrf.mxu0
        %3519 = vmatprep.mubr.bf16.mxu0 %v2817
        %3520 = vmatmul.mubr.bf16.gmra.mxu0 %v2816
        %v3521 = vpop.f32.mrf.mxu0
        %v3522 = vadd.f32 %v3425, %v3521
        %v3523 = vpop.f32.mrf.mxu0
        %v3524 = vpop.f32.mrf.mxu0
        %v3525 = vadd.f32 %v3428, %v3524
        %v3526 = vpop.f32.mrf.mxu0
        %3527 = vmatprep.mubr.bf16.mxu0 %v2825
        %3528 = vmatmul.mubr.bf16.gmra.mxu0 %v2824
        %v3529 = vpop.f32.mrf.mxu0
        %v3530 = vadd.f32 %v3433, %v3529
        %v3531 = vpop.f32.mrf.mxu0
        %v3532 = vpop.f32.mrf.mxu0
        %v3533 = vadd.f32 %v3436, %v3532
        %v3534 = vpop.f32.mrf.mxu0
        %3535 = vmatprep.mubr.bf16.mxu0 %v2833
        %3536 = vmatmul.mubr.bf16.gmra.mxu0 %v2832
        %v3537 = vpop.f32.mrf.mxu0
        %v3538 = vadd.f32 %v3441, %v3537
        %v3539 = vpop.f32.mrf.mxu0
        %v3540 = vpop.f32.mrf.mxu0
        %v3541 = vadd.f32 %v3444, %v3540
        %v3542 = vpop.f32.mrf.mxu0
        %3543 = vmatprep.mubr.bf16.mxu0 %v2841
        %3544 = vmatmul.mubr.bf16.gmra.mxu0 %v2840
        %v3545 = vpop.f32.mrf.mxu0
        %v3546 = vadd.f32 %v3449, %v3545
        %v3547 = vpop.f32.mrf.mxu0
        %v3548 = vpop.f32.mrf.mxu0
        %v3549 = vadd.f32 %v3452, %v3548
        %v3550 = vpop.f32.mrf.mxu0
        %3551 = vdwg.mxu0
        %3552 = vmatprep.subr.bf16.mxu0 0
        %3553 = vmatpush1.bf16.msra.mxu0 %v3269
        %3554 = vmatprep.subr.bf16.mxu0 0
        %3555 = vmatpush1.bf16.msra.mxu0 %v3268
        %3556 = vmatprep.subr.bf16.mxu0 0
        %3557 = vmatpush1.bf16.msra.mxu0 %v3267
        %3558 = vmatprep.subr.bf16.mxu0 0
        %3559 = vmatpush1.bf16.msra.mxu0 %v3266
        %3560 = vmatprep.subr.bf16.mxu0 0
        %3561 = vmatpush1.bf16.msra.mxu0 %v3265
        %3562 = vmatprep.subr.bf16.mxu0 0
        %3563 = vmatpush1.bf16.msra.mxu0 %v3264
        %3564 = vmatprep.subr.bf16.mxu0 0
        %3565 = vmatpush1.bf16.msra.mxu0 %v3263
        %3566 = vmatprep.subr.bf16.mxu0 0
        %3567 = vmatpush1.bf16.msra.mxu0 %v3262
        %3568 = vmatprep.subr.bf16.mxu0 0
        %3569 = vmatpush2.bf16.msra.mxu0 %v3277
        %3570 = vmatprep.subr.bf16.mxu0 0
        %3571 = vmatpush2.bf16.msra.mxu0 %v3276
        %3572 = vmatprep.subr.bf16.mxu0 0
        %3573 = vmatpush2.bf16.msra.mxu0 %v3275
        %3574 = vmatprep.subr.bf16.mxu0 0
        %3575 = vmatpush2.bf16.msra.mxu0 %v3274
        %3576 = vmatprep.subr.bf16.mxu0 0
        %3577 = vmatpush2.bf16.msra.mxu0 %v3273
        %3578 = vmatprep.subr.bf16.mxu0 0
        %3579 = vmatpush2.bf16.msra.mxu0 %v3272
        %3580 = vmatprep.subr.bf16.mxu0 0
        %3581 = vmatpush2.bf16.msra.mxu0 %v3271
        %3582 = vmatprep.subr.bf16.mxu0 0
        %3583 = vmatpush2.bf16.msra.mxu0 %v3270
        %3584 = vmatprep.mubr.bf16.mxu0 %v2787
        %3585 = vmatmul.mubr.bf16.gmra.mxu0 %v2786
        %v3586 = vpop.f32.mrf.mxu0
        %v3587 = vadd.f32 %v3490, %v3586
        %v3588 = vpop.f32.mrf.mxu0
        %v3589 = vpop.f32.mrf.mxu0
        %v3590 = vadd.f32 %v3493, %v3589
        %v3591 = vpop.f32.mrf.mxu0
        %3592 = vmatprep.mubr.bf16.mxu0 %v2795
        %3593 = vmatmul.mubr.bf16.gmra.mxu0 %v2794
        %v3594 = vpop.f32.mrf.mxu0
        %v3595 = vadd.f32 %v3498, %v3594
        %v3596 = vpop.f32.mrf.mxu0
        %v3597 = vpop.f32.mrf.mxu0
        %v3598 = vadd.f32 %v3501, %v3597
        %v3599 = vpop.f32.mrf.mxu0
        %3600 = vmatprep.mubr.bf16.mxu0 %v2803
        %3601 = vmatmul.mubr.bf16.gmra.mxu0 %v2802
        %v3602 = vpop.f32.mrf.mxu0
        %v3603 = vadd.f32 %v3506, %v3602
        %v3604 = vpop.f32.mrf.mxu0
        %v3605 = vpop.f32.mrf.mxu0
        %v3606 = vadd.f32 %v3509, %v3605
        %v3607 = vpop.f32.mrf.mxu0
        %3608 = vmatprep.mubr.bf16.mxu0 %v2811
        %3609 = vmatmul.mubr.bf16.gmra.mxu0 %v2810
        %v3610 = vpop.f32.mrf.mxu0
        %v3611 = vadd.f32 %v3514, %v3610
        %v3612 = vpop.f32.mrf.mxu0
        %v3613 = vpop.f32.mrf.mxu0
        %v3614 = vadd.f32 %v3517, %v3613
        %v3615 = vpop.f32.mrf.mxu0
        %3616 = vmatprep.mubr.bf16.mxu0 %v2819
        %3617 = vmatmul.mubr.bf16.gmra.mxu0 %v2818
        %v3618 = vpop.f32.mrf.mxu0
        %v3619 = vadd.f32 %v3522, %v3618
        %v3620 = vpop.f32.mrf.mxu0
        %v3621 = vpop.f32.mrf.mxu0
        %v3622 = vadd.f32 %v3525, %v3621
        %v3623 = vpop.f32.mrf.mxu0
        %3624 = vmatprep.mubr.bf16.mxu0 %v2827
        %3625 = vmatmul.mubr.bf16.gmra.mxu0 %v2826
        %v3626 = vpop.f32.mrf.mxu0
        %v3627 = vadd.f32 %v3530, %v3626
        %v3628 = vpop.f32.mrf.mxu0
        %v3629 = vpop.f32.mrf.mxu0
        %v3630 = vadd.f32 %v3533, %v3629
        %v3631 = vpop.f32.mrf.mxu0
        %3632 = vmatprep.mubr.bf16.mxu0 %v2835
        %3633 = vmatmul.mubr.bf16.gmra.mxu0 %v2834
        %v3634 = vpop.f32.mrf.mxu0
        %v3635 = vadd.f32 %v3538, %v3634
        %v3636 = vpop.f32.mrf.mxu0
        %v3637 = vpop.f32.mrf.mxu0
        %v3638 = vadd.f32 %v3541, %v3637
        %v3639 = vpop.f32.mrf.mxu0
        %3640 = vmatprep.mubr.bf16.mxu0 %v2843
        %3641 = vmatmul.mubr.bf16.gmra.mxu0 %v2842
        %v3642 = vpop.f32.mrf.mxu0
        %v3643 = vadd.f32 %v3546, %v3642
        %v3644 = vpop.f32.mrf.mxu0
        %v3645 = vpop.f32.mrf.mxu0
        %v3646 = vadd.f32 %v3549, %v3645
        %v3647 = vpop.f32.mrf.mxu0
        %3648 = vdwg.mxu0
        %3649 = vmatprep.subr.bf16.mxu0 0
        %3650 = vmatpush1.bf16.msra.mxu0 %v3285
        %3651 = vmatprep.subr.bf16.mxu0 0
        %3652 = vmatpush1.bf16.msra.mxu0 %v3284
        %3653 = vmatprep.subr.bf16.mxu0 0
        %3654 = vmatpush1.bf16.msra.mxu0 %v3283
        %3655 = vmatprep.subr.bf16.mxu0 0
        %3656 = vmatpush1.bf16.msra.mxu0 %v3282
        %3657 = vmatprep.subr.bf16.mxu0 0
        %3658 = vmatpush1.bf16.msra.mxu0 %v3281
        %3659 = vmatprep.subr.bf16.mxu0 0
        %3660 = vmatpush1.bf16.msra.mxu0 %v3280
        %3661 = vmatprep.subr.bf16.mxu0 0
        %3662 = vmatpush1.bf16.msra.mxu0 %v3279
        %3663 = vmatprep.subr.bf16.mxu0 0
        %3664 = vmatpush1.bf16.msra.mxu0 %v3278
        %3665 = vmatprep.subr.bf16.mxu0 0
        %3666 = vmatpush2.bf16.msra.mxu0 %v3293
        %3667 = vmatprep.subr.bf16.mxu0 0
        %3668 = vmatpush2.bf16.msra.mxu0 %v3292
        %3669 = vmatprep.subr.bf16.mxu0 0
        %3670 = vmatpush2.bf16.msra.mxu0 %v3291
        %3671 = vmatprep.subr.bf16.mxu0 0
        %3672 = vmatpush2.bf16.msra.mxu0 %v3290
        %3673 = vmatprep.subr.bf16.mxu0 0
        %3674 = vmatpush2.bf16.msra.mxu0 %v3289
        %3675 = vmatprep.subr.bf16.mxu0 0
        %3676 = vmatpush2.bf16.msra.mxu0 %v3288
        %3677 = vmatprep.subr.bf16.mxu0 0
        %3678 = vmatpush2.bf16.msra.mxu0 %v3287
        %3679 = vmatprep.subr.bf16.mxu0 0
        %3680 = vmatpush2.bf16.msra.mxu0 %v3286
        %3681 = vmatprep.mubr.bf16.mxu0 %v2789
        %3682 = vmatmul.mubr.bf16.gmra.mxu0 %v2788
        %v3683 = vpop.f32.mrf.mxu0
        %v3684 = vadd.f32 %v3587, %v3683
        %v3685 = vpop.f32.mrf.mxu0
        %v3686 = vpop.f32.mrf.mxu0
        %v3687 = vadd.f32 %v3590, %v3686
        %v3688 = vpop.f32.mrf.mxu0
        %3689 = vmatprep.mubr.bf16.mxu0 %v2797
        %3690 = vmatmul.mubr.bf16.gmra.mxu0 %v2796
        %v3691 = vpop.f32.mrf.mxu0
        %v3692 = vadd.f32 %v3595, %v3691
        %v3693 = vpop.f32.mrf.mxu0
        %v3694 = vpop.f32.mrf.mxu0
        %v3695 = vadd.f32 %v3598, %v3694
        %v3696 = vpop.f32.mrf.mxu0
        %3697 = vmatprep.mubr.bf16.mxu0 %v2805
        %3698 = vmatmul.mubr.bf16.gmra.mxu0 %v2804
        %v3699 = vpop.f32.mrf.mxu0
        %v3700 = vadd.f32 %v3603, %v3699
        %v3701 = vpop.f32.mrf.mxu0
        %v3702 = vpop.f32.mrf.mxu0
        %v3703 = vadd.f32 %v3606, %v3702
        %v3704 = vpop.f32.mrf.mxu0
        %3705 = vmatprep.mubr.bf16.mxu0 %v2813
        %3706 = vmatmul.mubr.bf16.gmra.mxu0 %v2812
        %v3707 = vpop.f32.mrf.mxu0
        %v3708 = vadd.f32 %v3611, %v3707
        %v3709 = vpop.f32.mrf.mxu0
        %v3710 = vpop.f32.mrf.mxu0
        %v3711 = vadd.f32 %v3614, %v3710
        %v3712 = vpop.f32.mrf.mxu0
        %3713 = vmatprep.mubr.bf16.mxu0 %v2821
        %3714 = vmatmul.mubr.bf16.gmra.mxu0 %v2820
        %v3715 = vpop.f32.mrf.mxu0
        %v3716 = vadd.f32 %v3619, %v3715
        %v3717 = vpop.f32.mrf.mxu0
        %v3718 = vpop.f32.mrf.mxu0
        %v3719 = vadd.f32 %v3622, %v3718
        %v3720 = vpop.f32.mrf.mxu0
        %3721 = vmatprep.mubr.bf16.mxu0 %v2829
        %3722 = vmatmul.mubr.bf16.gmra.mxu0 %v2828
        %v3723 = vpop.f32.mrf.mxu0
        %v3724 = vadd.f32 %v3627, %v3723
        %v3725 = vpop.f32.mrf.mxu0
        %v3726 = vpop.f32.mrf.mxu0
        %v3727 = vadd.f32 %v3630, %v3726
        %v3728 = vpop.f32.mrf.mxu0
        %3729 = vmatprep.mubr.bf16.mxu0 %v2837
        %3730 = vmatmul.mubr.bf16.gmra.mxu0 %v2836
        %v3731 = vpop.f32.mrf.mxu0
        %v3732 = vadd.f32 %v3635, %v3731
        %v3733 = vpop.f32.mrf.mxu0
        %v3734 = vpop.f32.mrf.mxu0
        %v3735 = vadd.f32 %v3638, %v3734
        %v3736 = vpop.f32.mrf.mxu0
        %3737 = vmatprep.mubr.bf16.mxu0 %v2845
        %3738 = vmatmul.mubr.bf16.gmra.mxu0 %v2844
        %v3739 = vpop.f32.mrf.mxu0
        %v3740 = vadd.f32 %v3643, %v3739
        %v3741 = vpop.f32.mrf.mxu0
        %v3742 = vpop.f32.mrf.mxu0
        %v3743 = vadd.f32 %v3646, %v3742
        %v3744 = vpop.f32.mrf.mxu0
        %3745 = vdwg.mxu0
        %v3746 = vld [vmem:[#allocation4] sm:$0xff]
        %v3747 = vld [vmem:[#allocation4 + $0x8] sm:$0xff]
        %v3748 = vpack.c.bf16 %v3687, %v3684
        %v3749 = vpack.c.bf16 %v3695, %v3692
        %v3750 = vpack.c.bf16 %v3703, %v3700
        %v3751 = vpack.c.bf16 %v3711, %v3708
        %v3752 = vpack.c.bf16 %v3719, %v3716
        %v3753 = vpack.c.bf16 %v3727, %v3724
        %v3754 = vpack.c.bf16 %v3735, %v3732
        %v3755 = vpack.c.bf16 %v3743, %v3740
        %3756 = vmatprep.subr.bf16.mxu0 0
        %3757 = vmatpush1.bf16.msra.mxu0 %v3755
        %3758 = vmatprep.subr.bf16.mxu0 0
        %3759 = vmatpush1.bf16.msra.mxu0 %v3754
        %3760 = vmatprep.subr.bf16.mxu0 0
        %3761 = vmatpush1.bf16.msra.mxu0 %v3753
        %3762 = vmatprep.subr.bf16.mxu0 0
        %3763 = vmatpush1.bf16.msra.mxu0 %v3752
        %3764 = vmatprep.subr.bf16.mxu0 0
        %3765 = vmatpush1.bf16.msra.mxu0 %v3751
        %3766 = vmatprep.subr.bf16.mxu0 0
        %3767 = vmatpush1.bf16.msra.mxu0 %v3750
        %3768 = vmatprep.subr.bf16.mxu0 0
        %3769 = vmatpush1.bf16.msra.mxu0 %v3749
        %3770 = vmatprep.subr.bf16.mxu0 0
        %3771 = vmatpush1.bf16.msra.mxu0 %v3748
        %3772 = vmatprep.subr.bf16.mxu0 0
        %3773 = vmatpush2.bf16.msra.mxu0 0
        %3774 = vmatprep.subr.bf16.mxu0 0
        %3775 = vmatpush2.bf16.msra.mxu0 0
        %3776 = vmatprep.subr.bf16.mxu0 0
        %3777 = vmatpush2.bf16.msra.mxu0 0
        %3778 = vmatprep.subr.bf16.mxu0 0
        %3779 = vmatpush2.bf16.msra.mxu0 0
        %3780 = vmatprep.subr.bf16.mxu0 0
        %3781 = vmatpush2.bf16.msra.mxu0 0
        %3782 = vmatprep.subr.bf16.mxu0 0
        %3783 = vmatpush2.bf16.msra.mxu0 0
        %3784 = vmatprep.subr.bf16.mxu0 0
        %3785 = vmatpush2.bf16.msra.mxu0 0
        %3786 = vmatprep.subr.bf16.mxu0 0
        %3787 = vmatpush2.bf16.msra.mxu0 0
        %3788 = vmatprep.mubr.bf16.mxu0 0
        %3789 = vmatmul.mubr.bf16.gmra.mxu0 %v879
        %v3790 = vpop.f32.mrf.mxu0
        %v3791 = vadd.f32 0.0, %v3790
        %v3792 = vpop.f32.mrf.mxu0
        %v3793 = vpop.f32.mrf.mxu0
        %v3794 = vadd.f32 0.0, %v3793
        %v3795 = vpop.f32.mrf.mxu0
        %3796 = vdwg.mxu0
        %v3797 = vadd.f32 %v3746, %v3791
        %v3798 = vadd.f32 %v3747, %v3794
        %3799 = vst.msk [vmem:[#allocation4] sm:$0xff] %vm2177, %v3797
        %3800 = vst.msk [vmem:[#allocation4 + $0x8] sm:$0xff] %vm2177, %v3798
        %p3801 = scmp.eq.s32.totalorder %s36, 1
        // Predicated region
        $region105: #{tpu_custom_call.1} parent=95 // pred_check
          %p3802 = pneg %p3801
        $region106: #{tpu_custom_call.1} parent=95 // pred_check_branch
          %3804 = sbr.rel (%p3802) target = $region108
        $region107: #{tpu_custom_call.1} parent=95 // pred_region
          %v3805 = vld [vmem:[#allocation2] sm:$0xff]
          %v3806 = vld [vmem:[#allocation2 + $0x8] sm:$0xff]
          %v3807 = vld [vmem:[#allocation4] sm:$0xff]
          %v3808 = vld [vmem:[#allocation4 + $0x8] sm:$0xff]
          %v3809 = vld [vmem:[%s5] sm:$0xff]
          %v3810 = vld [vmem:[%s5 + $0x8] sm:$0xff]
          %3812 = vset.pattern.permute.xlu0 0
          %3813 = vperm.xlu0 %3812, %v3809
          %v3814 = vpop.permute.xlu0 %3813
          %3817 = vset.pattern.permute.xlu0 0
          %3818 = vperm.xlu0 %3817, %v3810
          %v3819 = vpop.permute.xlu0 %3818
          %v3821 = vmul.f32 %v3807, %v3814
          %v3822 = vmul.f32 %v3808, %v3819
          %v3823 = vld [vmem:[%s14] sm:$0x1]
          %v3825 = vlaneseq
          %v3826 = vshrl.u32 %v3825, 7
          %v3827 = vsub.s32 0, %v3826
          %v3828 = vrot.slane %v3823, %v3827
          %v3830 = vadd.f32 %v3821, %v3828
          %v3831 = vadd.f32 %v3822, %v3828
          %v3832 = vmax.f32 %v3830, 0.0
          %v3833 = vmax.f32 %v3831, 0.0
          %3836 = vrot.lane.b32.xlu0 %v3805, 32
          %v3837 = vpop.permute.xlu0 %3836
          %3838 = vrot.lane.b32.xlu0 %v3806, 32
          %v3839 = vpop.permute.xlu0 %3838
          %v3842 = vsel %vm2177, %v3832, %v3837
          %v3843 = vsel %vm2177, %v3833, %v3839
          %v3844 = vpack.c.bf16 %v3843, %v3842
          %v3845 = vld [vmem:[%s15] sm:$0xf]
          %v3846 = vld [vmem:[%s15 + $0x4] sm:$0xf]
          %v3847 = vld [vmem:[%s15 + $0x8] sm:$0xf]
          %v3848 = vld [vmem:[%s15 + $0xc] sm:$0xf]
          %v3849 = vld [vmem:[%s15 + $0x10] sm:$0xf]
          %v3850 = vld [vmem:[%s15 + $0x14] sm:$0xf]
          %v3851 = vld [vmem:[%s15 + $0x18] sm:$0xf]
          %v3852 = vld [vmem:[%s15 + $0x1c] sm:$0xf]
          %v3853 = vld [vmem:[%s16] sm:$0x1]
          %v3855 = vlaneseq
          %v3856 = vshrl.u32 %v3855, 7
          %v3857 = vsub.s32 0, %v3856
          %v3858 = vrot.slane %v3853, %v3857
          %v3868 = vunpack.c.l.b16 %v3845
          %v3869 = vunpack.c.l.b16 %v3846
          %v3870 = vunpack.c.l.b16 %v3847
          %v3871 = vunpack.c.l.b16 %v3848
          %v3872 = vunpack.c.l.b16 %v3849
          %v3873 = vunpack.c.l.b16 %v3850
          %v3874 = vunpack.c.l.b16 %v3851
          %v3875 = vunpack.c.l.b16 %v3852
          %v3876 = vpack.c.b16 %v3869, %v3868
          %v3877 = vpack.c.b16 %v3871, %v3870
          %v3878 = vpack.c.b16 %v3873, %v3872
          %v3879 = vpack.c.b16 %v3875, %v3874
          %vm3884 = vcmask 523264
          %v3886 = vsel %vm3884, %v3844, 0
          %3888 = vmatprep.subr.bf16.mxu0 0
          %3889 = vmatpush1.bf16.msra.mxu0 0
          %3890 = vmatprep.subr.bf16.mxu0 0
          %3891 = vmatpush1.bf16.msra.mxu0 0
          %3892 = vmatprep.subr.bf16.mxu0 0
          %3893 = vmatpush1.bf16.msra.mxu0 0
          %3894 = vmatprep.subr.bf16.mxu0 0
          %3895 = vmatpush1.bf16.msra.mxu0 0
          %3896 = vmatprep.subr.bf16.mxu0 0
          %3897 = vmatpush1.bf16.msra.mxu0 %v3879
          %3898 = vmatprep.subr.bf16.mxu0 0
          %3899 = vmatpush1.bf16.msra.mxu0 %v3878
          %3900 = vmatprep.subr.bf16.mxu0 0
          %3901 = vmatpush1.bf16.msra.mxu0 %v3877
          %3902 = vmatprep.subr.bf16.mxu0 0
          %3903 = vmatpush1.bf16.msra.mxu0 %v3876
          %3904 = vmatprep.subr.bf16.mxu0 0
          %3905 = vmatpush2.bf16.msra.mxu0 0
          %3906 = vmatprep.subr.bf16.mxu0 0
          %3907 = vmatpush2.bf16.msra.mxu0 0
          %3908 = vmatprep.subr.bf16.mxu0 0
          %3909 = vmatpush2.bf16.msra.mxu0 0
          %3910 = vmatprep.subr.bf16.mxu0 0
          %3911 = vmatpush2.bf16.msra.mxu0 0
          %3912 = vmatprep.subr.bf16.mxu0 0
          %3913 = vmatpush2.bf16.msra.mxu0 0
          %3914 = vmatprep.subr.bf16.mxu0 0
          %3915 = vmatpush2.bf16.msra.mxu0 0
          %3916 = vmatprep.subr.bf16.mxu0 0
          %3917 = vmatpush2.bf16.msra.mxu0 0
          %3918 = vmatprep.subr.bf16.mxu0 0
          %3919 = vmatpush2.bf16.msra.mxu0 0
          %3920 = vmatprep.mubr.bf16.mxu0 0
          %3921 = vmatmul.mubr.bf16.gmra.mxu0 %v3886
          %v3922 = vpop.f32.mrf.mxu0
          %v3923 = vadd.f32 %v3858, %v3922
          %v3924 = vpop.f32.mrf.mxu0
          %v3925 = vpop.f32.mrf.mxu0
          %v3926 = vadd.f32 %v3858, %v3925
          %v3927 = vpop.f32.mrf.mxu0
          %3928 = vdwg.mxu0
          %v3929 = vxor.u32 %v3923, 2147483648
          %v3930 = vxor.u32 %v3926, 2147483648
          %v3931 = vmul.f32 %v3929, 1.442695
          %v3932 = vpow.pop %v3931
          %v3933 = vmul.f32 %v3930, 1.442695
          %v3934 = vpow.pop %v3933
          %v3935 = vadd.f32 %v3932, 1.0
          %v3936 = vadd.f32 %v3934, 1.0
          %v3937 = vrcp.pop %v3935
          %v3938 = vmul.f32 1.0, %v3937
          %v3939 = vrcp.pop %v3936
          %v3940 = vmul.f32 1.0, %v3939
          %3943 = vrot.lane.b32.xlu0 %v3923, 32
          %v3944 = vpop.permute.xlu0 %3943
          %3945 = vrot.lane.b32.xlu0 %v3926, 32
          %v3946 = vpop.permute.xlu0 %3945
          %v3949 = vmul.f32 %v3938, %v3944
          %v3950 = vmul.f32 %v3940, %v3946
          %3953 = vrot.lane.b32.xlu0 %v3949, 64
          %v3954 = vpop.permute.xlu0 %3953
          %3955 = vrot.lane.b32.xlu0 %v3950, 64
          %v3956 = vpop.permute.xlu0 %3955
          %v3959 = vadd.f32 %v3923, %v3954
          %v3960 = vadd.f32 %v3926, %v3956
          %v3961 = vtanh.pop %v3959
          %v3962 = vtanh.pop %v3960
          %v3963 = vsub.f32 1.0, %v3938
          %v3964 = vsub.f32 1.0, %v3940
          %3967 = vrot.lane.b32.xlu0 %v3961, 96
          %v3968 = vpop.permute.xlu0 %3967
          %3969 = vrot.lane.b32.xlu0 %v3962, 96
          %v3970 = vpop.permute.xlu0 %3969
          %v3973 = vmul.f32 %v3963, %v3968
          %v3974 = vmul.f32 %v3964, %v3970
          %v3975 = vmul.f32 %v3938, %v3837
          %v3976 = vmul.f32 %v3940, %v3839
          %v3977 = vadd.f32 %v3973, %v3975
          %v3978 = vadd.f32 %v3974, %v3976
          %3981 = vrot.lane.b32.xlu0 %v3977, 96
          %v3982 = vpop.permute.xlu0 %3981
          %3983 = vrot.lane.b32.xlu0 %v3978, 96
          %v3984 = vpop.permute.xlu0 %3983
          %3987 = vst.msk [vmem:[#allocation2] sm:$0xff] %vm2177, %v3982
          %3988 = vst.msk [vmem:[#allocation2 + $0x8] sm:$0xff] %vm2177, %v3984
          %v3989 = vpack.c.bf16 %v3978, %v3977
          %v3991 = vunpack.c.l.b16 %v3989
          %v3992 = vunpack.c.h.b16 %v3989
          %v3993 = vpack.c.b16 %v3991, %v3991
          %v3994 = vpack.c.b16 %v3992, %v3992
          %3995 = vrot.lane.b32.xlu0 %v3993, 96
          %v3996 = vpop.permute.xlu0 %3995
          %3997 = vrot.lane.b32.xlu0 %v3994, 96
          %v3998 = vpop.permute.xlu0 %3997
          %vm4001 = vcmask 257024
          %4002 = vst.msk [vmem:[#allocation3] sm:$0xf] %vm4001, %v3996
          %4003 = vst.msk [vmem:[#allocation3 + $0x4] sm:$0xf] %vm4001, %v3998
        $region108: #{tpu_custom_call.1} parent=95 // pred_fallthru
          _
        %p4004 = scmp.eq.s32.totalorder %s35, 2
        %p4005 = pnand %p4004, %p3801
        %p4006 = pneg %p4005
        // Predicated region
        $region109: #{tpu_custom_call.1} parent=95 // pred_check
          _
        $region110: #{tpu_custom_call.1} parent=95 // pred_check_branch
          %4008 = sbr.rel (%p4005) target = $region112
        $region111: #{tpu_custom_call.1} parent=95 // pred_region
          %v4009 = vld [vmem:[#allocation3] sm:$0xf]
          %v4010 = vld [vmem:[#allocation3 + $0x4] sm:$0xf]
          %v4011 = vld [vmem:[%s4] sm:$0x1]
          %v4012 = vlaneseq
          %v4013 = vshrl.u32 %v4012, 7
          %v4014 = vsub.s32 0, %v4013
          %v4015 = vrot.slane %v4011, %v4014
          %vm4016 = vcmp.eq.s32.totalorder %v869, %v4015
          %v4017 = vld [vmem:[%s17] sm:$0xf]
          %v4018 = vld [vmem:[%s17 + $0x4] sm:$0xf]
          %v4019 = vld [vmem:[%s17 + $0x8] sm:$0xf]
          %v4020 = vld [vmem:[%s17 + $0xc] sm:$0xf]
          %v4021 = vld [vmem:[%s17 + $0x10] sm:$0xf]
          %v4022 = vld [vmem:[%s17 + $0x14] sm:$0xf]
          %v4023 = vld [vmem:[%s17 + $0x18] sm:$0xf]
          %v4024 = vld [vmem:[%s17 + $0x1c] sm:$0xf]
          %v4025 = vld [vmem:[%s17 + $0x20] sm:$0xf]
          %v4026 = vld [vmem:[%s17 + $0x24] sm:$0xf]
          %v4027 = vld [vmem:[%s17 + $0x28] sm:$0xf]
          %v4028 = vld [vmem:[%s17 + $0x2c] sm:$0xf]
          %v4029 = vld [vmem:[%s18] sm:$0x1]
          %v4030 = vpack.c.bf16 0.0, 0.0
          %v4032 = vlaneseq
          %v4033 = vshrl.u32 %v4032, 7
          %v4034 = vsub.s32 0, %v4033
          %v4035 = vrot.slane %v4029, %v4034
          %v4049 = vunpack.c.l.b16 %v4017
          %v4050 = vunpack.c.l.b16 %v4018
          %v4051 = vunpack.c.l.b16 %v4019
          %v4052 = vunpack.c.l.b16 %v4020
          %v4053 = vunpack.c.l.b16 %v4021
          %v4054 = vunpack.c.l.b16 %v4022
          %v4055 = vunpack.c.l.b16 %v4023
          %v4056 = vunpack.c.l.b16 %v4024
          %v4057 = vunpack.c.l.b16 %v4025
          %v4058 = vunpack.c.l.b16 %v4026
          %v4059 = vunpack.c.l.b16 %v4027
          %v4060 = vunpack.c.l.b16 %v4028
          %v4061 = vpack.c.b16 %v4050, %v4049
          %v4062 = vpack.c.b16 %v4052, %v4051
          %v4063 = vpack.c.b16 %v4054, %v4053
          %v4064 = vpack.c.b16 %v4056, %v4055
          %v4065 = vpack.c.b16 %v4058, %v4057
          %v4066 = vpack.c.b16 %v4060, %v4059
          %vm4073 = vcmask 785408
          %v4075 = vsel %vm4073, %v4030, 0
          %4077 = vmatprep.subr.bf16.mxu0 0
          %4078 = vmatpush1.bf16.msra.mxu0 0
          %4079 = vmatprep.subr.bf16.mxu0 0
          %4080 = vmatpush1.bf16.msra.mxu0 0
          %4081 = vmatprep.subr.bf16.mxu0 0
          %4082 = vmatpush1.bf16.msra.mxu0 %v4066
          %4083 = vmatprep.subr.bf16.mxu0 0
          %4084 = vmatpush1.bf16.msra.mxu0 %v4065
          %4085 = vmatprep.subr.bf16.mxu0 0
          %4086 = vmatpush1.bf16.msra.mxu0 %v4064
          %4087 = vmatprep.subr.bf16.mxu0 0
          %4088 = vmatpush1.bf16.msra.mxu0 %v4063
          %4089 = vmatprep.subr.bf16.mxu0 0
          %4090 = vmatpush1.bf16.msra.mxu0 %v4062
          %4091 = vmatprep.subr.bf16.mxu0 0
          %4092 = vmatpush1.bf16.msra.mxu0 %v4061
          %4093 = vmatprep.subr.bf16.mxu0 0
          %4094 = vmatpush2.bf16.msra.mxu0 0
          %4095 = vmatprep.subr.bf16.mxu0 0
          %4096 = vmatpush2.bf16.msra.mxu0 0
          %4097 = vmatprep.subr.bf16.mxu0 0
          %4098 = vmatpush2.bf16.msra.mxu0 0
          %4099 = vmatprep.subr.bf16.mxu0 0
          %4100 = vmatpush2.bf16.msra.mxu0 0
          %4101 = vmatprep.subr.bf16.mxu0 0
          %4102 = vmatpush2.bf16.msra.mxu0 0
          %4103 = vmatprep.subr.bf16.mxu0 0
          %4104 = vmatpush2.bf16.msra.mxu0 0
          %4105 = vmatprep.subr.bf16.mxu0 0
          %4106 = vmatpush2.bf16.msra.mxu0 0
          %4107 = vmatprep.subr.bf16.mxu0 0
          %4108 = vmatpush2.bf16.msra.mxu0 0
          %4109 = vmatprep.mubr.bf16.mxu0 0
          %4110 = vmatmul.mubr.bf16.gmra.mxu0 %v4075
          %v4111 = vpop.f32.mrf.mxu0
          %v4112 = vadd.f32 %v4035, %v4111
          %v4113 = vpop.f32.mrf.mxu0
          %v4114 = vpop.f32.mrf.mxu0
          %v4115 = vpop.f32.mrf.mxu0
          %4116 = vdwg.mxu0
          %v4117 = vxor.u32 %v4112, 2147483648
          %v4118 = vmul.f32 %v4117, 1.442695
          %v4119 = vpow.pop %v4118
          %v4120 = vadd.f32 %v4119, 1.0
          %v4121 = vrcp.pop %v4120
          %v4122 = vmul.f32 1.0, %v4121
          %v4123 = vtanh.pop %v4112
          %v4124 = vmul.f32 %v4122, 0.0
          %4126 = vrot.lane.b32.xlu0 %v4123, 64
          %v4127 = vpop.permute.xlu0 %4126
          %v4129 = vmul.f32 %v4122, %v4127
          %4131 = vrot.lane.b32.xlu0 %v4129, 32
          %v4132 = vpop.permute.xlu0 %4131
          %v4134 = vadd.f32 %v4124, %v4132
          %v4135 = vtanh.pop %v4134
          %4137 = vrot.lane.b32.xlu0 %v4135, 64
          %v4138 = vpop.permute.xlu0 %4137
          %v4140 = vmul.f32 %v4122, %v4138
          %v4141 = vpack.c.bf16 %v4140, %v4140
          %4143 = vrot.lane.b32.xlu0 %v4141, 32
          %v4144 = vpop.permute.xlu0 %4143
          %v4147 = vunpack.c.l.b16 %v4009
          %v4148 = vunpack.c.l.b16 %v4010
          %v4149 = vpack.c.b16 %v4148, %v4147
          %v4151 = vsel %vm2177, %v4144, 0
          %v4154 = vsel %vm2177, %v4149, 0
          %4156 = vmatprep.subr.bf16.mxu0 0
          %4157 = vmatpush1.bf16.xpose.msra.mxu0 0
          %4158 = vmatprep.subr.bf16.mxu0 0
          %4159 = vmatpush1.bf16.xpose.msra.mxu0 0
          %4160 = vmatprep.subr.bf16.mxu0 0
          %4161 = vmatpush1.bf16.xpose.msra.mxu0 0
          %4162 = vmatprep.subr.bf16.mxu0 0
          %4163 = vmatpush1.bf16.xpose.msra.mxu0 0
          %4164 = vmatprep.subr.bf16.mxu0 0
          %4165 = vmatpush1.bf16.xpose.msra.mxu0 0
          %4166 = vmatprep.subr.bf16.mxu0 0
          %4167 = vmatpush1.bf16.xpose.msra.mxu0 0
          %4168 = vmatprep.subr.bf16.mxu0 0
          %4169 = vmatpush1.bf16.xpose.msra.mxu0 0
          %4170 = vmatprep.subr.bf16.mxu0 0
          %4171 = vmatpush1.bf16.xpose.msra.mxu0 %v4154
          %4172 = vmatprep.subr.bf16.mxu0 0
          %4173 = vmatpush2.bf16.xpose.msra.mxu0 0
          %4174 = vmatprep.subr.bf16.mxu0 0
          %4175 = vmatpush2.bf16.xpose.msra.mxu0 0
          %4176 = vmatprep.subr.bf16.mxu0 0
          %4177 = vmatpush2.bf16.xpose.msra.mxu0 0
          %4178 = vmatprep.subr.bf16.mxu0 0
          %4179 = vmatpush2.bf16.xpose.msra.mxu0 0
          %4180 = vmatprep.subr.bf16.mxu0 0
          %4181 = vmatpush2.bf16.xpose.msra.mxu0 0
          %4182 = vmatprep.subr.bf16.mxu0 0
          %4183 = vmatpush2.bf16.xpose.msra.mxu0 0
          %4184 = vmatprep.subr.bf16.mxu0 0
          %4185 = vmatpush2.bf16.xpose.msra.mxu0 0
          %4186 = vmatprep.subr.bf16.mxu0 0
          %4187 = vmatpush2.bf16.xpose.msra.mxu0 0
          %4188 = vmatprep.mubr.bf16.mxu0 0
          %4189 = vmatmul.mubr.bf16.gmra.mxu0 %v4151
          %v4190 = vpop.f32.mrf.mxu0
          %v4191 = vadd.f32 0.0, %v4190
          %v4192 = vpop.f32.mrf.mxu0
          %v4193 = vpop.f32.mrf.mxu0
          %v4194 = vpop.f32.mrf.mxu0
          %4195 = vdwg.mxu0
          %v4196 = vsel %vm4016, %v4191, -1e+30
          %vm4197 = vcmask 123904
          %v4198 = vsel %vm4197, %v4196, -inf
          %4199 = vmax.xlane.f32.xlu0 %v4198
          %v4200 = vpop.xlane.xlu0 %4199
          %v4201 = vsub.f32 %v4196, %v4200
          %v4202 = vmul.f32 %v4201, 1.442695
          %v4203 = vpow.pop %v4202
          %v4204 = vsel %vm4016, %v4203, 0.0
          %v4205 = vsel %vm4197, %v4204, 0.0
          %4206 = vadd.xlane.f32.xlu0 %v4205
          %v4207 = vpop.xlane.xlu0 %4206
          %v4208 = vadd.f32 %v4207, 1e-16
          %v4209 = vrcp.pop %v4208
          %v4210 = vmul.f32 %v4204, %v4209
          %v4211 = vpack.c.bf16 %v4210, %v4210
          %v4214 = vsel %vm888, %v4211, 0
          %4216 = vmatprep.subr.bf16.mxu0 0
          %4217 = vmatpush1.bf16.msra.mxu0 0
          %4218 = vmatprep.subr.bf16.mxu0 0
          %4219 = vmatpush1.bf16.msra.mxu0 0
          %4220 = vmatprep.subr.bf16.mxu0 0
          %4221 = vmatpush1.bf16.msra.mxu0 0
          %4222 = vmatprep.subr.bf16.mxu0 0
          %4223 = vmatpush1.bf16.msra.mxu0 0
          %4224 = vmatprep.subr.bf16.mxu0 0
          %4225 = vmatpush1.bf16.msra.mxu0 0
          %4226 = vmatprep.subr.bf16.mxu0 0
          %4227 = vmatpush1.bf16.msra.mxu0 0
          %4228 = vmatprep.subr.bf16.mxu0 0
          %4229 = vmatpush1.bf16.msra.mxu0 0
          %4230 = vmatprep.subr.bf16.mxu0 0
          %4231 = vmatpush1.bf16.msra.mxu0 %v4149
          %4232 = vmatprep.subr.bf16.mxu0 0
          %4233 = vmatpush2.bf16.msra.mxu0 0
          %4234 = vmatprep.subr.bf16.mxu0 0
          %4235 = vmatpush2.bf16.msra.mxu0 0
          %4236 = vmatprep.subr.bf16.mxu0 0
          %4237 = vmatpush2.bf16.msra.mxu0 0
          %4238 = vmatprep.subr.bf16.mxu0 0
          %4239 = vmatpush2.bf16.msra.mxu0 0
          %4240 = vmatprep.subr.bf16.mxu0 0
          %4241 = vmatpush2.bf16.msra.mxu0 0
          %4242 = vmatprep.subr.bf16.mxu0 0
          %4243 = vmatpush2.bf16.msra.mxu0 0
          %4244 = vmatprep.subr.bf16.mxu0 0
          %4245 = vmatpush2.bf16.msra.mxu0 0
          %4246 = vmatprep.subr.bf16.mxu0 0
          %4247 = vmatpush2.bf16.msra.mxu0 0
          %4248 = vmatprep.mubr.bf16.mxu0 0
          %4249 = vmatmul.mubr.bf16.gmra.mxu0 %v4214
          %v4250 = vpop.f32.mrf.mxu0
          %v4251 = vadd.f32 0.0, %v4250
          %v4252 = vpop.f32.mrf.mxu0
          %v4253 = vpop.f32.mrf.mxu0
          %v4254 = vpop.f32.mrf.mxu0
          %4255 = vdwg.mxu0
          %4257 = vrot.lane.b32.xlu0 %v4140, 32
          %v4258 = vpop.permute.xlu0 %4257
          %4261 = vrot.lane.b32.xlu0 %v4251, 32
          %v4262 = vpop.permute.xlu0 %4261
          %4264 = vrot.lane.b32.xlu0 %v4140, 96
          %v4265 = vpop.permute.xlu0 %4264
          %v4267 = vsel %vm2177, %v4258, %v4262
          %vm4268 = vcmask 523264
          %v4269 = vsel %vm4268, %v4267, %v4265
          %v4270 = vpack.c.bf16 %v4269, %v4269
          %v4272 = vsel %vm4073, %v4270, 0
          %4274 = vmatprep.subr.bf16.mxu0 0
          %4275 = vmatpush1.bf16.msra.mxu0 0
          %4276 = vmatprep.subr.bf16.mxu0 0
          %4277 = vmatpush1.bf16.msra.mxu0 0
          %4278 = vmatprep.subr.bf16.mxu0 0
          %4279 = vmatpush1.bf16.msra.mxu0 %v4066
          %4280 = vmatprep.subr.bf16.mxu0 0
          %4281 = vmatpush1.bf16.msra.mxu0 %v4065
          %4282 = vmatprep.subr.bf16.mxu0 0
          %4283 = vmatpush1.bf16.msra.mxu0 %v4064
          %4284 = vmatprep.subr.bf16.mxu0 0
          %4285 = vmatpush1.bf16.msra.mxu0 %v4063
          %4286 = vmatprep.subr.bf16.mxu0 0
          %4287 = vmatpush1.bf16.msra.mxu0 %v4062
          %4288 = vmatprep.subr.bf16.mxu0 0
          %4289 = vmatpush1.bf16.msra.mxu0 %v4061
          %4290 = vmatprep.subr.bf16.mxu0 0
          %4291 = vmatpush2.bf16.msra.mxu0 0
          %4292 = vmatprep.subr.bf16.mxu0 0
          %4293 = vmatpush2.bf16.msra.mxu0 0
          %4294 = vmatprep.subr.bf16.mxu0 0
          %4295 = vmatpush2.bf16.msra.mxu0 0
          %4296 = vmatprep.subr.bf16.mxu0 0
          %4297 = vmatpush2.bf16.msra.mxu0 0
          %4298 = vmatprep.subr.bf16.mxu0 0
          %4299 = vmatpush2.bf16.msra.mxu0 0
          %4300 = vmatprep.subr.bf16.mxu0 0
          %4301 = vmatpush2.bf16.msra.mxu0 0
          %4302 = vmatprep.subr.bf16.mxu0 0
          %4303 = vmatpush2.bf16.msra.mxu0 0
          %4304 = vmatprep.subr.bf16.mxu0 0
          %4305 = vmatpush2.bf16.msra.mxu0 0
          %4306 = vmatprep.mubr.bf16.mxu0 0
          %4307 = vmatmul.mubr.bf16.gmra.mxu0 %v4272
          %v4308 = vpop.f32.mrf.mxu0
          %v4309 = vadd.f32 %v4035, %v4308
          %v4310 = vpop.f32.mrf.mxu0
          %v4311 = vpop.f32.mrf.mxu0
          %v4312 = vpop.f32.mrf.mxu0
          %4313 = vdwg.mxu0
          %v4314 = vxor.u32 %v4309, 2147483648
          %v4315 = vmul.f32 %v4314, 1.442695
          %v4316 = vpow.pop %v4315
          %v4317 = vadd.f32 %v4316, 1.0
          %v4318 = vrcp.pop %v4317
          %v4319 = vmul.f32 1.0, %v4318
          %v4320 = vtanh.pop %v4309
          %v4321 = vmul.f32 %v4319, %v4134
          %4323 = vrot.lane.b32.xlu0 %v4320, 64
          %v4324 = vpop.permute.xlu0 %4323
          %v4326 = vmul.f32 %v4319, %v4324
          %4328 = vrot.lane.b32.xlu0 %v4326, 32
          %v4329 = vpop.permute.xlu0 %4328
          %v4331 = vadd.f32 %v4321, %v4329
          %v4332 = vtanh.pop %v4331
          %4334 = vrot.lane.b32.xlu0 %v4332, 64
          %v4335 = vpop.permute.xlu0 %4334
          %v4337 = vmul.f32 %v4319, %v4335
          %v4338 = vpack.c.bf16 %v4337, %v4337
          %4340 = vrot.lane.b32.xlu0 %v4338, 32
          %v4341 = vpop.permute.xlu0 %4340
          %v4343 = vsel %vm2177, %v4341, 0
          %4345 = vmatprep.subr.bf16.mxu0 0
          %4346 = vmatpush1.bf16.xpose.msra.mxu0 0
          %4347 = vmatprep.subr.bf16.mxu0 0
          %4348 = vmatpush1.bf16.xpose.msra.mxu0 0
          %4349 = vmatprep.subr.bf16.mxu0 0
          %4350 = vmatpush1.bf16.xpose.msra.mxu0 0
          %4351 = vmatprep.subr.bf16.mxu0 0
          %4352 = vmatpush1.bf16.xpose.msra.mxu0 0
          %4353 = vmatprep.subr.bf16.mxu0 0
          %4354 = vmatpush1.bf16.xpose.msra.mxu0 0
          %4355 = vmatprep.subr.bf16.mxu0 0
          %4356 = vmatpush1.bf16.xpose.msra.mxu0 0
          %4357 = vmatprep.subr.bf16.mxu0 0
          %4358 = vmatpush1.bf16.xpose.msra.mxu0 0
          %4359 = vmatprep.subr.bf16.mxu0 0
          %4360 = vmatpush1.bf16.xpose.msra.mxu0 %v4154
          %4361 = vmatprep.subr.bf16.mxu0 0
          %4362 = vmatpush2.bf16.xpose.msra.mxu0 0
          %4363 = vmatprep.subr.bf16.mxu0 0
          %4364 = vmatpush2.bf16.xpose.msra.mxu0 0
          %4365 = vmatprep.subr.bf16.mxu0 0
          %4366 = vmatpush2.bf16.xpose.msra.mxu0 0
          %4367 = vmatprep.subr.bf16.mxu0 0
          %4368 = vmatpush2.bf16.xpose.msra.mxu0 0
          %4369 = vmatprep.subr.bf16.mxu0 0
          %4370 = vmatpush2.bf16.xpose.msra.mxu0 0
          %4371 = vmatprep.subr.bf16.mxu0 0
          %4372 = vmatpush2.bf16.xpose.msra.mxu0 0
          %4373 = vmatprep.subr.bf16.mxu0 0
          %4374 = vmatpush2.bf16.xpose.msra.mxu0 0
          %4375 = vmatprep.subr.bf16.mxu0 0
          %4376 = vmatpush2.bf16.xpose.msra.mxu0 0
          %4377 = vmatprep.mubr.bf16.mxu0 0
          %4378 = vmatmul.mubr.bf16.gmra.mxu0 %v4343
          %v4379 = vpop.f32.mrf.mxu0
          %v4380 = vadd.f32 0.0, %v4379
          %v4381 = vpop.f32.mrf.mxu0
          %v4382 = vpop.f32.mrf.mxu0
          %v4383 = vpop.f32.mrf.mxu0
          %4384 = vdwg.mxu0
          %v4385 = vsel %vm4016, %v4380, -1e+30
          %v4386 = vsel %vm4197, %v4385, -inf
          %4387 = vmax.xlane.f32.xlu0 %v4386
          %v4388 = vpop.xlane.xlu0 %4387
          %v4389 = vsub.f32 %v4385, %v4388
          %v4390 = vmul.f32 %v4389, 1.442695
          %v4391 = vpow.pop %v4390
          %v4392 = vsel %vm4016, %v4391, 0.0
          %v4393 = vsel %vm4197, %v4392, 0.0
          %4394 = vadd.xlane.f32.xlu0 %v4393
          %v4395 = vpop.xlane.xlu0 %4394
          %v4396 = vadd.f32 %v4395, 1e-16
          %v4397 = vrcp.pop %v4396
          %v4398 = vmul.f32 %v4392, %v4397
          %v4399 = vpack.c.bf16 %v4398, %v4398
          %v4401 = vsel %vm888, %v4399, 0
          %4403 = vmatprep.subr.bf16.mxu0 0
          %4404 = vmatpush1.bf16.msra.mxu0 0
          %4405 = vmatprep.subr.bf16.mxu0 0
          %4406 = vmatpush1.bf16.msra.mxu0 0
          %4407 = vmatprep.subr.bf16.mxu0 0
          %4408 = vmatpush1.bf16.msra.mxu0 0
          %4409 = vmatprep.subr.bf16.mxu0 0
          %4410 = vmatpush1.bf16.msra.mxu0 0
          %4411 = vmatprep.subr.bf16.mxu0 0
          %4412 = vmatpush1.bf16.msra.mxu0 0
          %4413 = vmatprep.subr.bf16.mxu0 0
          %4414 = vmatpush1.bf16.msra.mxu0 0
          %4415 = vmatprep.subr.bf16.mxu0 0
          %4416 = vmatpush1.bf16.msra.mxu0 0
          %4417 = vmatprep.subr.bf16.mxu0 0
          %4418 = vmatpush1.bf16.msra.mxu0 %v4149
          %4419 = vmatprep.subr.bf16.mxu0 0
          %4420 = vmatpush2.bf16.msra.mxu0 0
          %4421 = vmatprep.subr.bf16.mxu0 0
          %4422 = vmatpush2.bf16.msra.mxu0 0
          %4423 = vmatprep.subr.bf16.mxu0 0
          %4424 = vmatpush2.bf16.msra.mxu0 0
          %4425 = vmatprep.subr.bf16.mxu0 0
          %4426 = vmatpush2.bf16.msra.mxu0 0
          %4427 = vmatprep.subr.bf16.mxu0 0
          %4428 = vmatpush2.bf16.msra.mxu0 0
          %4429 = vmatprep.subr.bf16.mxu0 0
          %4430 = vmatpush2.bf16.msra.mxu0 0
          %4431 = vmatprep.subr.bf16.mxu0 0
          %4432 = vmatpush2.bf16.msra.mxu0 0
          %4433 = vmatprep.subr.bf16.mxu0 0
          %4434 = vmatpush2.bf16.msra.mxu0 0
          %4435 = vmatprep.mubr.bf16.mxu0 0
          %4436 = vmatmul.mubr.bf16.gmra.mxu0 %v4401
          %v4437 = vpop.f32.mrf.mxu0
          %v4438 = vadd.f32 0.0, %v4437
          %v4439 = vpop.f32.mrf.mxu0
          %v4440 = vpop.f32.mrf.mxu0
          %v4441 = vpop.f32.mrf.mxu0
          %4442 = vdwg.mxu0
          %4444 = vrot.lane.b32.xlu0 %v4337, 32
          %v4445 = vpop.permute.xlu0 %4444
          %4448 = vrot.lane.b32.xlu0 %v4438, 32
          %v4449 = vpop.permute.xlu0 %4448
          %4451 = vrot.lane.b32.xlu0 %v4337, 96
          %v4452 = vpop.permute.xlu0 %4451
          %v4454 = vsel %vm2177, %v4445, %v4449
          %v4455 = vsel %vm4268, %v4454, %v4452
          %v4456 = vpack.c.bf16 %v4455, %v4455
          %v4458 = vsel %vm4073, %v4456, 0
          %4460 = vmatprep.subr.bf16.mxu0 0
          %4461 = vmatpush1.bf16.msra.mxu0 0
          %4462 = vmatprep.subr.bf16.mxu0 0
          %4463 = vmatpush1.bf16.msra.mxu0 0
          %4464 = vmatprep.subr.bf16.mxu0 0
          %4465 = vmatpush1.bf16.msra.mxu0 %v4066
          %4466 = vmatprep.subr.bf16.mxu0 0
          %4467 = vmatpush1.bf16.msra.mxu0 %v4065
          %4468 = vmatprep.subr.bf16.mxu0 0
          %4469 = vmatpush1.bf16.msra.mxu0 %v4064
          %4470 = vmatprep.subr.bf16.mxu0 0
          %4471 = vmatpush1.bf16.msra.mxu0 %v4063
          %4472 = vmatprep.subr.bf16.mxu0 0
          %4473 = vmatpush1.bf16.msra.mxu0 %v4062
          %4474 = vmatprep.subr.bf16.mxu0 0
          %4475 = vmatpush1.bf16.msra.mxu0 %v4061
          %4476 = vmatprep.subr.bf16.mxu0 0
          %4477 = vmatpush2.bf16.msra.mxu0 0
          %4478 = vmatprep.subr.bf16.mxu0 0
          %4479 = vmatpush2.bf16.msra.mxu0 0
          %4480 = vmatprep.subr.bf16.mxu0 0
          %4481 = vmatpush2.bf16.msra.mxu0 0
          %4482 = vmatprep.subr.bf16.mxu0 0
          %4483 = vmatpush2.bf16.msra.mxu0 0
          %4484 = vmatprep.subr.bf16.mxu0 0
          %4485 = vmatpush2.bf16.msra.mxu0 0
          %4486 = vmatprep.subr.bf16.mxu0 0
          %4487 = vmatpush2.bf16.msra.mxu0 0
          %4488 = vmatprep.subr.bf16.mxu0 0
          %4489 = vmatpush2.bf16.msra.mxu0 0
          %4490 = vmatprep.subr.bf16.mxu0 0
          %4491 = vmatpush2.bf16.msra.mxu0 0
          %4492 = vmatprep.mubr.bf16.mxu0 0
          %4493 = vmatmul.mubr.bf16.gmra.mxu0 %v4458
          %v4494 = vpop.f32.mrf.mxu0
          %v4495 = vadd.f32 %v4035, %v4494
          %v4496 = vpop.f32.mrf.mxu0
          %v4497 = vpop.f32.mrf.mxu0
          %v4498 = vpop.f32.mrf.mxu0
          %4499 = vdwg.mxu0
          %v4500 = vxor.u32 %v4495, 2147483648
          %v4501 = vmul.f32 %v4500, 1.442695
          %v4502 = vpow.pop %v4501
          %v4503 = vadd.f32 %v4502, 1.0
          %v4504 = vrcp.pop %v4503
          %v4505 = vmul.f32 1.0, %v4504
          %v4506 = vtanh.pop %v4495
          %v4507 = vmul.f32 %v4505, %v4331
          %4509 = vrot.lane.b32.xlu0 %v4506, 64
          %v4510 = vpop.permute.xlu0 %4509
          %v4512 = vmul.f32 %v4505, %v4510
          %4514 = vrot.lane.b32.xlu0 %v4512, 32
          %v4515 = vpop.permute.xlu0 %4514
          %v4517 = vadd.f32 %v4507, %v4515
          %v4518 = vtanh.pop %v4517
          %4520 = vrot.lane.b32.xlu0 %v4518, 64
          %v4521 = vpop.permute.xlu0 %4520
          %v4523 = vmul.f32 %v4505, %v4521
          %v4524 = vpack.c.bf16 %v4523, %v4523
          %4526 = vrot.lane.b32.xlu0 %v4524, 32
          %v4527 = vpop.permute.xlu0 %4526
          %v4529 = vsel %vm2177, %v4527, 0
          %4531 = vmatprep.subr.bf16.mxu0 0
          %4532 = vmatpush1.bf16.xpose.msra.mxu0 0
          %4533 = vmatprep.subr.bf16.mxu0 0
          %4534 = vmatpush1.bf16.xpose.msra.mxu0 0
          %4535 = vmatprep.subr.bf16.mxu0 0
          %4536 = vmatpush1.bf16.xpose.msra.mxu0 0
          %4537 = vmatprep.subr.bf16.mxu0 0
          %4538 = vmatpush1.bf16.xpose.msra.mxu0 0
          %4539 = vmatprep.subr.bf16.mxu0 0
          %4540 = vmatpush1.bf16.xpose.msra.mxu0 0
          %4541 = vmatprep.subr.bf16.mxu0 0
          %4542 = vmatpush1.bf16.xpose.msra.mxu0 0
          %4543 = vmatprep.subr.bf16.mxu0 0
          %4544 = vmatpush1.bf16.xpose.msra.mxu0 0
          %4545 = vmatprep.subr.bf16.mxu0 0
          %4546 = vmatpush1.bf16.xpose.msra.mxu0 %v4154
          %4547 = vmatprep.subr.bf16.mxu0 0
          %4548 = vmatpush2.bf16.xpose.msra.mxu0 0
          %4549 = vmatprep.subr.bf16.mxu0 0
          %4550 = vmatpush2.bf16.xpose.msra.mxu0 0
          %4551 = vmatprep.subr.bf16.mxu0 0
          %4552 = vmatpush2.bf16.xpose.msra.mxu0 0
          %4553 = vmatprep.subr.bf16.mxu0 0
          %4554 = vmatpush2.bf16.xpose.msra.mxu0 0
          %4555 = vmatprep.subr.bf16.mxu0 0
          %4556 = vmatpush2.bf16.xpose.msra.mxu0 0
          %4557 = vmatprep.subr.bf16.mxu0 0
          %4558 = vmatpush2.bf16.xpose.msra.mxu0 0
          %4559 = vmatprep.subr.bf16.mxu0 0
          %4560 = vmatpush2.bf16.xpose.msra.mxu0 0
          %4561 = vmatprep.subr.bf16.mxu0 0
          %4562 = vmatpush2.bf16.xpose.msra.mxu0 0
          %4563 = vmatprep.mubr.bf16.mxu0 0
          %4564 = vmatmul.mubr.bf16.gmra.mxu0 %v4529
          %v4565 = vpop.f32.mrf.mxu0
          %v4566 = vadd.f32 0.0, %v4565
          %v4567 = vpop.f32.mrf.mxu0
          %v4568 = vpop.f32.mrf.mxu0
          %v4569 = vpop.f32.mrf.mxu0
          %4570 = vdwg.mxu0
          %v4571 = vsel %vm4016, %v4566, -1e+30
          %v4572 = vsel %vm4197, %v4571, -inf
          %4573 = vmax.xlane.f32.xlu0 %v4572
          %v4574 = vpop.xlane.xlu0 %4573
          %v4575 = vsub.f32 %v4571, %v4574
          %v4576 = vmul.f32 %v4575, 1.442695
          %v4577 = vpow.pop %v4576
          %v4578 = vsel %vm4016, %v4577, 0.0
          %v4579 = vsel %vm4197, %v4578, 0.0
          %4580 = vadd.xlane.f32.xlu0 %v4579
          %v4581 = vpop.xlane.xlu0 %4580
          %v4582 = vadd.f32 %v4581, 1e-16
          %v4583 = vrcp.pop %v4582
          %v4584 = vmul.f32 %v4578, %v4583
          %v4585 = vpack.c.bf16 %v4584, %v4584
          %v4587 = vsel %vm888, %v4585, 0
          %4589 = vmatprep.subr.bf16.mxu0 0
          %4590 = vmatpush1.bf16.msra.mxu0 0
          %4591 = vmatprep.subr.bf16.mxu0 0
          %4592 = vmatpush1.bf16.msra.mxu0 0
          %4593 = vmatprep.subr.bf16.mxu0 0
          %4594 = vmatpush1.bf16.msra.mxu0 0
          %4595 = vmatprep.subr.bf16.mxu0 0
          %4596 = vmatpush1.bf16.msra.mxu0 0
          %4597 = vmatprep.subr.bf16.mxu0 0
          %4598 = vmatpush1.bf16.msra.mxu0 0
          %4599 = vmatprep.subr.bf16.mxu0 0
          %4600 = vmatpush1.bf16.msra.mxu0 0
          %4601 = vmatprep.subr.bf16.mxu0 0
          %4602 = vmatpush1.bf16.msra.mxu0 0
          %4603 = vmatprep.subr.bf16.mxu0 0
          %4604 = vmatpush1.bf16.msra.mxu0 %v4149
          %4605 = vmatprep.subr.bf16.mxu0 0
          %4606 = vmatpush2.bf16.msra.mxu0 0
          %4607 = vmatprep.subr.bf16.mxu0 0
          %4608 = vmatpush2.bf16.msra.mxu0 0
          %4609 = vmatprep.subr.bf16.mxu0 0
          %4610 = vmatpush2.bf16.msra.mxu0 0
          %4611 = vmatprep.subr.bf16.mxu0 0
          %4612 = vmatpush2.bf16.msra.mxu0 0
          %4613 = vmatprep.subr.bf16.mxu0 0
          %4614 = vmatpush2.bf16.msra.mxu0 0
          %4615 = vmatprep.subr.bf16.mxu0 0
          %4616 = vmatpush2.bf16.msra.mxu0 0
          %4617 = vmatprep.subr.bf16.mxu0 0
          %4618 = vmatpush2.bf16.msra.mxu0 0
          %4619 = vmatprep.subr.bf16.mxu0 0
          %4620 = vmatpush2.bf16.msra.mxu0 0
          %4621 = vmatprep.mubr.bf16.mxu0 0
          %4622 = vmatmul.mubr.bf16.gmra.mxu0 %v4587
          %v4623 = vpop.f32.mrf.mxu0
          %v4624 = vadd.f32 0.0, %v4623
          %v4625 = vpop.f32.mrf.mxu0
          %v4626 = vpop.f32.mrf.mxu0
          %v4627 = vpop.f32.mrf.mxu0
          %4628 = vdwg.mxu0
          %4630 = vrot.lane.b32.xlu0 %v4523, 32
          %v4631 = vpop.permute.xlu0 %4630
          %4634 = vrot.lane.b32.xlu0 %v4624, 32
          %v4635 = vpop.permute.xlu0 %4634
          %v4637 = vsel %vm2177, %v4631, %v4635
          %v4638 = vsel %vm4268, %v4637, 0.0
          %4639 = vst [vmem:[#allocation5] sm:$0x3] %v4638
        $region112: #{tpu_custom_call.1} parent=95 // pred_fallthru
          _
        // Predicated region
        $region113: #{tpu_custom_call.1} parent=95 // pred_check
          %p4640 = pneg %p470
        $region114: #{tpu_custom_call.1} parent=95 // pred_check_branch
          %4642 = sbr.rel (%p4640) target = $region116
        $region115: #{tpu_custom_call.1} parent=95 // pred_region
          %s4644 = ssub.s32 32, 32
          %4645 = vsyncadd [#allocation6], %s4644
          %s4647 = sshll.u32 [#allocation5], 4
          %s4648 = int_to_ptr.vmem [resolvable:$true] %s4647
          %4650 = dma.vmem_to_hbm [thread:$0]  %s4648, 32, %s19, [#allocation6]
        $region116: #{tpu_custom_call.1} parent=95 // pred_fallthru
          _
        // Predicated region
        $region117: #{tpu_custom_call.1} parent=95 // pred_check
          %p4651 = pneg %p470
        $region118: #{tpu_custom_call.1} parent=95 // pred_check_branch
          %4653 = sbr.rel (%p4651) target = $region120
        $region119: #{tpu_custom_call.1} parent=95 // pred_region
          %4654 = dma.done [#allocation6], 32
        $region120: #{tpu_custom_call.1} parent=95 // pred_fallthru
          _
      $region96: #{tpu_custom_call.1} parent=5 // pred_fallthru
        _
      %p4655 = scmp.le.s32.totalorder 2, %s26
      // Predicated region
      $region121: #{tpu_custom_call.1} parent=5 // pred_check
        %p4656 = pneg %p4655
      $region122: #{tpu_custom_call.1} parent=5 // pred_check_branch
        %4658 = sbr.rel (%p4656) target = $region124
      $region123: #{tpu_custom_call.1} parent=5 // pred_region
        %s4659 = ssub.s32 %s26, 2
      $region124: #{tpu_custom_call.1} parent=5 // pred_fallthru
        _
    $region6: #{tpu_custom_call.1} parent=1 // loop_footer
      %s30 = sadd.s32 1, %s26
    $region7: #{tpu_custom_call.1} parent=1 // loop_footer_branch
      %25 = sbr.rel target = $region3
    $region8: #{tpu_custom_call.1} parent=1 // loop_exit
      _
    %4660 = vsyncpa [#allocation6], 1
    %s4661 = scalar_lea.sflag [#allocation6], 1
    %4662 = vsyncpa %s4661, 1

</llo_original>
